<compile_context>
chip_gen: v7x
topology: tpu7x:2x2x1
jax: 0.10.0
libtpu: 0.0.40
codegen_flags: <defaults>
</compile_context>

<pallas_src>
import functools

import jax
import jax.numpy as jnp
from jax.experimental import pallas as pl
from jax.experimental.pallas import tpu as pltpu


# ---------------------------------------------------------------------------
# In-kernel helpers (f32 values fully resident in VMEM / vregs)
# ---------------------------------------------------------------------------
def _to_poincare_klein(x, c, sqrt_c):
    """ToPoincare (expmap0 + ball projection) + Klein coords / Lorentz factor."""
    xn = jnp.maximum(jnp.sqrt(jnp.sum(x * x, axis=-1, keepdims=True)), 1e-5)
    g = jnp.tanh(sqrt_c * xn) * x * pl.reciprocal(sqrt_c * xn, approx=True)
    gn = jnp.maximum(jnp.sqrt(jnp.sum(g * g, axis=-1, keepdims=True)), 1e-5)
    maxnorm = (1.0 - 1e-3) / sqrt_c
    xp = jnp.where(gn > maxnorm, g * (maxnorm * pl.reciprocal(gn, approx=True)), g)
    p2 = jnp.sum(xp * xp, axis=-1, keepdims=True)
    klein = (2.0 * xp) * pl.reciprocal(1.0 + c * p2, approx=True)   # Poincare -> Klein
    k2 = jnp.sum(klein * klein, axis=-1, keepdims=True)
    lamb = jax.lax.rsqrt(jnp.maximum(1.0 - c * k2, 1e-15))          # Lorentz factor
    return xp, lamb * klein, lamb


def _klein_to_poincare(mean_k, c):
    m2 = jnp.sum(mean_k * mean_k, axis=-1, keepdims=True)
    return mean_k * pl.reciprocal(
        1.0 + jnp.sqrt(jnp.maximum(1.0 - c * m2, 0.0)), approx=True)


def _mobius_add(x, y, c):
    xy = jnp.sum(x * y, axis=-1, keepdims=True)
    x2 = jnp.sum(x * x, axis=-1, keepdims=True)
    y2 = jnp.sum(y * y, axis=-1, keepdims=True)
    num = (1.0 + 2.0 * c * xy + c * y2) * x + (1.0 - c * x2) * y
    den = jnp.maximum(1.0 + 2.0 * c * xy + c * c * x2 * y2, 1e-15)
    return num * pl.reciprocal(den, approx=True)


def _pdist(x, x2, y, c, sqrt_c, inv_temp):
    """Poincare distance matrix d(x_i, y_j) / temperature.  x:(A,D), y:(B,D) -> (A,B)."""
    dn = (((1,), (1,)), ((), ()))                                   # contract feature dim
    xy = jax.lax.dot_general(x, y, dn, preferred_element_type=jnp.float32)        # (A,B)
    ones = jnp.ones((1, y.shape[-1]), jnp.float32)
    y2 = jax.lax.dot_general(ones, y * y, dn, preferred_element_type=jnp.float32)  # (1,B)
    a = 1.0 - 2.0 * c * xy + c * y2
    b = 1.0 - c * x2
    num2 = a * a * x2 + b * b * y2 - 2.0 * a * b * xy               # ||(-x) (+)_c y||^2 * den^2
    den = 1.0 - 2.0 * c * xy + (c * c) * x2 * y2
    mob = jnp.sqrt(jnp.maximum(num2, 0.0)) * pl.reciprocal(
        jnp.maximum(jnp.abs(den), 1e-15), approx=True)
    z = jnp.minimum(sqrt_c * mob, 1.0 - 1e-5)                       # mob >= 0, only clip top
    dist = (1.0 / sqrt_c) * jnp.log((1.0 + z) * pl.reciprocal(1.0 - z, approx=True))
    return dist * inv_temp


# ---------------------------------------------------------------------------
# Fused HPR_WN forward kernel (single grid point, everything VMEM-resident)
# ---------------------------------------------------------------------------
def _hpr_wn_kernel(feat_sup_ref, feat_q_ref, noise_ref, tgt_ref,
                   ypred_ref, loss_ref, *, c, inv_temp, n_shot):
    f32 = jnp.float32
    sqrt_c = c ** 0.5
    feat_sup = feat_sup_ref[...]                 # (n_sup, D) Euclidean support features
    feat_q = feat_q_ref[...]                     # (Q, D)     Euclidean query features
    tgt_oh = tgt_ref[...]                        # (k, Q)     one-hot query labels
    k, q_cnt = tgt_oh.shape
    n_sup, d = feat_sup.shape

    # -- stage 1: ToPoincare + Klein / Lorentz factors for support & queries --
    sup_p, y_sup, lam_sup = _to_poincare_klein(feat_sup, c, sqrt_c)
    q_p, y_q, lam_q = _to_poincare_klein(feat_q, c, sqrt_c)
    q2 = jnp.sum(q_p * q_p, axis=-1, keepdims=True)                 # (Q,1)

    # -- stage 2: class prototypes = per-class Einstein midpoint --------------
    col = jax.lax.broadcasted_iota(jnp.int32, (k, n_sup), 1)
    row = jax.lax.broadcasted_iota(jnp.int32, (k, n_sup), 0)
    w_sup = jnp.logical_and(col >= row * n_shot,
                            col < row * n_shot + n_shot).astype(f32)  # (k, n_sup)
    num_sup = jnp.dot(w_sup, y_sup, preferred_element_type=f32)       # (k, D)
    den_sup = jnp.dot(w_sup, lam_sup, preferred_element_type=f32)     # (k, 1)
    proto_p = _klein_to_poincare(num_sup * pl.reciprocal(den_sup, approx=True), c)
    proto2 = jnp.sum(proto_p * proto_p, axis=-1, keepdims=True)

    # -- stage 3: query <-> prototype distances + pseudo labels ---------------
    # Computed prototype-major (k, Q) so the one-hot assignment mask comes out
    # directly in the MXU-friendly orientation (standard (k,Q)x(Q,D) dots below).
    dist1 = _pdist(proto_p, proto2, q_p, c, sqrt_c, inv_temp)         # (k, Q)
    dmin = jnp.min(dist1, axis=0, keepdims=True)                      # (1, Q)
    ridx = jax.lax.broadcasted_iota(jnp.int32, (k, q_cnt), 0).astype(f32)
    cand = jnp.where(dist1 == dmin, ridx, float(k))
    sel = jnp.min(cand, axis=0, keepdims=True)                        # first argmin (ties)
    oh_kq = (ridx == sel).astype(f32)                                 # (k, Q) pseudo labels

    # -- stage 4: pseudo-labelled group midpoints + per-group Euclidean std ---
    num_grp = num_sup + jnp.dot(oh_kq, y_q, preferred_element_type=f32)
    den_grp = den_sup + jnp.dot(oh_kq, lam_q, preferred_element_type=f32)
    group_p = _klein_to_poincare(num_grp * pl.reciprocal(den_grp, approx=True), c)

    cnt = float(n_shot) + jnp.sum(oh_kq, axis=1, keepdims=True)       # (k,1) group sizes
    s1 = (jnp.dot(w_sup, feat_sup, preferred_element_type=f32)
          + jnp.dot(oh_kq, feat_q, preferred_element_type=f32))       # sum x
    s2 = (jnp.dot(w_sup, feat_sup * feat_sup, preferred_element_type=f32)
          + jnp.dot(oh_kq, feat_q * feat_q, preferred_element_type=f32))  # sum x^2
    # unbiased std, sum / sum-of-squares form (values O(1) -> no cancellation issue)
    mean_e = s1 * pl.reciprocal(cnt, approx=True)
    var = jnp.maximum(s2 - s1 * mean_e, 0.0) * pl.reciprocal(
        jnp.maximum(cnt - 1.0, 1.0), approx=True)
    std = jnp.sqrt(var)                                               # (k, D)

    # -- stage 5: hyperbolic augmentation: v~N(0,std), ptransp0 -> expmap -----
    # Fully vectorized over all n_aug draws: (n_aug, k, D) values with the
    # per-class (k, D)/(k, 1) factors broadcast along the leading (non-tiled)
    # axis.  No sequential 40-iteration loop.
    gp2 = jnp.sum(group_p * group_p, axis=-1, keepdims=True)
    one_m = jnp.maximum(1.0 - c * gp2, 1e-15)                         # ptransp0_p factor
    lam_x = 2.0 * pl.reciprocal(one_m, approx=True)                   # lambda_x at group_p

    noise = noise_ref[...]                                            # (n_aug, k, D)
    u = (noise * std[None]) * one_m[None]                             # transport 0 -> x
    un = jnp.maximum(jnp.sqrt(jnp.sum(u * u, axis=-1, keepdims=True)), 1e-15)
    second = (jnp.tanh(0.5 * sqrt_c * lam_x[None] * un)
              * u * pl.reciprocal(sqrt_c * un, approx=True))
    aug = _mobius_add(group_p[None], second, c)                       # expmap_{group_p}(u)
    a2 = jnp.sum(aug * aug, axis=-1, keepdims=True)
    kl = (2.0 * aug) * pl.reciprocal(1.0 + c * a2, approx=True)       # Poincare -> Klein
    kk2 = jnp.sum(kl * kl, axis=-1, keepdims=True)
    la = jax.lax.rsqrt(jnp.maximum(1.0 - c * kk2, 1e-15))             # (n_aug, k, 1)
    num_aug = jnp.sum(la * kl, axis=0)                                # (k, D)
    den_aug = jnp.sum(la, axis=0)                                     # (k, 1)

    # -- stage 6: rectified prototypes = midpoint(support ∪ augmented), gated -
    gate = (cnt > 1.0).astype(f32)            # augment only if group has > 1 element
    num_fin = num_sup + gate * num_aug
    den_fin = den_sup + gate * den_aug
    proto_new = _klein_to_poincare(num_fin * pl.reciprocal(den_fin, approx=True), c)

    dist2 = _pdist(q_p, q2, proto_new, c, sqrt_c, inv_temp)           # (Q, k)

    # -- stage 7: head (fused): y_pred = softmax(-dist_new);
    #    loss = CrossEntropy(log_softmax(-dist), tgt)  (double log_softmax,
    #    faithfully reproducing CrossEntropyLoss applied to log_softmax input).
    neg2 = -dist2
    m2 = jnp.max(neg2, axis=1, keepdims=True)
    e2 = jnp.exp(neg2 - m2)
    ypred_ref[...] = e2 / jnp.sum(e2, axis=1, keepdims=True)

    neg1 = -dist1                                                     # (k, Q)
    m1 = jnp.max(neg1, axis=0, keepdims=True)
    lse1 = m1 + jnp.log(jnp.sum(jnp.exp(neg1 - m1), axis=0, keepdims=True))
    logp = neg1 - lse1
    m3 = jnp.max(logp, axis=0, keepdims=True)
    lse3 = m3 + jnp.log(jnp.sum(jnp.exp(logp - m3), axis=0, keepdims=True))
    logprob = logp - lse3
    per_q = jnp.sum(tgt_oh * logprob, axis=0, keepdims=True)          # (1, Q)
    loss_ref[...] = -jnp.sum(per_q, axis=1, keepdims=True) * (1.0 / q_cnt)


# ---------------------------------------------------------------------------
# Wrapper: single fused pallas_call, everything VMEM-resident
# ---------------------------------------------------------------------------
def hpr_wn_forward(feat, label, rng, *, k_way, n_shot, query, c=0.01,
                   temperature=1.0, n_aug=40):
    # NOTE: self.c0 / linear_c / cosine_w / linear_cw / dis_w / linear_dw of the
    # PyTorch __init__ are never used in forward() and are omitted.
    del query  # query count is implied by feat.shape
    feat = feat.astype(jnp.float32)
    k, n = k_way, n_shot
    n_sup = k * n
    N, D = feat.shape
    Q = N - n_sup

    feat_sup = feat[:n_sup]
    feat_q = feat[n_sup:]
    # standard-normal draws for the n_aug augmentations per class (scaled in-kernel)
    noise = jax.random.normal(rng, (n_aug, k, D), jnp.float32)
    tgt = label[1]
    tgt_oh_kq = (jnp.arange(k)[:, None] == tgt[None, :]).astype(jnp.float32)   # (k, Q)

    kernel = functools.partial(_hpr_wn_kernel, c=float(c),
                               inv_temp=1.0 / float(temperature), n_shot=n)

    def full_spec(shape):
        nd = len(shape)
        return pl.BlockSpec(shape, lambda i, nd=nd: (0,) * nd)

    y_pred, loss = pl.pallas_call(
        kernel,
        out_shape=(jax.ShapeDtypeStruct((Q, k), jnp.float32),
                   jax.ShapeDtypeStruct((1, 1), jnp.float32)),
        grid=(1,),
        in_specs=[full_spec(feat_sup.shape), full_spec(feat_q.shape),
                  full_spec(noise.shape), full_spec(tgt_oh_kq.shape)],
        out_specs=(full_spec((Q, k)), full_spec((1, 1))),
        compiler_params=pltpu.CompilerParams(dimension_semantics=("arbitrary",)),
    )(feat_sup, feat_q, noise, tgt_oh_kq)
    # TODO(synk): for batched episodes, add a leading "parallel" episode grid axis
    # so v7x can spread episodes across both TensorCores.
    return y_pred, loss[0, 0]


# ---------------------------------------------------------------------------
# Demo
# ---------------------------------------------------------------------------
if __name__ == "__main__":
    k_way, n_shot, query, D = 5, 5, 3, 128
    n_support = k_way * n_shot            # 25
    n_query = k_way * query               # 15

    key = jax.random.PRNGKey(0)
    k_feat, k_aug = jax.random.split(key)
    feat = jax.random.normal(k_feat, (n_support + n_query, D), jnp.float32)

    support_labels = jnp.repeat(jnp.arange(k_way), n_shot)
    query_labels = jnp.tile(jnp.arange(k_way), query)
    label = (support_labels, query_labels)

    fwd = jax.jit(functools.partial(
        hpr_wn_forward, k_way=k_way, n_shot=n_shot, query=query,
        c=0.01, temperature=1.0, n_aug=40))

    y_pred, loss = fwd(feat, label, k_aug)
    jax.block_until_ready((y_pred, loss))

    assert y_pred.shape == (n_query, k_way)
    assert bool(jnp.all(jnp.isfinite(y_pred)))
    assert bool(jnp.isfinite(loss))
    print("KERNEL_OK")
</pallas_src>

<mosaic_0001>
module attributes {stable_mosaic.version = 11 : i64} {
  func.func @_hpr_wn_kernel(%arg0: i32, %arg1: memref<25x128xf32, #tpu.memory_space<vmem>>, %arg2: memref<15x128xf32, #tpu.memory_space<vmem>>, %arg3: memref<40x5x128xf32, #tpu.memory_space<vmem>>, %arg4: memref<5x15xf32, #tpu.memory_space<vmem>>, %arg5: memref<15x5xf32, #tpu.memory_space<vmem>>, %arg6: memref<1x1xf32, #tpu.memory_space<vmem>>) attributes {dimension_semantics = [#tpu.dimension_semantics<arbitrary>], iteration_bounds = array<i64: 1>, scalar_prefetch = 0 : i64, scratch_operands = 0 : i64, tpu.core_type = #tpu.core_type<tc>, window_params = [{pipeline_mode = #tpu.pipeline_mode<synchronous>, transform_indices = @transform_0, window_bounds = array<i64: 25, 128>}, {pipeline_mode = #tpu.pipeline_mode<synchronous>, transform_indices = @transform_1, window_bounds = array<i64: 15, 128>}, {pipeline_mode = #tpu.pipeline_mode<synchronous>, transform_indices = @transform_2, window_bounds = array<i64: 40, 5, 128>}, {pipeline_mode = #tpu.pipeline_mode<synchronous>, transform_indices = @transform_3, window_bounds = array<i64: 5, 15>}, {pipeline_mode = #tpu.pipeline_mode<synchronous>, transform_indices = @transform_4, window_bounds = array<i64: 15, 5>}, {pipeline_mode = #tpu.pipeline_mode<synchronous>, transform_indices = @transform_5, window_bounds = array<i64: 1, 1>}]} {
    %c0 = arith.constant 0 : index
    %c0_0 = arith.constant 0 : index
    %0 = vector.load %arg1[%c0, %c0_0] : memref<25x128xf32, #tpu.memory_space<vmem>>, vector<25x128xf32>
    %c0_1 = arith.constant 0 : index
    %c0_2 = arith.constant 0 : index
    %1 = vector.load %arg2[%c0_1, %c0_2] : memref<15x128xf32, #tpu.memory_space<vmem>>, vector<15x128xf32>
    %c0_3 = arith.constant 0 : index
    %c0_4 = arith.constant 0 : index
    %2 = vector.load %arg4[%c0_3, %c0_4] : memref<5x15xf32, #tpu.memory_space<vmem>>, vector<5x15xf32>
    %3 = arith.mulf %0, %0 : vector<25x128xf32>
    %cst = arith.constant dense<0.000000e+00> : vector<25xf32>
    %4 = vector.multi_reduction <add>, %3, %cst [1] : vector<25x128xf32> to vector<25xf32>
    %5 = vector.shape_cast %4 : vector<25xf32> to vector<25x1xf32>
    %6 = math.sqrt %5 : vector<25x1xf32>
    %cst_5 = arith.constant 9.99999974E-6 : f32
    %7 = vector.broadcast %cst_5 : f32 to vector<25x1xf32>
    %8 = arith.maximumf %6, %7 : vector<25x1xf32>
    %cst_6 = arith.constant 1.000000e-01 : f32
    %9 = vector.broadcast %cst_6 : f32 to vector<25x1xf32>
    %10 = arith.mulf %9, %8 : vector<25x1xf32>
    %11 = math.tanh %10 : vector<25x1xf32>
    %12 = vector.broadcast %11 : vector<25x1xf32> to vector<25x128xf32>
    %13 = arith.mulf %12, %0 : vector<25x128xf32>
    %cst_7 = arith.constant 1.000000e-01 : f32
    %14 = vector.broadcast %cst_7 : f32 to vector<25x1xf32>
    %15 = arith.mulf %14, %8 : vector<25x1xf32>
    %16 = tpu.reciprocal %15 {approx = true} : vector<25x1xf32> -> vector<25x1xf32>
    %17 = vector.broadcast %16 : vector<25x1xf32> to vector<25x128xf32>
    %18 = arith.mulf %13, %17 : vector<25x128xf32>
    %19 = arith.mulf %18, %18 : vector<25x128xf32>
    %cst_8 = arith.constant dense<0.000000e+00> : vector<25xf32>
    %20 = vector.multi_reduction <add>, %19, %cst_8 [1] : vector<25x128xf32> to vector<25xf32>
    %21 = vector.shape_cast %20 : vector<25xf32> to vector<25x1xf32>
    %22 = math.sqrt %21 : vector<25x1xf32>
    %cst_9 = arith.constant 9.99999974E-6 : f32
    %23 = vector.broadcast %cst_9 : f32 to vector<25x1xf32>
    %24 = arith.maximumf %22, %23 : vector<25x1xf32>
    %cst_10 = arith.constant 9.98999977 : f32
    %25 = vector.broadcast %cst_10 : f32 to vector<25x1xf32>
    %26 = arith.cmpf ogt, %24, %25 : vector<25x1xf32>
    %27 = tpu.reciprocal %24 {approx = true} : vector<25x1xf32> -> vector<25x1xf32>
    %cst_11 = arith.constant 9.98999977 : f32
    %28 = vector.broadcast %cst_11 : f32 to vector<25x1xf32>
    %29 = arith.mulf %28, %27 : vector<25x1xf32>
    %30 = vector.broadcast %29 : vector<25x1xf32> to vector<25x128xf32>
    %31 = arith.mulf %18, %30 : vector<25x128xf32>
    %32 = vector.shape_cast %26 : vector<25x1xi1> to vector<25x1xi1>
    %33 = vector.broadcast %32 : vector<25x1xi1> to vector<25x128xi1>
    %34 = arith.select %33, %31, %18 : vector<25x128xi1>, vector<25x128xf32>
    %35 = arith.mulf %34, %34 : vector<25x128xf32>
    %cst_12 = arith.constant dense<0.000000e+00> : vector<25xf32>
    %36 = vector.multi_reduction <add>, %35, %cst_12 [1] : vector<25x128xf32> to vector<25xf32>
    %37 = vector.shape_cast %36 : vector<25xf32> to vector<25x1xf32>
    %cst_13 = arith.constant 2.000000e+00 : f32
    %38 = vector.broadcast %cst_13 : f32 to vector<25x128xf32>
    %39 = arith.mulf %38, %34 : vector<25x128xf32>
    %cst_14 = arith.constant 0.00999999977 : f32
    %40 = vector.broadcast %cst_14 : f32 to vector<25x1xf32>
    %41 = arith.mulf %40, %37 : vector<25x1xf32>
    %cst_15 = arith.constant 1.000000e+00 : f32
    %42 = vector.broadcast %cst_15 : f32 to vector<25x1xf32>
    %43 = arith.addf %42, %41 : vector<25x1xf32>
    %44 = tpu.reciprocal %43 {approx = true} : vector<25x1xf32> -> vector<25x1xf32>
    %45 = vector.broadcast %44 : vector<25x1xf32> to vector<25x128xf32>
    %46 = arith.mulf %39, %45 : vector<25x128xf32>
    %47 = arith.mulf %46, %46 : vector<25x128xf32>
    %cst_16 = arith.constant dense<0.000000e+00> : vector<25xf32>
    %48 = vector.multi_reduction <add>, %47, %cst_16 [1] : vector<25x128xf32> to vector<25xf32>
    %49 = vector.shape_cast %48 : vector<25xf32> to vector<25x1xf32>
    %cst_17 = arith.constant 0.00999999977 : f32
    %50 = vector.broadcast %cst_17 : f32 to vector<25x1xf32>
    %51 = arith.mulf %50, %49 : vector<25x1xf32>
    %cst_18 = arith.constant 1.000000e+00 : f32
    %52 = vector.broadcast %cst_18 : f32 to vector<25x1xf32>
    %53 = arith.subf %52, %51 : vector<25x1xf32>
    %cst_19 = arith.constant 1.000000e-15 : f32
    %54 = vector.broadcast %cst_19 : f32 to vector<25x1xf32>
    %55 = arith.maximumf %53, %54 : vector<25x1xf32>
    %56 = math.rsqrt %55 : vector<25x1xf32>
    %57 = vector.broadcast %56 : vector<25x1xf32> to vector<25x128xf32>
    %58 = arith.mulf %57, %46 : vector<25x128xf32>
    %59 = arith.mulf %1, %1 : vector<15x128xf32>
    %cst_20 = arith.constant dense<0.000000e+00> : vector<15xf32>
    %60 = vector.multi_reduction <add>, %59, %cst_20 [1] : vector<15x128xf32> to vector<15xf32>
    %61 = vector.shape_cast %60 : vector<15xf32> to vector<15x1xf32>
    %62 = math.sqrt %61 : vector<15x1xf32>
    %cst_21 = arith.constant 9.99999974E-6 : f32
    %63 = vector.broadcast %cst_21 : f32 to vector<15x1xf32>
    %64 = arith.maximumf %62, %63 : vector<15x1xf32>
    %cst_22 = arith.constant 1.000000e-01 : f32
    %65 = vector.broadcast %cst_22 : f32 to vector<15x1xf32>
    %66 = arith.mulf %65, %64 : vector<15x1xf32>
    %67 = math.tanh %66 : vector<15x1xf32>
    %68 = vector.broadcast %67 : vector<15x1xf32> to vector<15x128xf32>
    %69 = arith.mulf %68, %1 : vector<15x128xf32>
    %cst_23 = arith.constant 1.000000e-01 : f32
    %70 = vector.broadcast %cst_23 : f32 to vector<15x1xf32>
    %71 = arith.mulf %70, %64 : vector<15x1xf32>
    %72 = tpu.reciprocal %71 {approx = true} : vector<15x1xf32> -> vector<15x1xf32>
    %73 = vector.broadcast %72 : vector<15x1xf32> to vector<15x128xf32>
    %74 = arith.mulf %69, %73 : vector<15x128xf32>
    %75 = arith.mulf %74, %74 : vector<15x128xf32>
    %cst_24 = arith.constant dense<0.000000e+00> : vector<15xf32>
    %76 = vector.multi_reduction <add>, %75, %cst_24 [1] : vector<15x128xf32> to vector<15xf32>
    %77 = vector.shape_cast %76 : vector<15xf32> to vector<15x1xf32>
    %78 = math.sqrt %77 : vector<15x1xf32>
    %cst_25 = arith.constant 9.99999974E-6 : f32
    %79 = vector.broadcast %cst_25 : f32 to vector<15x1xf32>
    %80 = arith.maximumf %78, %79 : vector<15x1xf32>
    %cst_26 = arith.constant 9.98999977 : f32
    %81 = vector.broadcast %cst_26 : f32 to vector<15x1xf32>
    %82 = arith.cmpf ogt, %80, %81 : vector<15x1xf32>
    %83 = tpu.reciprocal %80 {approx = true} : vector<15x1xf32> -> vector<15x1xf32>
    %cst_27 = arith.constant 9.98999977 : f32
    %84 = vector.broadcast %cst_27 : f32 to vector<15x1xf32>
    %85 = arith.mulf %84, %83 : vector<15x1xf32>
    %86 = vector.broadcast %85 : vector<15x1xf32> to vector<15x128xf32>
    %87 = arith.mulf %74, %86 : vector<15x128xf32>
    %88 = vector.shape_cast %82 : vector<15x1xi1> to vector<15x1xi1>
    %89 = vector.broadcast %88 : vector<15x1xi1> to vector<15x128xi1>
    %90 = arith.select %89, %87, %74 : vector<15x128xi1>, vector<15x128xf32>
    %91 = arith.mulf %90, %90 : vector<15x128xf32>
    %cst_28 = arith.constant dense<0.000000e+00> : vector<15xf32>
    %92 = vector.multi_reduction <add>, %91, %cst_28 [1] : vector<15x128xf32> to vector<15xf32>
    %93 = vector.shape_cast %92 : vector<15xf32> to vector<15x1xf32>
    %cst_29 = arith.constant 2.000000e+00 : f32
    %94 = vector.broadcast %cst_29 : f32 to vector<15x128xf32>
    %95 = arith.mulf %94, %90 : vector<15x128xf32>
    %cst_30 = arith.constant 0.00999999977 : f32
    %96 = vector.broadcast %cst_30 : f32 to vector<15x1xf32>
    %97 = arith.mulf %96, %93 : vector<15x1xf32>
    %cst_31 = arith.constant 1.000000e+00 : f32
    %98 = vector.broadcast %cst_31 : f32 to vector<15x1xf32>
    %99 = arith.addf %98, %97 : vector<15x1xf32>
    %100 = tpu.reciprocal %99 {approx = true} : vector<15x1xf32> -> vector<15x1xf32>
    %101 = vector.broadcast %100 : vector<15x1xf32> to vector<15x128xf32>
    %102 = arith.mulf %95, %101 : vector<15x128xf32>
    %103 = arith.mulf %102, %102 : vector<15x128xf32>
    %cst_32 = arith.constant dense<0.000000e+00> : vector<15xf32>
    %104 = vector.multi_reduction <add>, %103, %cst_32 [1] : vector<15x128xf32> to vector<15xf32>
    %105 = vector.shape_cast %104 : vector<15xf32> to vector<15x1xf32>
    %cst_33 = arith.constant 0.00999999977 : f32
    %106 = vector.broadcast %cst_33 : f32 to vector<15x1xf32>
    %107 = arith.mulf %106, %105 : vector<15x1xf32>
    %cst_34 = arith.constant 1.000000e+00 : f32
    %108 = vector.broadcast %cst_34 : f32 to vector<15x1xf32>
    %109 = arith.subf %108, %107 : vector<15x1xf32>
    %cst_35 = arith.constant 1.000000e-15 : f32
    %110 = vector.broadcast %cst_35 : f32 to vector<15x1xf32>
    %111 = arith.maximumf %109, %110 : vector<15x1xf32>
    %112 = math.rsqrt %111 : vector<15x1xf32>
    %113 = vector.broadcast %112 : vector<15x1xf32> to vector<15x128xf32>
    %114 = arith.mulf %113, %102 : vector<15x128xf32>
    %115 = arith.mulf %90, %90 : vector<15x128xf32>
    %cst_36 = arith.constant dense<0.000000e+00> : vector<15xf32>
    %116 = vector.multi_reduction <add>, %115, %cst_36 [1] : vector<15x128xf32> to vector<15xf32>
    %117 = vector.shape_cast %116 : vector<15xf32> to vector<15x1xf32>
    %118 = tpu.iota {dimensions = array<i32: 1>} : vector<5x25xi32>
    %119 = tpu.iota {dimensions = array<i32: 0>} : vector<5x25xi32>
    %c5_i32 = arith.constant 5 : i32
    %120 = vector.broadcast %c5_i32 : i32 to vector<5x25xi32>
    %121 = arith.muli %119, %120 : vector<5x25xi32>
    %122 = arith.cmpi sge, %118, %121 : vector<5x25xi32>
    %c5_i32_37 = arith.constant 5 : i32
    %123 = vector.broadcast %c5_i32_37 : i32 to vector<5x25xi32>
    %124 = arith.muli %119, %123 : vector<5x25xi32>
    %c5_i32_38 = arith.constant 5 : i32
    %125 = vector.broadcast %c5_i32_38 : i32 to vector<5x25xi32>
    %126 = arith.addi %124, %125 : vector<5x25xi32>
    %127 = arith.cmpi slt, %118, %126 : vector<5x25xi32>
    %128 = arith.andi %122, %127 : vector<5x25xi1>
    %129 = arith.extui %128 : vector<5x25xi1> to vector<5x25xi32>
    %130 = arith.sitofp %129 : vector<5x25xi32> to vector<5x25xf32>
    %cst_39 = arith.constant dense<0.000000e+00> : vector<5x128xf32>
    %131 = tpu.matmul %130, %58, %cst_39 {dimension_numbers = #tpu.dot_dimension_numbers<[1], [0], [0], [1], [0, 0, 1, 1], [], []>} : vector<5x25xf32>, vector<25x128xf32>, vector<5x128xf32> -> vector<5x128xf32>
    %cst_40 = arith.constant dense<0.000000e+00> : vector<5x1xf32>
    %132 = tpu.matmul %130, %56, %cst_40 {dimension_numbers = #tpu.dot_dimension_numbers<[1], [0], [0], [1], [0, 0, 1, 1], [], []>} : vector<5x25xf32>, vector<25x1xf32>, vector<5x1xf32> -> vector<5x1xf32>
    %133 = tpu.reciprocal %132 {approx = true} : vector<5x1xf32> -> vector<5x1xf32>
    %134 = vector.broadcast %133 : vector<5x1xf32> to vector<5x128xf32>
    %135 = arith.mulf %131, %134 : vector<5x128xf32>
    %136 = arith.mulf %135, %135 : vector<5x128xf32>
    %cst_41 = arith.constant dense<0.000000e+00> : vector<5xf32>
    %137 = vector.multi_reduction <add>, %136, %cst_41 [1] : vector<5x128xf32> to vector<5xf32>
    %138 = vector.shape_cast %137 : vector<5xf32> to vector<5x1xf32>
    %cst_42 = arith.constant 0.00999999977 : f32
    %139 = vector.broadcast %cst_42 : f32 to vector<5x1xf32>
    %140 = arith.mulf %139, %138 : vector<5x1xf32>
    %cst_43 = arith.constant 1.000000e+00 : f32
    %141 = vector.broadcast %cst_43 : f32 to vector<5x1xf32>
    %142 = arith.subf %141, %140 : vector<5x1xf32>
    %cst_44 = arith.constant 0.000000e+00 : f32
    %143 = vector.broadcast %cst_44 : f32 to vector<5x1xf32>
    %144 = arith.maximumf %142, %143 : vector<5x1xf32>
    %145 = math.sqrt %144 : vector<5x1xf32>
    %cst_45 = arith.constant 1.000000e+00 : f32
    %146 = vector.broadcast %cst_45 : f32 to vector<5x1xf32>
    %147 = arith.addf %146, %145 : vector<5x1xf32>
    %148 = tpu.reciprocal %147 {approx = true} : vector<5x1xf32> -> vector<5x1xf32>
    %149 = vector.broadcast %148 : vector<5x1xf32> to vector<5x128xf32>
    %150 = arith.mulf %135, %149 : vector<5x128xf32>
    %151 = arith.mulf %150, %150 : vector<5x128xf32>
    %cst_46 = arith.constant dense<0.000000e+00> : vector<5xf32>
    %152 = vector.multi_reduction <add>, %151, %cst_46 [1] : vector<5x128xf32> to vector<5xf32>
    %153 = vector.shape_cast %152 : vector<5xf32> to vector<5x1xf32>
    %cst_47 = arith.constant dense<0.000000e+00> : vector<5x15xf32>
    %154 = tpu.matmul %150, %90, %cst_47 {dimension_numbers = #tpu.dot_dimension_numbers<[1], [1], [0], [0], [0, 0, 1, 0], [], []>} : vector<5x128xf32>, vector<15x128xf32>, vector<5x15xf32> -> vector<5x15xf32>
    %cst_48 = arith.constant 1.000000e+00 : f32
    %155 = vector.broadcast %cst_48 : f32 to vector<1x128xf32>
    %156 = arith.mulf %90, %90 : vector<15x128xf32>
    %cst_49 = arith.constant dense<0.000000e+00> : vector<1x15xf32>
    %157 = tpu.matmul %155, %156, %cst_49 {dimension_numbers = #tpu.dot_dimension_numbers<[1], [1], [0], [0], [0, 0, 1, 0], [], []>} : vector<1x128xf32>, vector<15x128xf32>, vector<1x15xf32> -> vector<1x15xf32>
    %cst_50 = arith.constant 2.000000e-02 : f32
    %158 = vector.broadcast %cst_50 : f32 to vector<5x15xf32>
    %159 = arith.mulf %158, %154 : vector<5x15xf32>
    %cst_51 = arith.constant 1.000000e+00 : f32
    %160 = vector.broadcast %cst_51 : f32 to vector<5x15xf32>
    %161 = arith.subf %160, %159 : vector<5x15xf32>
    %cst_52 = arith.constant 0.00999999977 : f32
    %162 = vector.broadcast %cst_52 : f32 to vector<1x15xf32>
    %163 = arith.mulf %162, %157 : vector<1x15xf32>
    %164 = vector.broadcast %163 : vector<1x15xf32> to vector<5x15xf32>
    %165 = arith.addf %161, %164 : vector<5x15xf32>
    %cst_53 = arith.constant 0.00999999977 : f32
    %166 = vector.broadcast %cst_53 : f32 to vector<5x1xf32>
    %167 = arith.mulf %166, %153 : vector<5x1xf32>
    %cst_54 = arith.constant 1.000000e+00 : f32
    %168 = vector.broadcast %cst_54 : f32 to vector<5x1xf32>
    %169 = arith.subf %168, %167 : vector<5x1xf32>
    %170 = arith.mulf %165, %165 : vector<5x15xf32>
    %171 = vector.broadcast %153 : vector<5x1xf32> to vector<5x15xf32>
    %172 = arith.mulf %170, %171 : vector<5x15xf32>
    %173 = arith.mulf %169, %169 : vector<5x1xf32>
    %174 = vector.broadcast %173 : vector<5x1xf32> to vector<5x15xf32>
    %175 = vector.broadcast %157 : vector<1x15xf32> to vector<5x15xf32>
    %176 = arith.mulf %174, %175 : vector<5x15xf32>
    %177 = arith.addf %172, %176 : vector<5x15xf32>
    %cst_55 = arith.constant 2.000000e+00 : f32
    %178 = vector.broadcast %cst_55 : f32 to vector<5x15xf32>
    %179 = arith.mulf %178, %165 : vector<5x15xf32>
    %180 = vector.broadcast %169 : vector<5x1xf32> to vector<5x15xf32>
    %181 = arith.mulf %179, %180 : vector<5x15xf32>
    %182 = arith.mulf %181, %154 : vector<5x15xf32>
    %183 = arith.subf %177, %182 : vector<5x15xf32>
    %cst_56 = arith.constant 2.000000e-02 : f32
    %184 = vector.broadcast %cst_56 : f32 to vector<5x15xf32>
    %185 = arith.mulf %184, %154 : vector<5x15xf32>
    %cst_57 = arith.constant 1.000000e+00 : f32
    %186 = vector.broadcast %cst_57 : f32 to vector<5x15xf32>
    %187 = arith.subf %186, %185 : vector<5x15xf32>
    %cst_58 = arith.constant 9.99999974E-5 : f32
    %188 = vector.broadcast %cst_58 : f32 to vector<5x1xf32>
    %189 = arith.mulf %188, %153 : vector<5x1xf32>
    %190 = vector.broadcast %189 : vector<5x1xf32> to vector<5x15xf32>
    %191 = vector.broadcast %157 : vector<1x15xf32> to vector<5x15xf32>
    %192 = arith.mulf %190, %191 : vector<5x15xf32>
    %193 = arith.addf %187, %192 : vector<5x15xf32>
    %cst_59 = arith.constant 0.000000e+00 : f32
    %194 = vector.broadcast %cst_59 : f32 to vector<5x15xf32>
    %195 = arith.maximumf %183, %194 : vector<5x15xf32>
    %196 = math.sqrt %195 : vector<5x15xf32>
    %197 = math.absf %193 : vector<5x15xf32>
    %cst_60 = arith.constant 1.000000e-15 : f32
    %198 = vector.broadcast %cst_60 : f32 to vector<5x15xf32>
    %199 = arith.maximumf %197, %198 : vector<5x15xf32>
    %200 = tpu.reciprocal %199 {approx = true} : vector<5x15xf32> -> vector<5x15xf32>
    %201 = arith.mulf %196, %200 : vector<5x15xf32>
    %cst_61 = arith.constant 1.000000e-01 : f32
    %202 = vector.broadcast %cst_61 : f32 to vector<5x15xf32>
    %203 = arith.mulf %202, %201 : vector<5x15xf32>
    %cst_62 = arith.constant 0.999989986 : f32
    %204 = vector.broadcast %cst_62 : f32 to vector<5x15xf32>
    %205 = arith.minimumf %203, %204 : vector<5x15xf32>
    %cst_63 = arith.constant 1.000000e+00 : f32
    %206 = vector.broadcast %cst_63 : f32 to vector<5x15xf32>
    %207 = arith.addf %206, %205 : vector<5x15xf32>
    %cst_64 = arith.constant 1.000000e+00 : f32
    %208 = vector.broadcast %cst_64 : f32 to vector<5x15xf32>
    %209 = arith.subf %208, %205 : vector<5x15xf32>
    %210 = tpu.reciprocal %209 {approx = true} : vector<5x15xf32> -> vector<5x15xf32>
    %211 = arith.mulf %207, %210 : vector<5x15xf32>
    %212 = math.log %211 : vector<5x15xf32>
    %cst_65 = arith.constant 1.000000e+01 : f32
    %213 = vector.broadcast %cst_65 : f32 to vector<5x15xf32>
    %214 = arith.mulf %213, %212 : vector<5x15xf32>
    %cst_66 = arith.constant 1.000000e+00 : f32
    %215 = vector.broadcast %cst_66 : f32 to vector<5x15xf32>
    %216 = arith.mulf %214, %215 : vector<5x15xf32>
    %cst_67 = arith.constant dense<0x7F800000> : vector<15xf32>
    %217 = vector.multi_reduction <minimumf>, %216, %cst_67 [0] : vector<5x15xf32> to vector<15xf32>
    %218 = vector.shape_cast %217 : vector<15xf32> to vector<1x15xf32>
    %219 = tpu.iota {dimensions = array<i32: 0>} : vector<5x15xi32>
    %220 = arith.sitofp %219 : vector<5x15xi32> to vector<5x15xf32>
    %221 = vector.broadcast %218 : vector<1x15xf32> to vector<5x15xf32>
    %222 = arith.cmpf oeq, %216, %221 : vector<5x15xf32>
    %cst_68 = arith.constant 5.000000e+00 : f32
    %223 = vector.broadcast %cst_68 : f32 to vector<5x15xf32>
    %224 = arith.select %222, %220, %223 : vector<5x15xi1>, vector<5x15xf32>
    %cst_69 = arith.constant dense<0x7F800000> : vector<15xf32>
    %225 = vector.multi_reduction <minimumf>, %224, %cst_69 [0] : vector<5x15xf32> to vector<15xf32>
    %226 = vector.shape_cast %225 : vector<15xf32> to vector<1x15xf32>
    %227 = vector.broadcast %226 : vector<1x15xf32> to vector<5x15xf32>
    %228 = arith.cmpf oeq, %220, %227 : vector<5x15xf32>
    %229 = arith.extui %228 : vector<5x15xi1> to vector<5x15xi32>
    %230 = arith.sitofp %229 : vector<5x15xi32> to vector<5x15xf32>
    %cst_70 = arith.constant dense<0.000000e+00> : vector<5x128xf32>
    %231 = tpu.matmul %230, %114, %cst_70 {dimension_numbers = #tpu.dot_dimension_numbers<[1], [0], [0], [1], [0, 0, 1, 1], [], []>} : vector<5x15xf32>, vector<15x128xf32>, vector<5x128xf32> -> vector<5x128xf32>
    %232 = arith.addf %131, %231 : vector<5x128xf32>
    %cst_71 = arith.constant dense<0.000000e+00> : vector<5x1xf32>
    %233 = tpu.matmul %230, %112, %cst_71 {dimension_numbers = #tpu.dot_dimension_numbers<[1], [0], [0], [1], [0, 0, 1, 1], [], []>} : vector<5x15xf32>, vector<15x1xf32>, vector<5x1xf32> -> vector<5x1xf32>
    %234 = arith.addf %132, %233 : vector<5x1xf32>
    %235 = tpu.reciprocal %234 {approx = true} : vector<5x1xf32> -> vector<5x1xf32>
    %236 = vector.broadcast %235 : vector<5x1xf32> to vector<5x128xf32>
    %237 = arith.mulf %232, %236 : vector<5x128xf32>
    %238 = arith.mulf %237, %237 : vector<5x128xf32>
    %cst_72 = arith.constant dense<0.000000e+00> : vector<5xf32>
    %239 = vector.multi_reduction <add>, %238, %cst_72 [1] : vector<5x128xf32> to vector<5xf32>
    %240 = vector.shape_cast %239 : vector<5xf32> to vector<5x1xf32>
    %cst_73 = arith.constant 0.00999999977 : f32
    %241 = vector.broadcast %cst_73 : f32 to vector<5x1xf32>
    %242 = arith.mulf %241, %240 : vector<5x1xf32>
    %cst_74 = arith.constant 1.000000e+00 : f32
    %243 = vector.broadcast %cst_74 : f32 to vector<5x1xf32>
    %244 = arith.subf %243, %242 : vector<5x1xf32>
    %cst_75 = arith.constant 0.000000e+00 : f32
    %245 = vector.broadcast %cst_75 : f32 to vector<5x1xf32>
    %246 = arith.maximumf %244, %245 : vector<5x1xf32>
    %247 = math.sqrt %246 : vector<5x1xf32>
    %cst_76 = arith.constant 1.000000e+00 : f32
    %248 = vector.broadcast %cst_76 : f32 to vector<5x1xf32>
    %249 = arith.addf %248, %247 : vector<5x1xf32>
    %250 = tpu.reciprocal %249 {approx = true} : vector<5x1xf32> -> vector<5x1xf32>
    %251 = vector.broadcast %250 : vector<5x1xf32> to vector<5x128xf32>
    %252 = arith.mulf %237, %251 : vector<5x128xf32>
    %cst_77 = arith.constant dense<0.000000e+00> : vector<5xf32>
    %253 = vector.multi_reduction <add>, %230, %cst_77 [1] : vector<5x15xf32> to vector<5xf32>
    %254 = vector.shape_cast %253 : vector<5xf32> to vector<5x1xf32>
    %cst_78 = arith.constant 5.000000e+00 : f32
    %255 = vector.broadcast %cst_78 : f32 to vector<5x1xf32>
    %256 = arith.addf %255, %254 : vector<5x1xf32>
    %cst_79 = arith.constant dense<0.000000e+00> : vector<5x128xf32>
    %257 = tpu.matmul %130, %0, %cst_79 {dimension_numbers = #tpu.dot_dimension_numbers<[1], [0], [0], [1], [0, 0, 1, 1], [], []>} : vector<5x25xf32>, vector<25x128xf32>, vector<5x128xf32> -> vector<5x128xf32>
    %cst_80 = arith.constant dense<0.000000e+00> : vector<5x128xf32>
    %258 = tpu.matmul %230, %1, %cst_80 {dimension_numbers = #tpu.dot_dimension_numbers<[1], [0], [0], [1], [0, 0, 1, 1], [], []>} : vector<5x15xf32>, vector<15x128xf32>, vector<5x128xf32> -> vector<5x128xf32>
    %259 = arith.addf %257, %258 : vector<5x128xf32>
    %260 = arith.mulf %0, %0 : vector<25x128xf32>
    %cst_81 = arith.constant dense<0.000000e+00> : vector<5x128xf32>
    %261 = tpu.matmul %130, %260, %cst_81 {dimension_numbers = #tpu.dot_dimension_numbers<[1], [0], [0], [1], [0, 0, 1, 1], [], []>} : vector<5x25xf32>, vector<25x128xf32>, vector<5x128xf32> -> vector<5x128xf32>
    %262 = arith.mulf %1, %1 : vector<15x128xf32>
    %cst_82 = arith.constant dense<0.000000e+00> : vector<5x128xf32>
    %263 = tpu.matmul %230, %262, %cst_82 {dimension_numbers = #tpu.dot_dimension_numbers<[1], [0], [0], [1], [0, 0, 1, 1], [], []>} : vector<5x15xf32>, vector<15x128xf32>, vector<5x128xf32> -> vector<5x128xf32>
    %264 = arith.addf %261, %263 : vector<5x128xf32>
    %265 = tpu.reciprocal %256 {approx = true} : vector<5x1xf32> -> vector<5x1xf32>
    %266 = vector.broadcast %265 : vector<5x1xf32> to vector<5x128xf32>
    %267 = arith.mulf %259, %266 : vector<5x128xf32>
    %268 = arith.mulf %259, %267 : vector<5x128xf32>
    %269 = arith.subf %264, %268 : vector<5x128xf32>
    %cst_83 = arith.constant 0.000000e+00 : f32
    %270 = vector.broadcast %cst_83 : f32 to vector<5x128xf32>
    %271 = arith.maximumf %269, %270 : vector<5x128xf32>
    %cst_84 = arith.constant 1.000000e+00 : f32
    %272 = vector.broadcast %cst_84 : f32 to vector<5x1xf32>
    %273 = arith.subf %256, %272 : vector<5x1xf32>
    %cst_85 = arith.constant 1.000000e+00 : f32
    %274 = vector.broadcast %cst_85 : f32 to vector<5x1xf32>
    %275 = arith.maximumf %273, %274 : vector<5x1xf32>
    %276 = tpu.reciprocal %275 {approx = true} : vector<5x1xf32> -> vector<5x1xf32>
    %277 = vector.broadcast %276 : vector<5x1xf32> to vector<5x128xf32>
    %278 = arith.mulf %271, %277 : vector<5x128xf32>
    %279 = math.sqrt %278 : vector<5x128xf32>
    %280 = arith.mulf %252, %252 : vector<5x128xf32>
    %cst_86 = arith.constant dense<0.000000e+00> : vector<5xf32>
    %281 = vector.multi_reduction <add>, %280, %cst_86 [1] : vector<5x128xf32> to vector<5xf32>
    %282 = vector.shape_cast %281 : vector<5xf32> to vector<5x1xf32>
    %cst_87 = arith.constant 0.00999999977 : f32
    %283 = vector.broadcast %cst_87 : f32 to vector<5x1xf32>
    %284 = arith.mulf %283, %282 : vector<5x1xf32>
    %cst_88 = arith.constant 1.000000e+00 : f32
    %285 = vector.broadcast %cst_88 : f32 to vector<5x1xf32>
    %286 = arith.subf %285, %284 : vector<5x1xf32>
    %cst_89 = arith.constant 1.000000e-15 : f32
    %287 = vector.broadcast %cst_89 : f32 to vector<5x1xf32>
    %288 = arith.maximumf %286, %287 : vector<5x1xf32>
    %289 = tpu.reciprocal %288 {approx = true} : vector<5x1xf32> -> vector<5x1xf32>
    %cst_90 = arith.constant 2.000000e+00 : f32
    %290 = vector.broadcast %cst_90 : f32 to vector<5x1xf32>
    %291 = arith.mulf %290, %289 : vector<5x1xf32>
    %c0_91 = arith.constant 0 : index
    %c0_92 = arith.constant 0 : index
    %c0_93 = arith.constant 0 : index
    %292 = vector.load %arg3[%c0_91, %c0_92, %c0_93] : memref<40x5x128xf32, #tpu.memory_space<vmem>>, vector<40x5x128xf32>
    %293 = vector.shape_cast %279 : vector<5x128xf32> to vector<1x5x128xf32>
    %294 = vector.broadcast %293 : vector<1x5x128xf32> to vector<40x5x128xf32>
    %295 = arith.mulf %292, %294 : vector<40x5x128xf32>
    %296 = vector.shape_cast %288 : vector<5x1xf32> to vector<1x5x1xf32>
    %297 = vector.broadcast %296 : vector<1x5x1xf32> to vector<40x5x128xf32>
    %298 = arith.mulf %295, %297 : vector<40x5x128xf32>
    %299 = arith.mulf %298, %298 : vector<40x5x128xf32>
    %cst_94 = arith.constant dense<0.000000e+00> : vector<40x5xf32>
    %300 = vector.multi_reduction <add>, %299, %cst_94 [2] : vector<40x5x128xf32> to vector<40x5xf32>
    %301 = vector.shape_cast %300 : vector<40x5xf32> to vector<40x5x1xf32>
    %302 = math.sqrt %301 : vector<40x5x1xf32>
    %cst_95 = arith.constant 1.000000e-15 : f32
    %303 = vector.broadcast %cst_95 : f32 to vector<40x5x1xf32>
    %304 = arith.maximumf %302, %303 : vector<40x5x1xf32>
    %305 = vector.shape_cast %291 : vector<5x1xf32> to vector<1x5x1xf32>
    %cst_96 = arith.constant 5.000000e-02 : f32
    %306 = vector.broadcast %cst_96 : f32 to vector<1x5x1xf32>
    %307 = arith.mulf %306, %305 : vector<1x5x1xf32>
    %308 = vector.broadcast %307 : vector<1x5x1xf32> to vector<40x5x1xf32>
    %309 = arith.mulf %308, %304 : vector<40x5x1xf32>
    %310 = math.tanh %309 : vector<40x5x1xf32>
    %311 = vector.broadcast %310 : vector<40x5x1xf32> to vector<40x5x128xf32>
    %312 = arith.mulf %311, %298 : vector<40x5x128xf32>
    %cst_97 = arith.constant 1.000000e-01 : f32
    %313 = vector.broadcast %cst_97 : f32 to vector<40x5x1xf32>
    %314 = arith.mulf %313, %304 : vector<40x5x1xf32>
    %315 = tpu.reciprocal %314 {approx = true} : vector<40x5x1xf32> -> vector<40x5x1xf32>
    %316 = vector.broadcast %315 : vector<40x5x1xf32> to vector<40x5x128xf32>
    %317 = arith.mulf %312, %316 : vector<40x5x128xf32>
    %318 = vector.shape_cast %252 : vector<5x128xf32> to vector<1x5x128xf32>
    %319 = vector.broadcast %318 : vector<1x5x128xf32> to vector<40x5x128xf32>
    %320 = arith.mulf %319, %317 : vector<40x5x128xf32>
    %cst_98 = arith.constant dense<0.000000e+00> : vector<40x5xf32>
    %321 = vector.multi_reduction <add>, %320, %cst_98 [2] : vector<40x5x128xf32> to vector<40x5xf32>
    %322 = vector.shape_cast %321 : vector<40x5xf32> to vector<40x5x1xf32>
    %323 = arith.mulf %318, %318 : vector<1x5x128xf32>
    %cst_99 = arith.constant dense<0.000000e+00> : vector<1x5xf32>
    %324 = vector.multi_reduction <add>, %323, %cst_99 [2] : vector<1x5x128xf32> to vector<1x5xf32>
    %325 = vector.shape_cast %324 : vector<1x5xf32> to vector<1x5x1xf32>
    %326 = arith.mulf %317, %317 : vector<40x5x128xf32>
    %cst_100 = arith.constant dense<0.000000e+00> : vector<40x5xf32>
    %327 = vector.multi_reduction <add>, %326, %cst_100 [2] : vector<40x5x128xf32> to vector<40x5xf32>
    %328 = vector.shape_cast %327 : vector<40x5xf32> to vector<40x5x1xf32>
    %cst_101 = arith.constant 2.000000e-02 : f32
    %329 = vector.broadcast %cst_101 : f32 to vector<40x5x1xf32>
    %330 = arith.mulf %329, %322 : vector<40x5x1xf32>
    %cst_102 = arith.constant 1.000000e+00 : f32
    %331 = vector.broadcast %cst_102 : f32 to vector<40x5x1xf32>
    %332 = arith.addf %331, %330 : vector<40x5x1xf32>
    %cst_103 = arith.constant 0.00999999977 : f32
    %333 = vector.broadcast %cst_103 : f32 to vector<40x5x1xf32>
    %334 = arith.mulf %333, %328 : vector<40x5x1xf32>
    %335 = arith.addf %332, %334 : vector<40x5x1xf32>
    %336 = vector.broadcast %335 : vector<40x5x1xf32> to vector<40x5x128xf32>
    %337 = vector.broadcast %318 : vector<1x5x128xf32> to vector<40x5x128xf32>
    %338 = arith.mulf %336, %337 : vector<40x5x128xf32>
    %cst_104 = arith.constant 0.00999999977 : f32
    %339 = vector.broadcast %cst_104 : f32 to vector<1x5x1xf32>
    %340 = arith.mulf %339, %325 : vector<1x5x1xf32>
    %cst_105 = arith.constant 1.000000e+00 : f32
    %341 = vector.broadcast %cst_105 : f32 to vector<1x5x1xf32>
    %342 = arith.subf %341, %340 : vector<1x5x1xf32>
    %343 = vector.broadcast %342 : vector<1x5x1xf32> to vector<40x5x128xf32>
    %344 = arith.mulf %343, %317 : vector<40x5x128xf32>
    %345 = arith.addf %338, %344 : vector<40x5x128xf32>
    %cst_106 = arith.constant 2.000000e-02 : f32
    %346 = vector.broadcast %cst_106 : f32 to vector<40x5x1xf32>
    %347 = arith.mulf %346, %322 : vector<40x5x1xf32>
    %cst_107 = arith.constant 1.000000e+00 : f32
    %348 = vector.broadcast %cst_107 : f32 to vector<40x5x1xf32>
    %349 = arith.addf %348, %347 : vector<40x5x1xf32>
    %cst_108 = arith.constant 9.99999974E-5 : f32
    %350 = vector.broadcast %cst_108 : f32 to vector<1x5x1xf32>
    %351 = arith.mulf %350, %325 : vector<1x5x1xf32>
    %352 = vector.broadcast %351 : vector<1x5x1xf32> to vector<40x5x1xf32>
    %353 = arith.mulf %352, %328 : vector<40x5x1xf32>
    %354 = arith.addf %349, %353 : vector<40x5x1xf32>
    %cst_109 = arith.constant 1.000000e-15 : f32
    %355 = vector.broadcast %cst_109 : f32 to vector<40x5x1xf32>
    %356 = arith.maximumf %354, %355 : vector<40x5x1xf32>
    %357 = tpu.reciprocal %356 {approx = true} : vector<40x5x1xf32> -> vector<40x5x1xf32>
    %358 = vector.broadcast %357 : vector<40x5x1xf32> to vector<40x5x128xf32>
    %359 = arith.mulf %345, %358 : vector<40x5x128xf32>
    %360 = arith.mulf %359, %359 : vector<40x5x128xf32>
    %cst_110 = arith.constant dense<0.000000e+00> : vector<40x5xf32>
    %361 = vector.multi_reduction <add>, %360, %cst_110 [2] : vector<40x5x128xf32> to vector<40x5xf32>
    %362 = vector.shape_cast %361 : vector<40x5xf32> to vector<40x5x1xf32>
    %cst_111 = arith.constant 2.000000e+00 : f32
    %363 = vector.broadcast %cst_111 : f32 to vector<40x5x128xf32>
    %364 = arith.mulf %363, %359 : vector<40x5x128xf32>
    %cst_112 = arith.constant 0.00999999977 : f32
    %365 = vector.broadcast %cst_112 : f32 to vector<40x5x1xf32>
    %366 = arith.mulf %365, %362 : vector<40x5x1xf32>
    %cst_113 = arith.constant 1.000000e+00 : f32
    %367 = vector.broadcast %cst_113 : f32 to vector<40x5x1xf32>
    %368 = arith.addf %367, %366 : vector<40x5x1xf32>
    %369 = tpu.reciprocal %368 {approx = true} : vector<40x5x1xf32> -> vector<40x5x1xf32>
    %370 = vector.broadcast %369 : vector<40x5x1xf32> to vector<40x5x128xf32>
    %371 = arith.mulf %364, %370 : vector<40x5x128xf32>
    %372 = arith.mulf %371, %371 : vector<40x5x128xf32>
    %cst_114 = arith.constant dense<0.000000e+00> : vector<40x5xf32>
    %373 = vector.multi_reduction <add>, %372, %cst_114 [2] : vector<40x5x128xf32> to vector<40x5xf32>
    %374 = vector.shape_cast %373 : vector<40x5xf32> to vector<40x5x1xf32>
    %cst_115 = arith.constant 0.00999999977 : f32
    %375 = vector.broadcast %cst_115 : f32 to vector<40x5x1xf32>
    %376 = arith.mulf %375, %374 : vector<40x5x1xf32>
    %cst_116 = arith.constant 1.000000e+00 : f32
    %377 = vector.broadcast %cst_116 : f32 to vector<40x5x1xf32>
    %378 = arith.subf %377, %376 : vector<40x5x1xf32>
    %cst_117 = arith.constant 1.000000e-15 : f32
    %379 = vector.broadcast %cst_117 : f32 to vector<40x5x1xf32>
    %380 = arith.maximumf %378, %379 : vector<40x5x1xf32>
    %381 = math.rsqrt %380 : vector<40x5x1xf32>
    %382 = vector.broadcast %381 : vector<40x5x1xf32> to vector<40x5x128xf32>
    %383 = arith.mulf %382, %371 : vector<40x5x128xf32>
    %cst_118 = arith.constant dense<0.000000e+00> : vector<5x128xf32>
    %384 = vector.multi_reduction <add>, %383, %cst_118 [0] : vector<40x5x128xf32> to vector<5x128xf32>
    %cst_119 = arith.constant dense<0.000000e+00> : vector<5x1xf32>
    %385 = vector.multi_reduction <add>, %381, %cst_119 [0] : vector<40x5x1xf32> to vector<5x1xf32>
    %cst_120 = arith.constant 1.000000e+00 : f32
    %386 = vector.broadcast %cst_120 : f32 to vector<5x1xf32>
    %387 = arith.cmpf ogt, %256, %386 : vector<5x1xf32>
    %388 = arith.extui %387 : vector<5x1xi1> to vector<5x1xi32>
    %389 = arith.sitofp %388 : vector<5x1xi32> to vector<5x1xf32>
    %390 = vector.broadcast %389 : vector<5x1xf32> to vector<5x128xf32>
    %391 = arith.mulf %390, %384 : vector<5x128xf32>
    %392 = arith.addf %131, %391 : vector<5x128xf32>
    %393 = arith.mulf %389, %385 : vector<5x1xf32>
    %394 = arith.addf %132, %393 : vector<5x1xf32>
    %395 = tpu.reciprocal %394 {approx = true} : vector<5x1xf32> -> vector<5x1xf32>
    %396 = vector.broadcast %395 : vector<5x1xf32> to vector<5x128xf32>
    %397 = arith.mulf %392, %396 : vector<5x128xf32>
    %398 = arith.mulf %397, %397 : vector<5x128xf32>
    %cst_121 = arith.constant dense<0.000000e+00> : vector<5xf32>
    %399 = vector.multi_reduction <add>, %398, %cst_121 [1] : vector<5x128xf32> to vector<5xf32>
    %400 = vector.shape_cast %399 : vector<5xf32> to vector<5x1xf32>
    %cst_122 = arith.constant 0.00999999977 : f32
    %401 = vector.broadcast %cst_122 : f32 to vector<5x1xf32>
    %402 = arith.mulf %401, %400 : vector<5x1xf32>
    %cst_123 = arith.constant 1.000000e+00 : f32
    %403 = vector.broadcast %cst_123 : f32 to vector<5x1xf32>
    %404 = arith.subf %403, %402 : vector<5x1xf32>
    %cst_124 = arith.constant 0.000000e+00 : f32
    %405 = vector.broadcast %cst_124 : f32 to vector<5x1xf32>
    %406 = arith.maximumf %404, %405 : vector<5x1xf32>
    %407 = math.sqrt %406 : vector<5x1xf32>
    %cst_125 = arith.constant 1.000000e+00 : f32
    %408 = vector.broadcast %cst_125 : f32 to vector<5x1xf32>
    %409 = arith.addf %408, %407 : vector<5x1xf32>
    %410 = tpu.reciprocal %409 {approx = true} : vector<5x1xf32> -> vector<5x1xf32>
    %411 = vector.broadcast %410 : vector<5x1xf32> to vector<5x128xf32>
    %412 = arith.mulf %397, %411 : vector<5x128xf32>
    %cst_126 = arith.constant dense<0.000000e+00> : vector<15x5xf32>
    %413 = tpu.matmul %90, %412, %cst_126 {dimension_numbers = #tpu.dot_dimension_numbers<[1], [1], [0], [0], [0, 0, 1, 0], [], []>} : vector<15x128xf32>, vector<5x128xf32>, vector<15x5xf32> -> vector<15x5xf32>
    %cst_127 = arith.constant 1.000000e+00 : f32
    %414 = vector.broadcast %cst_127 : f32 to vector<1x128xf32>
    %415 = arith.mulf %412, %412 : vector<5x128xf32>
    %cst_128 = arith.constant dense<0.000000e+00> : vector<1x5xf32>
    %416 = tpu.matmul %414, %415, %cst_128 {dimension_numbers = #tpu.dot_dimension_numbers<[1], [1], [0], [0], [0, 0, 1, 0], [], []>} : vector<1x128xf32>, vector<5x128xf32>, vector<1x5xf32> -> vector<1x5xf32>
    %cst_129 = arith.constant 2.000000e-02 : f32
    %417 = vector.broadcast %cst_129 : f32 to vector<15x5xf32>
    %418 = arith.mulf %417, %413 : vector<15x5xf32>
    %cst_130 = arith.constant 1.000000e+00 : f32
    %419 = vector.broadcast %cst_130 : f32 to vector<15x5xf32>
    %420 = arith.subf %419, %418 : vector<15x5xf32>
    %cst_131 = arith.constant 0.00999999977 : f32
    %421 = vector.broadcast %cst_131 : f32 to vector<1x5xf32>
    %422 = arith.mulf %421, %416 : vector<1x5xf32>
    %423 = vector.broadcast %422 : vector<1x5xf32> to vector<15x5xf32>
    %424 = arith.addf %420, %423 : vector<15x5xf32>
    %cst_132 = arith.constant 0.00999999977 : f32
    %425 = vector.broadcast %cst_132 : f32 to vector<15x1xf32>
    %426 = arith.mulf %425, %117 : vector<15x1xf32>
    %cst_133 = arith.constant 1.000000e+00 : f32
    %427 = vector.broadcast %cst_133 : f32 to vector<15x1xf32>
    %428 = arith.subf %427, %426 : vector<15x1xf32>
    %429 = arith.mulf %424, %424 : vector<15x5xf32>
    %430 = vector.broadcast %117 : vector<15x1xf32> to vector<15x5xf32>
    %431 = arith.mulf %429, %430 : vector<15x5xf32>
    %432 = arith.mulf %428, %428 : vector<15x1xf32>
    %433 = vector.broadcast %432 : vector<15x1xf32> to vector<15x5xf32>
    %434 = vector.broadcast %416 : vector<1x5xf32> to vector<15x5xf32>
    %435 = arith.mulf %433, %434 : vector<15x5xf32>
    %436 = arith.addf %431, %435 : vector<15x5xf32>
    %cst_134 = arith.constant 2.000000e+00 : f32
    %437 = vector.broadcast %cst_134 : f32 to vector<15x5xf32>
    %438 = arith.mulf %437, %424 : vector<15x5xf32>
    %439 = vector.broadcast %428 : vector<15x1xf32> to vector<15x5xf32>
    %440 = arith.mulf %438, %439 : vector<15x5xf32>
    %441 = arith.mulf %440, %413 : vector<15x5xf32>
    %442 = arith.subf %436, %441 : vector<15x5xf32>
    %cst_135 = arith.constant 2.000000e-02 : f32
    %443 = vector.broadcast %cst_135 : f32 to vector<15x5xf32>
    %444 = arith.mulf %443, %413 : vector<15x5xf32>
    %cst_136 = arith.constant 1.000000e+00 : f32
    %445 = vector.broadcast %cst_136 : f32 to vector<15x5xf32>
    %446 = arith.subf %445, %444 : vector<15x5xf32>
    %cst_137 = arith.constant 9.99999974E-5 : f32
    %447 = vector.broadcast %cst_137 : f32 to vector<15x1xf32>
    %448 = arith.mulf %447, %117 : vector<15x1xf32>
    %449 = vector.broadcast %448 : vector<15x1xf32> to vector<15x5xf32>
    %450 = vector.broadcast %416 : vector<1x5xf32> to vector<15x5xf32>
    %451 = arith.mulf %449, %450 : vector<15x5xf32>
    %452 = arith.addf %446, %451 : vector<15x5xf32>
    %cst_138 = arith.constant 0.000000e+00 : f32
    %453 = vector.broadcast %cst_138 : f32 to vector<15x5xf32>
    %454 = arith.maximumf %442, %453 : vector<15x5xf32>
    %455 = math.sqrt %454 : vector<15x5xf32>
    %456 = math.absf %452 : vector<15x5xf32>
    %cst_139 = arith.constant 1.000000e-15 : f32
    %457 = vector.broadcast %cst_139 : f32 to vector<15x5xf32>
    %458 = arith.maximumf %456, %457 : vector<15x5xf32>
    %459 = tpu.reciprocal %458 {approx = true} : vector<15x5xf32> -> vector<15x5xf32>
    %460 = arith.mulf %455, %459 : vector<15x5xf32>
    %cst_140 = arith.constant 1.000000e-01 : f32
    %461 = vector.broadcast %cst_140 : f32 to vector<15x5xf32>
    %462 = arith.mulf %461, %460 : vector<15x5xf32>
    %cst_141 = arith.constant 0.999989986 : f32
    %463 = vector.broadcast %cst_141 : f32 to vector<15x5xf32>
    %464 = arith.minimumf %462, %463 : vector<15x5xf32>
    %cst_142 = arith.constant 1.000000e+00 : f32
    %465 = vector.broadcast %cst_142 : f32 to vector<15x5xf32>
    %466 = arith.addf %465, %464 : vector<15x5xf32>
    %cst_143 = arith.constant 1.000000e+00 : f32
    %467 = vector.broadcast %cst_143 : f32 to vector<15x5xf32>
    %468 = arith.subf %467, %464 : vector<15x5xf32>
    %469 = tpu.reciprocal %468 {approx = true} : vector<15x5xf32> -> vector<15x5xf32>
    %470 = arith.mulf %466, %469 : vector<15x5xf32>
    %471 = math.log %470 : vector<15x5xf32>
    %cst_144 = arith.constant 1.000000e+01 : f32
    %472 = vector.broadcast %cst_144 : f32 to vector<15x5xf32>
    %473 = arith.mulf %472, %471 : vector<15x5xf32>
    %cst_145 = arith.constant 1.000000e+00 : f32
    %474 = vector.broadcast %cst_145 : f32 to vector<15x5xf32>
    %475 = arith.mulf %473, %474 : vector<15x5xf32>
    %cst_146 = arith.constant 0.000000e+00 : f32
    %476 = vector.broadcast %cst_146 : f32 to vector<15x5xf32>
    %477 = arith.subf %476, %475 : vector<15x5xf32>
    %cst_147 = arith.constant dense<0xFF800000> : vector<15xf32>
    %478 = vector.multi_reduction <maximumf>, %477, %cst_147 [1] : vector<15x5xf32> to vector<15xf32>
    %479 = vector.shape_cast %478 : vector<15xf32> to vector<15x1xf32>
    %480 = vector.broadcast %479 : vector<15x1xf32> to vector<15x5xf32>
    %481 = arith.subf %477, %480 : vector<15x5xf32>
    %482 = math.exp %481 : vector<15x5xf32>
    %cst_148 = arith.constant dense<0.000000e+00> : vector<15xf32>
    %483 = vector.multi_reduction <add>, %482, %cst_148 [1] : vector<15x5xf32> to vector<15xf32>
    %484 = vector.shape_cast %483 : vector<15xf32> to vector<15x1xf32>
    %485 = vector.broadcast %484 : vector<15x1xf32> to vector<15x5xf32>
    %486 = arith.divf %482, %485 : vector<15x5xf32>
    %c0_149 = arith.constant 0 : index
    %c0_150 = arith.constant 0 : index
    %487 = vector.load %arg5[%c0_149, %c0_150] : memref<15x5xf32, #tpu.memory_space<vmem>>, vector<15x5xf32>
    tpu.vector_store %arg5[%c0_149, %c0_150], %486 {strides = array<i32>} : memref<15x5xf32, #tpu.memory_space<vmem>>, vector<15x5xf32>,
    %cst_151 = arith.constant 0.000000e+00 : f32
    %488 = vector.broadcast %cst_151 : f32 to vector<5x15xf32>
    %489 = arith.subf %488, %216 : vector<5x15xf32>
    %cst_152 = arith.constant dense<0xFF800000> : vector<15xf32>
    %490 = vector.multi_reduction <maximumf>, %489, %cst_152 [0] : vector<5x15xf32> to vector<15xf32>
    %491 = vector.shape_cast %490 : vector<15xf32> to vector<1x15xf32>
    %492 = vector.broadcast %491 : vector<1x15xf32> to vector<5x15xf32>
    %493 = arith.subf %489, %492 : vector<5x15xf32>
    %494 = math.exp %493 : vector<5x15xf32>
    %cst_153 = arith.constant dense<0.000000e+00> : vector<15xf32>
    %495 = vector.multi_reduction <add>, %494, %cst_153 [0] : vector<5x15xf32> to vector<15xf32>
    %496 = vector.shape_cast %495 : vector<15xf32> to vector<1x15xf32>
    %497 = math.log %496 : vector<1x15xf32>
    %498 = arith.addf %491, %497 : vector<1x15xf32>
    %499 = vector.broadcast %498 : vector<1x15xf32> to vector<5x15xf32>
    %500 = arith.subf %489, %499 : vector<5x15xf32>
    %cst_154 = arith.constant dense<0xFF800000> : vector<15xf32>
    %501 = vector.multi_reduction <maximumf>, %500, %cst_154 [0] : vector<5x15xf32> to vector<15xf32>
    %502 = vector.shape_cast %501 : vector<15xf32> to vector<1x15xf32>
    %503 = vector.broadcast %502 : vector<1x15xf32> to vector<5x15xf32>
    %504 = arith.subf %500, %503 : vector<5x15xf32>
    %505 = math.exp %504 : vector<5x15xf32>
    %cst_155 = arith.constant dense<0.000000e+00> : vector<15xf32>
    %506 = vector.multi_reduction <add>, %505, %cst_155 [0] : vector<5x15xf32> to vector<15xf32>
    %507 = vector.shape_cast %506 : vector<15xf32> to vector<1x15xf32>
    %508 = math.log %507 : vector<1x15xf32>
    %509 = arith.addf %502, %508 : vector<1x15xf32>
    %510 = vector.broadcast %509 : vector<1x15xf32> to vector<5x15xf32>
    %511 = arith.subf %500, %510 : vector<5x15xf32>
    %512 = arith.mulf %2, %511 : vector<5x15xf32>
    %cst_156 = arith.constant dense<0.000000e+00> : vector<15xf32>
    %513 = vector.multi_reduction <add>, %512, %cst_156 [0] : vector<5x15xf32> to vector<15xf32>
    %514 = vector.shape_cast %513 : vector<15xf32> to vector<1x15xf32>
    %cst_157 = arith.constant dense<0.000000e+00> : vector<1xf32>
    %515 = vector.multi_reduction <add>, %514, %cst_157 [1] : vector<1x15xf32> to vector<1xf32>
    %516 = vector.shape_cast %515 : vector<1xf32> to vector<1x1xf32>
    %cst_158 = arith.constant 0.000000e+00 : f32
    %517 = vector.broadcast %cst_158 : f32 to vector<1x1xf32>
    %518 = arith.subf %517, %516 : vector<1x1xf32>
    %cst_159 = arith.constant 0.0666666701 : f32
    %519 = vector.broadcast %cst_159 : f32 to vector<1x1xf32>
    %520 = arith.mulf %518, %519 : vector<1x1xf32>
    %c0_160 = arith.constant 0 : index
    %c0_161 = arith.constant 0 : index
    %521 = vector.load %arg6[%c0_160, %c0_161] : memref<1x1xf32, #tpu.memory_space<vmem>>, vector<1x1xf32>
    tpu.vector_store %arg6[%c0_160, %c0_161], %520 {strides = array<i32>} : memref<1x1xf32, #tpu.memory_space<vmem>>, vector<1x1xf32>,
    return
  }
  func.func @transform_0(%arg0: i32) -> (i32, i32) {
    %c0_i32 = arith.constant 0 : i32
    %c0_i32_0 = arith.constant 0 : i32
    %c0_i32_1 = arith.constant 0 : i32
    return %c0_i32, %c0_i32_0 : i32, i32
  }
  func.func @transform_1(%arg0: i32) -> (i32, i32) {
    %c0_i32 = arith.constant 0 : i32
    %c0_i32_0 = arith.constant 0 : i32
    %c0_i32_1 = arith.constant 0 : i32
    return %c0_i32, %c0_i32_0 : i32, i32
  }
  func.func @transform_2(%arg0: i32) -> (i32, i32, i32) {
    %c0_i32 = arith.constant 0 : i32
    %c0_i32_0 = arith.constant 0 : i32
    %c0_i32_1 = arith.constant 0 : i32
    %c0_i32_2 = arith.constant 0 : i32
    return %c0_i32, %c0_i32_0, %c0_i32_1 : i32, i32, i32
  }
  func.func @transform_3(%arg0: i32) -> (i32, i32) {
    %c0_i32 = arith.constant 0 : i32
    %c0_i32_0 = arith.constant 0 : i32
    %c0_i32_1 = arith.constant 0 : i32
    return %c0_i32, %c0_i32_0 : i32, i32
  }
  func.func @transform_4(%arg0: i32) -> (i32, i32) {
    %c0_i32 = arith.constant 0 : i32
    %c0_i32_0 = arith.constant 0 : i32
    %c0_i32_1 = arith.constant 0 : i32
    return %c0_i32, %c0_i32_0 : i32, i32
  }
  func.func @transform_5(%arg0: i32) -> (i32, i32) {
    %c0_i32 = arith.constant 0 : i32
    %c0_i32_0 = arith.constant 0 : i32
    %c0_i32_1 = arith.constant 0 : i32
    return %c0_i32, %c0_i32_0 : i32, i32
  }
}

</mosaic_0001>

<llo_original>
// kernel: hpr_wn_forward.1
$region0: #{hpr_wn_forward.1}
  #allocation0 [shape = 'u32[]', space=smem, size = 0x4, offset = 0x4, fixed_abs, tag = 'smem constant byte address 0x4 - core index']
  #allocation1 [shape = 'u32[144,128]{1,0:T(1,128)}', space=vmem, size = 0x12000, scoped, tag = 'internal scratch']
  %s0 = inlined_call_operand.vmem [shape: f32[25,128], index: 0, kind: input, shape index: {}]
  %s1 = inlined_call_operand.vmem [shape: f32[15,128], index: 1, kind: input, shape index: {}]
  %s2 = inlined_call_operand.vmem [shape: f32[40,5,128], index: 2, kind: input, shape index: {}]
  %s3 = inlined_call_operand.vmem [shape: f32[5,15], index: 3, kind: input, shape index: {}]
  %s4 = inlined_call_operand.vmem [shape: f32[15,5], index: 4, kind: output, shape index: {0}]
  %s5 = inlined_call_operand.hbm [shape: f32[1,1], index: 5, kind: output, shape index: {1}]
  %6 = xla_tuple %s4, %s5
  %s7 = sld [smem:[#allocation0]]
  $region34: #{hpr_wn_forward.1} parent=0
    _
  %s9 = ssub.s32 1, %s7
  %s10 = scalar_select 0, %s9, %s7
  $region1: #{hpr_wn_forward.1} parent=0
    #allocation2 [shape = 'u8[512]{0}', space=vmem, size = 0x400, scoped, tag = 'output window, operand 1, single buffered']
    #allocation3 [shape = 's32[1]{0}', space=sflag, size = 0x4, scoped, tag = 'scoped memory for hpr_wn_forward.1']
    %11 = vsyncpa [#allocation3], 0
    // Predicated region
    $region2: #{hpr_wn_forward.1} parent=1 // pred_check
      _
    $region3: #{hpr_wn_forward.1} parent=1 // pred_check_branch
      %13 = sbr.rel (0) target = $region5
    $region4: #{hpr_wn_forward.1} parent=1 // pred_region
      _
    $region5: #{hpr_wn_forward.1} parent=1 // pred_fallthru
      _
    // Predicated region
    $region6: #{hpr_wn_forward.1} parent=1 // pred_check
      _
    $region7: #{hpr_wn_forward.1} parent=1 // pred_check_branch
      %15 = sbr.rel (0) target = $region9
    $region8: #{hpr_wn_forward.1} parent=1 // pred_region
      _
    $region9: #{hpr_wn_forward.1} parent=1 // pred_fallthru
      _
    // Predicated region
    $region10: #{hpr_wn_forward.1} parent=1 // pred_check
      _
    $region11: #{hpr_wn_forward.1} parent=1 // pred_check_branch
      %17 = sbr.rel (0) target = $region13
    $region12: #{hpr_wn_forward.1} parent=1 // pred_region
      _
    $region13: #{hpr_wn_forward.1} parent=1 // pred_fallthru
      _
    // Predicated region
    $region14: #{hpr_wn_forward.1} parent=1 // pred_check
      _
    $region15: #{hpr_wn_forward.1} parent=1 // pred_check_branch
      %19 = sbr.rel (0) target = $region17
    $region16: #{hpr_wn_forward.1} parent=1 // pred_region
      _
    $region17: #{hpr_wn_forward.1} parent=1 // pred_fallthru
      _
    %v20 = vld [vmem:[%s0] sm:$0xff]
    %v21 = vld [vmem:[%s0 + $0x8] sm:$0xff]
    %v22 = vld [vmem:[%s0 + $0x10] sm:$0xff]
    %v23 = vld [vmem:[%s0 + $0x18] sm:$0x1]
    %v24 = vld [vmem:[%s1] sm:$0xff]
    %v25 = vld [vmem:[%s1 + $0x8] sm:$0x7f]
    %v26 = vld [vmem:[%s3] sm:$0x1f]
    %v27 = vmul.f32 %v20, %v20
    %v28 = vmul.f32 %v21, %v21
    %v29 = vmul.f32 %v22, %v22
    %v30 = vmul.f32 %v23, %v23
    %31 = vadd.xlane.f32.xlu0 %v27
    %v32 = vpop.xlane.xlu0 %31
    %33 = vadd.xlane.f32.xlu0 %v28
    %v34 = vpop.xlane.xlu0 %33
    %35 = vadd.xlane.f32.xlu0 %v29
    %v36 = vpop.xlane.xlu0 %35
    %vm37 = vcmask 1040384
    %v38 = vsel %vm37, %v30, 0.0
    %39 = vadd.xlane.f32.xlu0 %v38
    %v40 = vpop.xlane.xlu0 %39
    %v41 = vrsqrt.pop %v32
    %v42 = vmul.f32 %v32, %v41
    %vm43 = vcmp.eq.f32.partialorder %v32, inf
    %v44 = vsel %vm43, %v32, %v42
    %vm45 = vcmp.eq.f32.partialorder %v32, 0.0
    %v46 = vand.u32 %v32, 2147483648
    %v47 = vsel %vm45, %v46, %v44
    %v48 = vrsqrt.pop %v34
    %v49 = vmul.f32 %v34, %v48
    %vm50 = vcmp.eq.f32.partialorder %v34, inf
    %v51 = vsel %vm50, %v34, %v49
    %vm52 = vcmp.eq.f32.partialorder %v34, 0.0
    %v53 = vand.u32 %v34, 2147483648
    %v54 = vsel %vm52, %v53, %v51
    %v55 = vrsqrt.pop %v36
    %v56 = vmul.f32 %v36, %v55
    %vm57 = vcmp.eq.f32.partialorder %v36, inf
    %v58 = vsel %vm57, %v36, %v56
    %vm59 = vcmp.eq.f32.partialorder %v36, 0.0
    %v60 = vand.u32 %v36, 2147483648
    %v61 = vsel %vm59, %v60, %v58
    %v62 = vrsqrt.pop %v40
    %v63 = vmul.f32 %v40, %v62
    %vm64 = vcmp.eq.f32.partialorder %v40, inf
    %v65 = vsel %vm64, %v40, %v63
    %vm66 = vcmp.eq.f32.partialorder %v40, 0.0
    %v67 = vand.u32 %v40, 2147483648
    %v68 = vsel %vm66, %v67, %v65
    %v69 = vmax.f32 %v47, 1e-05
    %v70 = vmax.f32 %v54, 1e-05
    %v71 = vmax.f32 %v61, 1e-05
    %v72 = vmax.f32 %v68, 1e-05
    %v73 = vmul.f32 %v69, 0.1
    %v74 = vmul.f32 %v70, 0.1
    %v75 = vmul.f32 %v71, 0.1
    %v76 = vmul.f32 %v72, 0.1
    %v77 = vtanh.pop %v73
    %v78 = vtanh.pop %v74
    %v79 = vtanh.pop %v75
    %v80 = vtanh.pop %v76
    %v81 = vmul.f32 %v77, %v20
    %v82 = vmul.f32 %v78, %v21
    %v83 = vmul.f32 %v79, %v22
    %v84 = vmul.f32 %v80, %v23
    %v85 = vrcp.pop %v73
    %v86 = vrcp.pop %v74
    %v87 = vrcp.pop %v75
    %v88 = vrcp.pop %v76
    %v89 = vmul.f32 %v81, %v85
    %v90 = vmul.f32 %v82, %v86
    %v91 = vmul.f32 %v83, %v87
    %v92 = vmul.f32 %v84, %v88
    %v93 = vmul.f32 %v89, %v89
    %v94 = vmul.f32 %v90, %v90
    %v95 = vmul.f32 %v91, %v91
    %v96 = vmul.f32 %v92, %v92
    %97 = vadd.xlane.f32.xlu0 %v93
    %v98 = vpop.xlane.xlu0 %97
    %99 = vadd.xlane.f32.xlu0 %v94
    %v100 = vpop.xlane.xlu0 %99
    %101 = vadd.xlane.f32.xlu0 %v95
    %v102 = vpop.xlane.xlu0 %101
    %v103 = vsel %vm37, %v96, 0.0
    %104 = vadd.xlane.f32.xlu0 %v103
    %v105 = vpop.xlane.xlu0 %104
    %v106 = vrsqrt.pop %v98
    %v107 = vmul.f32 %v98, %v106
    %vm108 = vcmp.eq.f32.partialorder %v98, inf
    %v109 = vsel %vm108, %v98, %v107
    %vm110 = vcmp.eq.f32.partialorder %v98, 0.0
    %v111 = vand.u32 %v98, 2147483648
    %v112 = vsel %vm110, %v111, %v109
    %v113 = vrsqrt.pop %v100
    %v114 = vmul.f32 %v100, %v113
    %vm115 = vcmp.eq.f32.partialorder %v100, inf
    %v116 = vsel %vm115, %v100, %v114
    %vm117 = vcmp.eq.f32.partialorder %v100, 0.0
    %v118 = vand.u32 %v100, 2147483648
    %v119 = vsel %vm117, %v118, %v116
    %v120 = vrsqrt.pop %v102
    %v121 = vmul.f32 %v102, %v120
    %vm122 = vcmp.eq.f32.partialorder %v102, inf
    %v123 = vsel %vm122, %v102, %v121
    %vm124 = vcmp.eq.f32.partialorder %v102, 0.0
    %v125 = vand.u32 %v102, 2147483648
    %v126 = vsel %vm124, %v125, %v123
    %v127 = vrsqrt.pop %v105
    %v128 = vmul.f32 %v105, %v127
    %vm129 = vcmp.eq.f32.partialorder %v105, inf
    %v130 = vsel %vm129, %v105, %v128
    %vm131 = vcmp.eq.f32.partialorder %v105, 0.0
    %v132 = vand.u32 %v105, 2147483648
    %v133 = vsel %vm131, %v132, %v130
    %v134 = vmax.f32 %v112, 1e-05
    %v135 = vmax.f32 %v119, 1e-05
    %v136 = vmax.f32 %v126, 1e-05
    %v137 = vmax.f32 %v133, 1e-05
    %vm138 = vcmp.gt.f32.partialorder %v134, 9.99
    %vm139 = vcmp.gt.f32.partialorder %v135, 9.99
    %vm140 = vcmp.gt.f32.partialorder %v136, 9.99
    %vm141 = vcmp.gt.f32.partialorder %v137, 9.99
    %v142 = vrcp.pop %v134
    %v143 = vrcp.pop %v135
    %v144 = vrcp.pop %v136
    %v145 = vrcp.pop %v137
    %v146 = vmul.f32 %v142, 9.99
    %v147 = vmul.f32 %v143, 9.99
    %v148 = vmul.f32 %v144, 9.99
    %v149 = vmul.f32 %v145, 9.99
    %v150 = vmul.f32 %v89, %v146
    %v151 = vmul.f32 %v90, %v147
    %v152 = vmul.f32 %v91, %v148
    %v153 = vmul.f32 %v92, %v149
    %v154 = vsel %vm138, 1, 0
    %v155 = vsel %vm139, 1, 0
    %v156 = vsel %vm140, 1, 0
    %v157 = vsel %vm141, 1, 0
    %vm158 = vcmp.eq.s32.totalorder %v154, 1
    %vm159 = vcmp.eq.s32.totalorder %v155, 1
    %vm160 = vcmp.eq.s32.totalorder %v156, 1
    %vm161 = vcmp.eq.s32.totalorder %v157, 1
    %v162 = vsel %vm158, %v150, %v89
    %v163 = vsel %vm159, %v151, %v90
    %v164 = vsel %vm160, %v152, %v91
    %v165 = vsel %vm161, %v153, %v92
    %v166 = vmul.f32 %v162, %v162
    %v167 = vmul.f32 %v163, %v163
    %v168 = vmul.f32 %v164, %v164
    %v169 = vmul.f32 %v165, %v165
    %170 = vadd.xlane.f32.xlu0 %v166
    %v171 = vpop.xlane.xlu0 %170
    %172 = vadd.xlane.f32.xlu0 %v167
    %v173 = vpop.xlane.xlu0 %172
    %174 = vadd.xlane.f32.xlu0 %v168
    %v175 = vpop.xlane.xlu0 %174
    %v176 = vsel %vm37, %v169, 0.0
    %177 = vadd.xlane.f32.xlu0 %v176
    %v178 = vpop.xlane.xlu0 %177
    %v179 = vmul.f32 %v162, 2.0
    %v180 = vmul.f32 %v163, 2.0
    %v181 = vmul.f32 %v164, 2.0
    %v182 = vmul.f32 %v165, 2.0
    %v183 = vmul.f32 %v171, 0.01
    %v184 = vmul.f32 %v173, 0.01
    %v185 = vmul.f32 %v175, 0.01
    %v186 = vmul.f32 %v178, 0.01
    %v187 = vadd.f32 %v183, 1.0
    %v188 = vadd.f32 %v184, 1.0
    %v189 = vadd.f32 %v185, 1.0
    %v190 = vadd.f32 %v186, 1.0
    %v191 = vrcp.pop %v187
    %v192 = vrcp.pop %v188
    %v193 = vrcp.pop %v189
    %v194 = vrcp.pop %v190
    %v195 = vmul.f32 %v179, %v191
    %v196 = vmul.f32 %v180, %v192
    %v197 = vmul.f32 %v181, %v193
    %v198 = vmul.f32 %v182, %v194
    %v199 = vmul.f32 %v195, %v195
    %v200 = vmul.f32 %v196, %v196
    %v201 = vmul.f32 %v197, %v197
    %v202 = vmul.f32 %v198, %v198
    %203 = vadd.xlane.f32.xlu0 %v199
    %v204 = vpop.xlane.xlu0 %203
    %205 = vadd.xlane.f32.xlu0 %v200
    %v206 = vpop.xlane.xlu0 %205
    %207 = vadd.xlane.f32.xlu0 %v201
    %v208 = vpop.xlane.xlu0 %207
    %v209 = vsel %vm37, %v202, 0.0
    %210 = vadd.xlane.f32.xlu0 %v209
    %v211 = vpop.xlane.xlu0 %210
    %v212 = vmul.f32 %v204, 0.01
    %v213 = vmul.f32 %v206, 0.01
    %v214 = vmul.f32 %v208, 0.01
    %v215 = vmul.f32 %v211, 0.01
    %v216 = vsub.f32 1.0, %v212
    %v217 = vsub.f32 1.0, %v213
    %v218 = vsub.f32 1.0, %v214
    %v219 = vsub.f32 1.0, %v215
    %v220 = vmax.f32 %v216, 1e-15
    %v221 = vmax.f32 %v217, 1e-15
    %v222 = vmax.f32 %v218, 1e-15
    %v223 = vmax.f32 %v219, 1e-15
    %v224 = vrsqrt.pop %v220
    %v225 = vrsqrt.pop %v221
    %v226 = vrsqrt.pop %v222
    %v227 = vrsqrt.pop %v223
    %v228 = vmul.f32 %v224, %v195
    %v229 = vmul.f32 %v225, %v196
    %v230 = vmul.f32 %v226, %v197
    %v231 = vmul.f32 %v227, %v198
    %v232 = vmul.f32 %v24, %v24
    %v233 = vmul.f32 %v25, %v25
    %234 = vadd.xlane.f32.xlu0 %v232
    %v235 = vpop.xlane.xlu0 %234
    %vm236 = vcmask 1046528
    %v237 = vsel %vm236, %v233, 0.0
    %238 = vadd.xlane.f32.xlu0 %v237
    %v239 = vpop.xlane.xlu0 %238
    %v240 = vrsqrt.pop %v235
    %v241 = vmul.f32 %v235, %v240
    %vm242 = vcmp.eq.f32.partialorder %v235, inf
    %v243 = vsel %vm242, %v235, %v241
    %vm244 = vcmp.eq.f32.partialorder %v235, 0.0
    %v245 = vand.u32 %v235, 2147483648
    %v246 = vsel %vm244, %v245, %v243
    %v247 = vrsqrt.pop %v239
    %v248 = vmul.f32 %v239, %v247
    %vm249 = vcmp.eq.f32.partialorder %v239, inf
    %v250 = vsel %vm249, %v239, %v248
    %vm251 = vcmp.eq.f32.partialorder %v239, 0.0
    %v252 = vand.u32 %v239, 2147483648
    %v253 = vsel %vm251, %v252, %v250
    %v254 = vmax.f32 %v246, 1e-05
    %v255 = vmax.f32 %v253, 1e-05
    %v256 = vmul.f32 %v254, 0.1
    %v257 = vmul.f32 %v255, 0.1
    %v258 = vtanh.pop %v256
    %v259 = vtanh.pop %v257
    %v260 = vmul.f32 %v258, %v24
    %v261 = vmul.f32 %v259, %v25
    %v262 = vrcp.pop %v256
    %v263 = vrcp.pop %v257
    %v264 = vmul.f32 %v260, %v262
    %v265 = vmul.f32 %v261, %v263
    %v266 = vmul.f32 %v264, %v264
    %v267 = vmul.f32 %v265, %v265
    %268 = vadd.xlane.f32.xlu0 %v266
    %v269 = vpop.xlane.xlu0 %268
    %v270 = vsel %vm236, %v267, 0.0
    %271 = vadd.xlane.f32.xlu0 %v270
    %v272 = vpop.xlane.xlu0 %271
    %v273 = vrsqrt.pop %v269
    %v274 = vmul.f32 %v269, %v273
    %vm275 = vcmp.eq.f32.partialorder %v269, inf
    %v276 = vsel %vm275, %v269, %v274
    %vm277 = vcmp.eq.f32.partialorder %v269, 0.0
    %v278 = vand.u32 %v269, 2147483648
    %v279 = vsel %vm277, %v278, %v276
    %v280 = vrsqrt.pop %v272
    %v281 = vmul.f32 %v272, %v280
    %vm282 = vcmp.eq.f32.partialorder %v272, inf
    %v283 = vsel %vm282, %v272, %v281
    %vm284 = vcmp.eq.f32.partialorder %v272, 0.0
    %v285 = vand.u32 %v272, 2147483648
    %v286 = vsel %vm284, %v285, %v283
    %v287 = vmax.f32 %v279, 1e-05
    %v288 = vmax.f32 %v286, 1e-05
    %vm289 = vcmp.gt.f32.partialorder %v287, 9.99
    %vm290 = vcmp.gt.f32.partialorder %v288, 9.99
    %v291 = vrcp.pop %v287
    %v292 = vrcp.pop %v288
    %v293 = vmul.f32 %v291, 9.99
    %v294 = vmul.f32 %v292, 9.99
    %v295 = vmul.f32 %v264, %v293
    %v296 = vmul.f32 %v265, %v294
    %v297 = vsel %vm289, 1, 0
    %v298 = vsel %vm290, 1, 0
    %vm299 = vcmp.eq.s32.totalorder %v297, 1
    %vm300 = vcmp.eq.s32.totalorder %v298, 1
    %v301 = vsel %vm299, %v295, %v264
    %v302 = vsel %vm300, %v296, %v265
    %v303 = vmul.f32 %v301, %v301
    %v304 = vmul.f32 %v302, %v302
    %305 = vadd.xlane.f32.xlu0 %v303
    %v306 = vpop.xlane.xlu0 %305
    %v307 = vsel %vm236, %v304, 0.0
    %308 = vadd.xlane.f32.xlu0 %v307
    %v309 = vpop.xlane.xlu0 %308
    %v310 = vmul.f32 %v301, 2.0
    %v311 = vmul.f32 %v302, 2.0
    %v312 = vmul.f32 %v306, 0.01
    %v313 = vmul.f32 %v309, 0.01
    %v314 = vadd.f32 %v312, 1.0
    %v315 = vadd.f32 %v313, 1.0
    %v316 = vrcp.pop %v314
    %v317 = vrcp.pop %v315
    %v318 = vmul.f32 %v310, %v316
    %v319 = vmul.f32 %v311, %v317
    %v320 = vmul.f32 %v318, %v318
    %v321 = vmul.f32 %v319, %v319
    %322 = vadd.xlane.f32.xlu0 %v320
    %v323 = vpop.xlane.xlu0 %322
    %v324 = vsel %vm236, %v321, 0.0
    %325 = vadd.xlane.f32.xlu0 %v324
    %v326 = vpop.xlane.xlu0 %325
    %v327 = vmul.f32 %v323, 0.01
    %v328 = vmul.f32 %v326, 0.01
    %v329 = vsub.f32 1.0, %v327
    %v330 = vsub.f32 1.0, %v328
    %v331 = vmax.f32 %v329, 1e-15
    %v332 = vmax.f32 %v330, 1e-15
    %v333 = vrsqrt.pop %v331
    %v334 = vrsqrt.pop %v332
    %v335 = vmul.f32 %v333, %v318
    %v336 = vmul.f32 %v334, %v319
    %v337 = vlaneseq
    %v338 = vand.u32 %v337, 127
    %v339 = vlaneseq
    %v340 = vshrl.u32 %v339, 7
    %v341 = vmul.u32 %v340, 5
    %vm342 = vcmp.ge.s32.totalorder %v338, %v341
    %v343 = vadd.s32 %v341, 5
    %vm344 = vcmp.lt.s32.totalorder %v338, %v343
    %vm345 = vmand %vm342, %vm344
    %v346 = vsel %vm345, 1, 0
    %v347 = vcvt.s32.f32 %v346
    %vm348 = vcmask 203776
    %v350 = vsel %vm348, %v347, 0
    %v353 = vsel %vm37, %v231, 0
    %355 = vmatprep.subr.mxu0 0.0
    %356 = vmatpush1.msra.mxu0 %v228
    %357 = vmatprep.subr.mxu0 0.0
    %358 = vmatpush1.msra.mxu0 %v229
    %359 = vmatprep.subr.mxu0 0.0
    %360 = vmatpush1.msra.mxu0 %v230
    %361 = vmatprep.subr.mxu0 0.0
    %362 = vmatpush1.msra.mxu0 %v353
    %363 = vmatprep.subr.mxu0 0.0
    %364 = vmatpush1.msra.mxu0 0.0
    %365 = vmatprep.subr.mxu0 0.0
    %366 = vmatpush1.msra.mxu0 0.0
    %367 = vmatprep.subr.mxu0 0.0
    %368 = vmatpush1.msra.mxu0 0.0
    %369 = vmatprep.subr.mxu0 0.0
    %370 = vmatpush1.msra.mxu0 0.0
    %371 = vmatprep.subr.mxu0 0.0
    %372 = vmatpush1.msra.mxu0 0.0
    %373 = vmatprep.subr.mxu0 0.0
    %374 = vmatpush1.msra.mxu0 0.0
    %375 = vmatprep.subr.mxu0 0.0
    %376 = vmatpush1.msra.mxu0 0.0
    %377 = vmatprep.subr.mxu0 0.0
    %378 = vmatpush1.msra.mxu0 0.0
    %379 = vmatprep.subr.mxu0 0.0
    %380 = vmatpush1.msra.mxu0 0.0
    %381 = vmatprep.subr.mxu0 0.0
    %382 = vmatpush1.msra.mxu0 0.0
    %383 = vmatprep.subr.mxu0 0.0
    %384 = vmatpush1.msra.mxu0 0.0
    %385 = vmatprep.subr.mxu0 0.0
    %386 = vmatpush1.msra.mxu0 0.0
    %387 = vmatprep.subr.mxu0 0.0
    %388 = vmatpush1.msra.mxu0 0.0
    %389 = vmatprep.subr.mxu0 0.0
    %390 = vmatpush1.msra.mxu0 0.0
    %391 = vmatprep.subr.mxu0 0.0
    %392 = vmatpush1.msra.mxu0 0.0
    %393 = vmatprep.subr.mxu0 0.0
    %394 = vmatpush1.msra.mxu0 0.0
    %395 = vmatprep.subr.mxu0 0.0
    %396 = vmatpush1.msra.mxu0 0.0
    %397 = vmatprep.subr.mxu0 0.0
    %398 = vmatpush1.msra.mxu0 0.0
    %399 = vmatprep.subr.mxu0 0.0
    %400 = vmatpush1.msra.mxu0 0.0
    %401 = vmatprep.subr.mxu0 0.0
    %402 = vmatpush1.msra.mxu0 0.0
    %403 = vmatprep.subr.mxu0 0.0
    %404 = vmatpush1.msra.mxu0 0.0
    %405 = vmatprep.subr.mxu0 0.0
    %406 = vmatpush1.msra.mxu0 0.0
    %407 = vmatprep.subr.mxu0 0.0
    %408 = vmatpush1.msra.mxu0 0.0
    %409 = vmatprep.subr.mxu0 0.0
    %410 = vmatpush1.msra.mxu0 0.0
    %411 = vmatprep.subr.mxu0 0.0
    %412 = vmatpush1.msra.mxu0 0.0
    %413 = vmatprep.subr.mxu0 0.0
    %414 = vmatpush1.msra.mxu0 0.0
    %415 = vmatprep.subr.mxu0 0.0
    %416 = vmatpush1.msra.mxu0 0.0
    %417 = vmatprep.subr.mxu0 0.0
    %418 = vmatpush1.msra.mxu0 0.0
    %419 = vmatprep.mubr.f32.mxu0 0.0
    %420 = vmatmul.mubr.f32.gmra.mrb[0].mxu0 %v350
    %v421 = vpop.f32.mrb[0].mxu0
    %v422 = vadd.f32 0.0, %v421
    %v423 = vpop.f32.mrb[0].mxu0
    %424 = vdwg.mxu0
    %v426 = vsel %vm37, %v227, 0
    %428 = vmatprep.subr.mxu0 0.0
    %429 = vmatpush1.msra.mxu0 %v224
    %430 = vmatprep.subr.mxu0 0.0
    %431 = vmatpush1.msra.mxu0 %v225
    %432 = vmatprep.subr.mxu0 0.0
    %433 = vmatpush1.msra.mxu0 %v226
    %434 = vmatprep.subr.mxu0 0.0
    %435 = vmatpush1.msra.mxu0 %v426
    %436 = vmatprep.subr.mxu0 0.0
    %437 = vmatpush1.msra.mxu0 0.0
    %438 = vmatprep.subr.mxu0 0.0
    %439 = vmatpush1.msra.mxu0 0.0
    %440 = vmatprep.subr.mxu0 0.0
    %441 = vmatpush1.msra.mxu0 0.0
    %442 = vmatprep.subr.mxu0 0.0
    %443 = vmatpush1.msra.mxu0 0.0
    %444 = vmatprep.subr.mxu0 0.0
    %445 = vmatpush1.msra.mxu0 0.0
    %446 = vmatprep.subr.mxu0 0.0
    %447 = vmatpush1.msra.mxu0 0.0
    %448 = vmatprep.subr.mxu0 0.0
    %449 = vmatpush1.msra.mxu0 0.0
    %450 = vmatprep.subr.mxu0 0.0
    %451 = vmatpush1.msra.mxu0 0.0
    %452 = vmatprep.subr.mxu0 0.0
    %453 = vmatpush1.msra.mxu0 0.0
    %454 = vmatprep.subr.mxu0 0.0
    %455 = vmatpush1.msra.mxu0 0.0
    %456 = vmatprep.subr.mxu0 0.0
    %457 = vmatpush1.msra.mxu0 0.0
    %458 = vmatprep.subr.mxu0 0.0
    %459 = vmatpush1.msra.mxu0 0.0
    %460 = vmatprep.subr.mxu0 0.0
    %461 = vmatpush1.msra.mxu0 0.0
    %462 = vmatprep.subr.mxu0 0.0
    %463 = vmatpush1.msra.mxu0 0.0
    %464 = vmatprep.subr.mxu0 0.0
    %465 = vmatpush1.msra.mxu0 0.0
    %466 = vmatprep.subr.mxu0 0.0
    %467 = vmatpush1.msra.mxu0 0.0
    %468 = vmatprep.subr.mxu0 0.0
    %469 = vmatpush1.msra.mxu0 0.0
    %470 = vmatprep.subr.mxu0 0.0
    %471 = vmatpush1.msra.mxu0 0.0
    %472 = vmatprep.subr.mxu0 0.0
    %473 = vmatpush1.msra.mxu0 0.0
    %474 = vmatprep.subr.mxu0 0.0
    %475 = vmatpush1.msra.mxu0 0.0
    %476 = vmatprep.subr.mxu0 0.0
    %477 = vmatpush1.msra.mxu0 0.0
    %478 = vmatprep.subr.mxu0 0.0
    %479 = vmatpush1.msra.mxu0 0.0
    %480 = vmatprep.subr.mxu0 0.0
    %481 = vmatpush1.msra.mxu0 0.0
    %482 = vmatprep.subr.mxu0 0.0
    %483 = vmatpush1.msra.mxu0 0.0
    %484 = vmatprep.subr.mxu0 0.0
    %485 = vmatpush1.msra.mxu0 0.0
    %486 = vmatprep.subr.mxu0 0.0
    %487 = vmatpush1.msra.mxu0 0.0
    %488 = vmatprep.subr.mxu0 0.0
    %489 = vmatpush1.msra.mxu0 0.0
    %490 = vmatprep.subr.mxu0 0.0
    %491 = vmatpush1.msra.mxu0 0.0
    %492 = vmatprep.mubr.f32.mxu0 0.0
    %493 = vmatmul.mubr.f32.gmra.mrb[0].mxu0 %v350
    %v494 = vpop.f32.mrb[0].mxu0
    %v495 = vadd.f32 0.0, %v494
    %v496 = vpop.f32.mrb[0].mxu0
    %497 = vdwg.mxu0
    %v498 = vrcp.pop %v495
    %500 = vset.pattern.permute.xlu0 0
    %501 = vperm.xlu0 %500, %v498
    %v502 = vpop.permute.xlu0 %501
    %v504 = vmul.f32 %v422, %v502
    %v505 = vmul.f32 %v504, %v504
    %vm506 = vcmask 1044480
    %v507 = vsel %vm506, %v505, 0.0
    %508 = vadd.xlane.f32.xlu0 %v507
    %v509 = vpop.xlane.xlu0 %508
    %v510 = vmul.f32 %v509, 0.01
    %v511 = vsub.f32 1.0, %v510
    %v512 = vmax.f32 %v511, 0.0
    %v513 = vrsqrt.pop %v512
    %v514 = vmul.f32 %v512, %v513
    %vm515 = vcmp.eq.f32.partialorder %v512, inf
    %v516 = vsel %vm515, %v512, %v514
    %vm517 = vcmp.eq.f32.partialorder %v512, 0.0
    %v518 = vand.u32 %v512, 2147483648
    %v519 = vsel %vm517, %v518, %v516
    %v520 = vadd.f32 %v519, 1.0
    %v521 = vrcp.pop %v520
    %v522 = vmul.f32 %v504, %v521
    %v523 = vmul.f32 %v522, %v522
    %v524 = vsel %vm506, %v523, 0.0
    %525 = vadd.xlane.f32.xlu0 %v524
    %v526 = vpop.xlane.xlu0 %525
    %527 = vmatprep.subr.mxu0 0.0
    %528 = vmatpush1.xpose.msra.mxu0 %v301
    %529 = vmatprep.subr.mxu0 0.0
    %530 = vmatpush1.xpose.msra.mxu0 %v302
    %531 = vmatprep.subr.mxu0 0.0
    %532 = vmatpush1.xpose.msra.mxu0 0.0
    %533 = vmatprep.subr.mxu0 0.0
    %534 = vmatpush1.xpose.msra.mxu0 0.0
    %535 = vmatprep.subr.mxu0 0.0
    %536 = vmatpush1.xpose.msra.mxu0 0.0
    %537 = vmatprep.subr.mxu0 0.0
    %538 = vmatpush1.xpose.msra.mxu0 0.0
    %539 = vmatprep.subr.mxu0 0.0
    %540 = vmatpush1.xpose.msra.mxu0 0.0
    %541 = vmatprep.subr.mxu0 0.0
    %542 = vmatpush1.xpose.msra.mxu0 0.0
    %543 = vmatprep.subr.mxu0 0.0
    %544 = vmatpush1.xpose.msra.mxu0 0.0
    %545 = vmatprep.subr.mxu0 0.0
    %546 = vmatpush1.xpose.msra.mxu0 0.0
    %547 = vmatprep.subr.mxu0 0.0
    %548 = vmatpush1.xpose.msra.mxu0 0.0
    %549 = vmatprep.subr.mxu0 0.0
    %550 = vmatpush1.xpose.msra.mxu0 0.0
    %551 = vmatprep.subr.mxu0 0.0
    %552 = vmatpush1.xpose.msra.mxu0 0.0
    %553 = vmatprep.subr.mxu0 0.0
    %554 = vmatpush1.xpose.msra.mxu0 0.0
    %555 = vmatprep.subr.mxu0 0.0
    %556 = vmatpush1.xpose.msra.mxu0 0.0
    %557 = vmatprep.subr.mxu0 0.0
    %558 = vmatpush1.xpose.msra.mxu0 0.0
    %559 = vmatprep.subr.mxu0 0.0
    %560 = vmatpush1.xpose.msra.mxu0 0.0
    %561 = vmatprep.subr.mxu0 0.0
    %562 = vmatpush1.xpose.msra.mxu0 0.0
    %563 = vmatprep.subr.mxu0 0.0
    %564 = vmatpush1.xpose.msra.mxu0 0.0
    %565 = vmatprep.subr.mxu0 0.0
    %566 = vmatpush1.xpose.msra.mxu0 0.0
    %567 = vmatprep.subr.mxu0 0.0
    %568 = vmatpush1.xpose.msra.mxu0 0.0
    %569 = vmatprep.subr.mxu0 0.0
    %570 = vmatpush1.xpose.msra.mxu0 0.0
    %571 = vmatprep.subr.mxu0 0.0
    %572 = vmatpush1.xpose.msra.mxu0 0.0
    %573 = vmatprep.subr.mxu0 0.0
    %574 = vmatpush1.xpose.msra.mxu0 0.0
    %575 = vmatprep.subr.mxu0 0.0
    %576 = vmatpush1.xpose.msra.mxu0 0.0
    %577 = vmatprep.subr.mxu0 0.0
    %578 = vmatpush1.xpose.msra.mxu0 0.0
    %579 = vmatprep.subr.mxu0 0.0
    %580 = vmatpush1.xpose.msra.mxu0 0.0
    %581 = vmatprep.subr.mxu0 0.0
    %582 = vmatpush1.xpose.msra.mxu0 0.0
    %583 = vmatprep.subr.mxu0 0.0
    %584 = vmatpush1.xpose.msra.mxu0 0.0
    %585 = vmatprep.subr.mxu0 0.0
    %586 = vmatpush1.xpose.msra.mxu0 0.0
    %587 = vmatprep.subr.mxu0 0.0
    %588 = vmatpush1.xpose.msra.mxu0 0.0
    %589 = vmatprep.subr.mxu0 0.0
    %590 = vmatpush1.xpose.msra.mxu0 0.0
    %591 = vmatprep.mubr.f32.mxu0 0.0
    %592 = vmatmul.mubr.f32.gmra.mrb[0].mxu0 %v522
    %v593 = vpop.f32.mrb[0].mxu0
    %v594 = vadd.f32 0.0, %v593
    %v595 = vpop.f32.mrb[0].mxu0
    %596 = vdwg.mxu0
    %597 = vmatprep.subr.mxu0 0.0
    %598 = vmatpush1.xpose.msra.mxu0 %v303
    %599 = vmatprep.subr.mxu0 0.0
    %600 = vmatpush1.xpose.msra.mxu0 %v304
    %601 = vmatprep.subr.mxu0 0.0
    %602 = vmatpush1.xpose.msra.mxu0 0.0
    %603 = vmatprep.subr.mxu0 0.0
    %604 = vmatpush1.xpose.msra.mxu0 0.0
    %605 = vmatprep.subr.mxu0 0.0
    %606 = vmatpush1.xpose.msra.mxu0 0.0
    %607 = vmatprep.subr.mxu0 0.0
    %608 = vmatpush1.xpose.msra.mxu0 0.0
    %609 = vmatprep.subr.mxu0 0.0
    %610 = vmatpush1.xpose.msra.mxu0 0.0
    %611 = vmatprep.subr.mxu0 0.0
    %612 = vmatpush1.xpose.msra.mxu0 0.0
    %613 = vmatprep.subr.mxu0 0.0
    %614 = vmatpush1.xpose.msra.mxu0 0.0
    %615 = vmatprep.subr.mxu0 0.0
    %616 = vmatpush1.xpose.msra.mxu0 0.0
    %617 = vmatprep.subr.mxu0 0.0
    %618 = vmatpush1.xpose.msra.mxu0 0.0
    %619 = vmatprep.subr.mxu0 0.0
    %620 = vmatpush1.xpose.msra.mxu0 0.0
    %621 = vmatprep.subr.mxu0 0.0
    %622 = vmatpush1.xpose.msra.mxu0 0.0
    %623 = vmatprep.subr.mxu0 0.0
    %624 = vmatpush1.xpose.msra.mxu0 0.0
    %625 = vmatprep.subr.mxu0 0.0
    %626 = vmatpush1.xpose.msra.mxu0 0.0
    %627 = vmatprep.subr.mxu0 0.0
    %628 = vmatpush1.xpose.msra.mxu0 0.0
    %629 = vmatprep.subr.mxu0 0.0
    %630 = vmatpush1.xpose.msra.mxu0 0.0
    %631 = vmatprep.subr.mxu0 0.0
    %632 = vmatpush1.xpose.msra.mxu0 0.0
    %633 = vmatprep.subr.mxu0 0.0
    %634 = vmatpush1.xpose.msra.mxu0 0.0
    %635 = vmatprep.subr.mxu0 0.0
    %636 = vmatpush1.xpose.msra.mxu0 0.0
    %637 = vmatprep.subr.mxu0 0.0
    %638 = vmatpush1.xpose.msra.mxu0 0.0
    %639 = vmatprep.subr.mxu0 0.0
    %640 = vmatpush1.xpose.msra.mxu0 0.0
    %641 = vmatprep.subr.mxu0 0.0
    %642 = vmatpush1.xpose.msra.mxu0 0.0
    %643 = vmatprep.subr.mxu0 0.0
    %644 = vmatpush1.xpose.msra.mxu0 0.0
    %645 = vmatprep.subr.mxu0 0.0
    %646 = vmatpush1.xpose.msra.mxu0 0.0
    %647 = vmatprep.subr.mxu0 0.0
    %648 = vmatpush1.xpose.msra.mxu0 0.0
    %649 = vmatprep.subr.mxu0 0.0
    %650 = vmatpush1.xpose.msra.mxu0 0.0
    %651 = vmatprep.subr.mxu0 0.0
    %652 = vmatpush1.xpose.msra.mxu0 0.0
    %653 = vmatprep.subr.mxu0 0.0
    %654 = vmatpush1.xpose.msra.mxu0 0.0
    %655 = vmatprep.subr.mxu0 0.0
    %656 = vmatpush1.xpose.msra.mxu0 0.0
    %657 = vmatprep.subr.mxu0 0.0
    %658 = vmatpush1.xpose.msra.mxu0 0.0
    %659 = vmatprep.subr.mxu0 0.0
    %660 = vmatpush1.xpose.msra.mxu0 0.0
    %661 = vmatprep.mubr.f32.mxu0 0.0
    %662 = vmatmul.mubr.f32.gmra.mrb[0].mxu0 1.0
    %v663 = vpop.f32.mrb[0].mxu0
    %v664 = vadd.f32 0.0, %v663
    %v665 = vpop.f32.mrb[0].mxu0
    %666 = vdwg.mxu0
    %v667 = vmul.f32 %v594, 0.02
    %v668 = vsub.f32 1.0, %v667
    %v669 = vmul.f32 %v664, 0.01
    %v670 = vlaneseq
    %v671 = vshrl.u32 %v670, 7
    %v672 = vsub.s32 0, %v671
    %v673 = vrot.slane %v669, %v672
    %v674 = vadd.f32 %v668, %v673
    %v675 = vmul.f32 %v526, 0.01
    %v676 = vsub.f32 1.0, %v675
    %v677 = vmul.f32 %v674, %v674
    %v678 = vmul.f32 %v677, %v526
    %v679 = vmul.f32 %v676, %v676
    %v680 = vlaneseq
    %v681 = vshrl.u32 %v680, 7
    %v682 = vsub.s32 0, %v681
    %v683 = vrot.slane %v664, %v682
    %v684 = vmul.f32 %v679, %v683
    %v685 = vadd.f32 %v678, %v684
    %v686 = vmul.f32 %v674, 2.0
    %v687 = vmul.f32 %v686, %v676
    %v688 = vmul.f32 %v687, %v594
    %v689 = vsub.f32 %v685, %v688
    %v690 = vmul.f32 %v526, 0.0001
    %v691 = vmul.f32 %v690, %v683
    %v692 = vadd.f32 %v668, %v691
    %v693 = vmax.f32 %v689, 0.0
    %v694 = vrsqrt.pop %v693
    %v695 = vmul.f32 %v693, %v694
    %vm696 = vcmp.eq.f32.partialorder %v693, inf
    %v697 = vsel %vm696, %v693, %v695
    %vm698 = vcmp.eq.f32.partialorder %v693, 0.0
    %v699 = vand.u32 %v693, 2147483648
    %v700 = vsel %vm698, %v699, %v697
    %v701 = vand.u32 2147483647, %v692
    %v702 = vmax.f32 %v701, 1e-15
    %v703 = vrcp.pop %v702
    %v704 = vmul.f32 %v700, %v703
    %v705 = vmul.f32 %v704, 0.1
    %v706 = vmin.f32 %v705, 0.99999
    %v707 = vadd.f32 %v706, 1.0
    %v708 = vsub.f32 1.0, %v706
    %v709 = vrcp.pop %v708
    %v710 = vmul.f32 %v707, %v709
    %v711 = vlog2.pop %v710
    %v712 = vmul.f32 %v711, 0.6931472
    %v713 = vmul.f32 %v712, 10.0
    %vm714 = vcmask 118784
    %v715 = vsel %vm714, %v713, inf
    %v716 = vrot.slane %v715, 4
    %v717 = vmin.f32 %v715, %v716
    %v718 = vrot.slane %v717, 2
    %v719 = vmin.f32 %v717, %v718
    %v720 = vrot.slane %v719, 1
    %v721 = vmin.f32 %v719, %v720
    %v722 = vcvt.s32.f32 %v340
    %vm723 = vcmp.eq.f32.partialorder %v713, %v721
    %v724 = vsel %vm723, %v722, 5.0
    %v725 = vsel %vm714, %v724, inf
    %v726 = vrot.slane %v725, 4
    %v727 = vmin.f32 %v725, %v726
    %v728 = vrot.slane %v727, 2
    %v729 = vmin.f32 %v727, %v728
    %v730 = vrot.slane %v729, 1
    %v731 = vmin.f32 %v729, %v730
    %vm732 = vcmp.eq.f32.partialorder %v722, %v731
    %v733 = vsel %vm732, 1, 0
    %v734 = vcvt.s32.f32 %v733
    %vm735 = vcmask 121856
    %v737 = vsel %vm735, %v734, 0
    %v740 = vsel %vm236, %v336, 0
    %742 = vmatprep.subr.mxu0 0.0
    %743 = vmatpush1.msra.mxu0 %v335
    %744 = vmatprep.subr.mxu0 0.0
    %745 = vmatpush1.msra.mxu0 %v740
    %746 = vmatprep.subr.mxu0 0.0
    %747 = vmatpush1.msra.mxu0 0.0
    %748 = vmatprep.subr.mxu0 0.0
    %749 = vmatpush1.msra.mxu0 0.0
    %750 = vmatprep.subr.mxu0 0.0
    %751 = vmatpush1.msra.mxu0 0.0
    %752 = vmatprep.subr.mxu0 0.0
    %753 = vmatpush1.msra.mxu0 0.0
    %754 = vmatprep.subr.mxu0 0.0
    %755 = vmatpush1.msra.mxu0 0.0
    %756 = vmatprep.subr.mxu0 0.0
    %757 = vmatpush1.msra.mxu0 0.0
    %758 = vmatprep.subr.mxu0 0.0
    %759 = vmatpush1.msra.mxu0 0.0
    %760 = vmatprep.subr.mxu0 0.0
    %761 = vmatpush1.msra.mxu0 0.0
    %762 = vmatprep.subr.mxu0 0.0
    %763 = vmatpush1.msra.mxu0 0.0
    %764 = vmatprep.subr.mxu0 0.0
    %765 = vmatpush1.msra.mxu0 0.0
    %766 = vmatprep.subr.mxu0 0.0
    %767 = vmatpush1.msra.mxu0 0.0
    %768 = vmatprep.subr.mxu0 0.0
    %769 = vmatpush1.msra.mxu0 0.0
    %770 = vmatprep.subr.mxu0 0.0
    %771 = vmatpush1.msra.mxu0 0.0
    %772 = vmatprep.subr.mxu0 0.0
    %773 = vmatpush1.msra.mxu0 0.0
    %774 = vmatprep.subr.mxu0 0.0
    %775 = vmatpush1.msra.mxu0 0.0
    %776 = vmatprep.subr.mxu0 0.0
    %777 = vmatpush1.msra.mxu0 0.0
    %778 = vmatprep.subr.mxu0 0.0
    %779 = vmatpush1.msra.mxu0 0.0
    %780 = vmatprep.subr.mxu0 0.0
    %781 = vmatpush1.msra.mxu0 0.0
    %782 = vmatprep.subr.mxu0 0.0
    %783 = vmatpush1.msra.mxu0 0.0
    %784 = vmatprep.subr.mxu0 0.0
    %785 = vmatpush1.msra.mxu0 0.0
    %786 = vmatprep.subr.mxu0 0.0
    %787 = vmatpush1.msra.mxu0 0.0
    %788 = vmatprep.subr.mxu0 0.0
    %789 = vmatpush1.msra.mxu0 0.0
    %790 = vmatprep.subr.mxu0 0.0
    %791 = vmatpush1.msra.mxu0 0.0
    %792 = vmatprep.subr.mxu0 0.0
    %793 = vmatpush1.msra.mxu0 0.0
    %794 = vmatprep.subr.mxu0 0.0
    %795 = vmatpush1.msra.mxu0 0.0
    %796 = vmatprep.subr.mxu0 0.0
    %797 = vmatpush1.msra.mxu0 0.0
    %798 = vmatprep.subr.mxu0 0.0
    %799 = vmatpush1.msra.mxu0 0.0
    %800 = vmatprep.subr.mxu0 0.0
    %801 = vmatpush1.msra.mxu0 0.0
    %802 = vmatprep.subr.mxu0 0.0
    %803 = vmatpush1.msra.mxu0 0.0
    %804 = vmatprep.subr.mxu0 0.0
    %805 = vmatpush1.msra.mxu0 0.0
    %806 = vmatprep.mubr.f32.mxu0 0.0
    %807 = vmatmul.mubr.f32.gmra.mrb[0].mxu0 %v737
    %v808 = vpop.f32.mrb[0].mxu0
    %v809 = vadd.f32 0.0, %v808
    %v810 = vpop.f32.mrb[0].mxu0
    %811 = vdwg.mxu0
    %v812 = vadd.f32 %v422, %v809
    %v814 = vsel %vm236, %v334, 0
    %816 = vmatprep.subr.mxu0 0.0
    %817 = vmatpush1.msra.mxu0 %v333
    %818 = vmatprep.subr.mxu0 0.0
    %819 = vmatpush1.msra.mxu0 %v814
    %820 = vmatprep.subr.mxu0 0.0
    %821 = vmatpush1.msra.mxu0 0.0
    %822 = vmatprep.subr.mxu0 0.0
    %823 = vmatpush1.msra.mxu0 0.0
    %824 = vmatprep.subr.mxu0 0.0
    %825 = vmatpush1.msra.mxu0 0.0
    %826 = vmatprep.subr.mxu0 0.0
    %827 = vmatpush1.msra.mxu0 0.0
    %828 = vmatprep.subr.mxu0 0.0
    %829 = vmatpush1.msra.mxu0 0.0
    %830 = vmatprep.subr.mxu0 0.0
    %831 = vmatpush1.msra.mxu0 0.0
    %832 = vmatprep.subr.mxu0 0.0
    %833 = vmatpush1.msra.mxu0 0.0
    %834 = vmatprep.subr.mxu0 0.0
    %835 = vmatpush1.msra.mxu0 0.0
    %836 = vmatprep.subr.mxu0 0.0
    %837 = vmatpush1.msra.mxu0 0.0
    %838 = vmatprep.subr.mxu0 0.0
    %839 = vmatpush1.msra.mxu0 0.0
    %840 = vmatprep.subr.mxu0 0.0
    %841 = vmatpush1.msra.mxu0 0.0
    %842 = vmatprep.subr.mxu0 0.0
    %843 = vmatpush1.msra.mxu0 0.0
    %844 = vmatprep.subr.mxu0 0.0
    %845 = vmatpush1.msra.mxu0 0.0
    %846 = vmatprep.subr.mxu0 0.0
    %847 = vmatpush1.msra.mxu0 0.0
    %848 = vmatprep.subr.mxu0 0.0
    %849 = vmatpush1.msra.mxu0 0.0
    %850 = vmatprep.subr.mxu0 0.0
    %851 = vmatpush1.msra.mxu0 0.0
    %852 = vmatprep.subr.mxu0 0.0
    %853 = vmatpush1.msra.mxu0 0.0
    %854 = vmatprep.subr.mxu0 0.0
    %855 = vmatpush1.msra.mxu0 0.0
    %856 = vmatprep.subr.mxu0 0.0
    %857 = vmatpush1.msra.mxu0 0.0
    %858 = vmatprep.subr.mxu0 0.0
    %859 = vmatpush1.msra.mxu0 0.0
    %860 = vmatprep.subr.mxu0 0.0
    %861 = vmatpush1.msra.mxu0 0.0
    %862 = vmatprep.subr.mxu0 0.0
    %863 = vmatpush1.msra.mxu0 0.0
    %864 = vmatprep.subr.mxu0 0.0
    %865 = vmatpush1.msra.mxu0 0.0
    %866 = vmatprep.subr.mxu0 0.0
    %867 = vmatpush1.msra.mxu0 0.0
    %868 = vmatprep.subr.mxu0 0.0
    %869 = vmatpush1.msra.mxu0 0.0
    %870 = vmatprep.subr.mxu0 0.0
    %871 = vmatpush1.msra.mxu0 0.0
    %872 = vmatprep.subr.mxu0 0.0
    %873 = vmatpush1.msra.mxu0 0.0
    %874 = vmatprep.subr.mxu0 0.0
    %875 = vmatpush1.msra.mxu0 0.0
    %876 = vmatprep.subr.mxu0 0.0
    %877 = vmatpush1.msra.mxu0 0.0
    %878 = vmatprep.subr.mxu0 0.0
    %879 = vmatpush1.msra.mxu0 0.0
    %880 = vmatprep.mubr.f32.mxu0 0.0
    %881 = vmatmul.mubr.f32.gmra.mrb[0].mxu0 %v737
    %v882 = vpop.f32.mrb[0].mxu0
    %v883 = vadd.f32 0.0, %v882
    %v884 = vpop.f32.mrb[0].mxu0
    %885 = vdwg.mxu0
    %v886 = vadd.f32 %v495, %v883
    %v887 = vrcp.pop %v886
    %889 = vset.pattern.permute.xlu0 0
    %890 = vperm.xlu0 %889, %v887
    %v891 = vpop.permute.xlu0 %890
    %v893 = vmul.f32 %v812, %v891
    %v894 = vmul.f32 %v893, %v893
    %v895 = vsel %vm506, %v894, 0.0
    %896 = vadd.xlane.f32.xlu0 %v895
    %v897 = vpop.xlane.xlu0 %896
    %v898 = vmul.f32 %v897, 0.01
    %v899 = vsub.f32 1.0, %v898
    %v900 = vmax.f32 %v899, 0.0
    %v901 = vrsqrt.pop %v900
    %v902 = vmul.f32 %v900, %v901
    %vm903 = vcmp.eq.f32.partialorder %v900, inf
    %v904 = vsel %vm903, %v900, %v902
    %vm905 = vcmp.eq.f32.partialorder %v900, 0.0
    %v906 = vand.u32 %v900, 2147483648
    %v907 = vsel %vm905, %v906, %v904
    %v908 = vadd.f32 %v907, 1.0
    %v909 = vrcp.pop %v908
    %v910 = vmul.f32 %v893, %v909
    %v911 = vsel %vm714, %v734, 0.0
    %912 = vadd.xlane.f32.xlu0 %v911
    %v913 = vpop.xlane.xlu0 %912
    %v914 = vadd.f32 %v913, 5.0
    %v916 = vsel %vm236, %v25, 0
    %918 = vmatprep.subr.mxu0 0.0
    %919 = vmatpush1.msra.mxu0 %v24
    %920 = vmatprep.subr.mxu0 0.0
    %921 = vmatpush1.msra.mxu0 %v916
    %922 = vmatprep.subr.mxu0 0.0
    %923 = vmatpush1.msra.mxu0 0.0
    %924 = vmatprep.subr.mxu0 0.0
    %925 = vmatpush1.msra.mxu0 0.0
    %926 = vmatprep.subr.mxu0 0.0
    %927 = vmatpush1.msra.mxu0 0.0
    %928 = vmatprep.subr.mxu0 0.0
    %929 = vmatpush1.msra.mxu0 0.0
    %930 = vmatprep.subr.mxu0 0.0
    %931 = vmatpush1.msra.mxu0 0.0
    %932 = vmatprep.subr.mxu0 0.0
    %933 = vmatpush1.msra.mxu0 0.0
    %934 = vmatprep.subr.mxu0 0.0
    %935 = vmatpush1.msra.mxu0 0.0
    %936 = vmatprep.subr.mxu0 0.0
    %937 = vmatpush1.msra.mxu0 0.0
    %938 = vmatprep.subr.mxu0 0.0
    %939 = vmatpush1.msra.mxu0 0.0
    %940 = vmatprep.subr.mxu0 0.0
    %941 = vmatpush1.msra.mxu0 0.0
    %942 = vmatprep.subr.mxu0 0.0
    %943 = vmatpush1.msra.mxu0 0.0
    %944 = vmatprep.subr.mxu0 0.0
    %945 = vmatpush1.msra.mxu0 0.0
    %946 = vmatprep.subr.mxu0 0.0
    %947 = vmatpush1.msra.mxu0 0.0
    %948 = vmatprep.subr.mxu0 0.0
    %949 = vmatpush1.msra.mxu0 0.0
    %950 = vmatprep.subr.mxu0 0.0
    %951 = vmatpush1.msra.mxu0 0.0
    %952 = vmatprep.subr.mxu0 0.0
    %953 = vmatpush1.msra.mxu0 0.0
    %954 = vmatprep.subr.mxu0 0.0
    %955 = vmatpush1.msra.mxu0 0.0
    %956 = vmatprep.subr.mxu0 0.0
    %957 = vmatpush1.msra.mxu0 0.0
    %958 = vmatprep.subr.mxu0 0.0
    %959 = vmatpush1.msra.mxu0 0.0
    %960 = vmatprep.subr.mxu0 0.0
    %961 = vmatpush1.msra.mxu0 0.0
    %962 = vmatprep.subr.mxu0 0.0
    %963 = vmatpush1.msra.mxu0 0.0
    %964 = vmatprep.subr.mxu0 0.0
    %965 = vmatpush1.msra.mxu0 0.0
    %966 = vmatprep.subr.mxu0 0.0
    %967 = vmatpush1.msra.mxu0 0.0
    %968 = vmatprep.subr.mxu0 0.0
    %969 = vmatpush1.msra.mxu0 0.0
    %970 = vmatprep.subr.mxu0 0.0
    %971 = vmatpush1.msra.mxu0 0.0
    %972 = vmatprep.subr.mxu0 0.0
    %973 = vmatpush1.msra.mxu0 0.0
    %974 = vmatprep.subr.mxu0 0.0
    %975 = vmatpush1.msra.mxu0 0.0
    %976 = vmatprep.subr.mxu0 0.0
    %977 = vmatpush1.msra.mxu0 0.0
    %978 = vmatprep.subr.mxu0 0.0
    %979 = vmatpush1.msra.mxu0 0.0
    %980 = vmatprep.subr.mxu0 0.0
    %981 = vmatpush1.msra.mxu0 0.0
    %982 = vmatprep.mubr.f32.mxu0 0.0
    %983 = vmatmul.mubr.f32.gmra.mrb[0].mxu0 %v737
    %v984 = vpop.f32.mrb[0].mxu0
    %v985 = vadd.f32 0.0, %v984
    %v986 = vpop.f32.mrb[0].mxu0
    %987 = vdwg.mxu0
    %v989 = vsel %vm37, %v23, 0
    %991 = vmatprep.subr.mxu0 0.0
    %992 = vmatpush1.msra.mxu0 %v20
    %993 = vmatprep.subr.mxu0 0.0
    %994 = vmatpush1.msra.mxu0 %v21
    %995 = vmatprep.subr.mxu0 0.0
    %996 = vmatpush1.msra.mxu0 %v22
    %997 = vmatprep.subr.mxu0 0.0
    %998 = vmatpush1.msra.mxu0 %v989
    %999 = vmatprep.subr.mxu0 0.0
    %1000 = vmatpush1.msra.mxu0 0.0
    %1001 = vmatprep.subr.mxu0 0.0
    %1002 = vmatpush1.msra.mxu0 0.0
    %1003 = vmatprep.subr.mxu0 0.0
    %1004 = vmatpush1.msra.mxu0 0.0
    %1005 = vmatprep.subr.mxu0 0.0
    %1006 = vmatpush1.msra.mxu0 0.0
    %1007 = vmatprep.subr.mxu0 0.0
    %1008 = vmatpush1.msra.mxu0 0.0
    %1009 = vmatprep.subr.mxu0 0.0
    %1010 = vmatpush1.msra.mxu0 0.0
    %1011 = vmatprep.subr.mxu0 0.0
    %1012 = vmatpush1.msra.mxu0 0.0
    %1013 = vmatprep.subr.mxu0 0.0
    %1014 = vmatpush1.msra.mxu0 0.0
    %1015 = vmatprep.subr.mxu0 0.0
    %1016 = vmatpush1.msra.mxu0 0.0
    %1017 = vmatprep.subr.mxu0 0.0
    %1018 = vmatpush1.msra.mxu0 0.0
    %1019 = vmatprep.subr.mxu0 0.0
    %1020 = vmatpush1.msra.mxu0 0.0
    %1021 = vmatprep.subr.mxu0 0.0
    %1022 = vmatpush1.msra.mxu0 0.0
    %1023 = vmatprep.subr.mxu0 0.0
    %1024 = vmatpush1.msra.mxu0 0.0
    %1025 = vmatprep.subr.mxu0 0.0
    %1026 = vmatpush1.msra.mxu0 0.0
    %1027 = vmatprep.subr.mxu0 0.0
    %1028 = vmatpush1.msra.mxu0 0.0
    %1029 = vmatprep.subr.mxu0 0.0
    %1030 = vmatpush1.msra.mxu0 0.0
    %1031 = vmatprep.subr.mxu0 0.0
    %1032 = vmatpush1.msra.mxu0 0.0
    %1033 = vmatprep.subr.mxu0 0.0
    %1034 = vmatpush1.msra.mxu0 0.0
    %1035 = vmatprep.subr.mxu0 0.0
    %1036 = vmatpush1.msra.mxu0 0.0
    %1037 = vmatprep.subr.mxu0 0.0
    %1038 = vmatpush1.msra.mxu0 0.0
    %1039 = vmatprep.subr.mxu0 0.0
    %1040 = vmatpush1.msra.mxu0 0.0
    %1041 = vmatprep.subr.mxu0 0.0
    %1042 = vmatpush1.msra.mxu0 0.0
    %1043 = vmatprep.subr.mxu0 0.0
    %1044 = vmatpush1.msra.mxu0 0.0
    %1045 = vmatprep.subr.mxu0 0.0
    %1046 = vmatpush1.msra.mxu0 0.0
    %1047 = vmatprep.subr.mxu0 0.0
    %1048 = vmatpush1.msra.mxu0 0.0
    %1049 = vmatprep.subr.mxu0 0.0
    %1050 = vmatpush1.msra.mxu0 0.0
    %1051 = vmatprep.subr.mxu0 0.0
    %1052 = vmatpush1.msra.mxu0 0.0
    %1053 = vmatprep.subr.mxu0 0.0
    %1054 = vmatpush1.msra.mxu0 0.0
    %1055 = vmatprep.mubr.f32.mxu0 0.0
    %1056 = vmatmul.mubr.f32.gmra.mrb[0].mxu0 %v350
    %v1057 = vpop.f32.mrb[0].mxu0
    %v1058 = vadd.f32 %v985, %v1057
    %v1059 = vpop.f32.mrb[0].mxu0
    %1060 = vdwg.mxu0
    %v1062 = vsel %vm236, %v233, 0
    %1064 = vmatprep.subr.mxu0 0.0
    %1065 = vmatpush1.msra.mxu0 %v232
    %1066 = vmatprep.subr.mxu0 0.0
    %1067 = vmatpush1.msra.mxu0 %v1062
    %1068 = vmatprep.subr.mxu0 0.0
    %1069 = vmatpush1.msra.mxu0 0.0
    %1070 = vmatprep.subr.mxu0 0.0
    %1071 = vmatpush1.msra.mxu0 0.0
    %1072 = vmatprep.subr.mxu0 0.0
    %1073 = vmatpush1.msra.mxu0 0.0
    %1074 = vmatprep.subr.mxu0 0.0
    %1075 = vmatpush1.msra.mxu0 0.0
    %1076 = vmatprep.subr.mxu0 0.0
    %1077 = vmatpush1.msra.mxu0 0.0
    %1078 = vmatprep.subr.mxu0 0.0
    %1079 = vmatpush1.msra.mxu0 0.0
    %1080 = vmatprep.subr.mxu0 0.0
    %1081 = vmatpush1.msra.mxu0 0.0
    %1082 = vmatprep.subr.mxu0 0.0
    %1083 = vmatpush1.msra.mxu0 0.0
    %1084 = vmatprep.subr.mxu0 0.0
    %1085 = vmatpush1.msra.mxu0 0.0
    %1086 = vmatprep.subr.mxu0 0.0
    %1087 = vmatpush1.msra.mxu0 0.0
    %1088 = vmatprep.subr.mxu0 0.0
    %1089 = vmatpush1.msra.mxu0 0.0
    %1090 = vmatprep.subr.mxu0 0.0
    %1091 = vmatpush1.msra.mxu0 0.0
    %1092 = vmatprep.subr.mxu0 0.0
    %1093 = vmatpush1.msra.mxu0 0.0
    %1094 = vmatprep.subr.mxu0 0.0
    %1095 = vmatpush1.msra.mxu0 0.0
    %1096 = vmatprep.subr.mxu0 0.0
    %1097 = vmatpush1.msra.mxu0 0.0
    %1098 = vmatprep.subr.mxu0 0.0
    %1099 = vmatpush1.msra.mxu0 0.0
    %1100 = vmatprep.subr.mxu0 0.0
    %1101 = vmatpush1.msra.mxu0 0.0
    %1102 = vmatprep.subr.mxu0 0.0
    %1103 = vmatpush1.msra.mxu0 0.0
    %1104 = vmatprep.subr.mxu0 0.0
    %1105 = vmatpush1.msra.mxu0 0.0
    %1106 = vmatprep.subr.mxu0 0.0
    %1107 = vmatpush1.msra.mxu0 0.0
    %1108 = vmatprep.subr.mxu0 0.0
    %1109 = vmatpush1.msra.mxu0 0.0
    %1110 = vmatprep.subr.mxu0 0.0
    %1111 = vmatpush1.msra.mxu0 0.0
    %1112 = vmatprep.subr.mxu0 0.0
    %1113 = vmatpush1.msra.mxu0 0.0
    %1114 = vmatprep.subr.mxu0 0.0
    %1115 = vmatpush1.msra.mxu0 0.0
    %1116 = vmatprep.subr.mxu0 0.0
    %1117 = vmatpush1.msra.mxu0 0.0
    %1118 = vmatprep.subr.mxu0 0.0
    %1119 = vmatpush1.msra.mxu0 0.0
    %1120 = vmatprep.subr.mxu0 0.0
    %1121 = vmatpush1.msra.mxu0 0.0
    %1122 = vmatprep.subr.mxu0 0.0
    %1123 = vmatpush1.msra.mxu0 0.0
    %1124 = vmatprep.subr.mxu0 0.0
    %1125 = vmatpush1.msra.mxu0 0.0
    %1126 = vmatprep.subr.mxu0 0.0
    %1127 = vmatpush1.msra.mxu0 0.0
    %1128 = vmatprep.mubr.f32.mxu0 0.0
    %1129 = vmatmul.mubr.f32.gmra.mrb[0].mxu0 %v737
    %v1130 = vpop.f32.mrb[0].mxu0
    %v1131 = vadd.f32 0.0, %v1130
    %v1132 = vpop.f32.mrb[0].mxu0
    %1133 = vdwg.mxu0
    %v1135 = vsel %vm37, %v30, 0
    %1137 = vmatprep.subr.mxu0 0.0
    %1138 = vmatpush1.msra.mxu0 %v27
    %1139 = vmatprep.subr.mxu0 0.0
    %1140 = vmatpush1.msra.mxu0 %v28
    %1141 = vmatprep.subr.mxu0 0.0
    %1142 = vmatpush1.msra.mxu0 %v29
    %1143 = vmatprep.subr.mxu0 0.0
    %1144 = vmatpush1.msra.mxu0 %v1135
    %1145 = vmatprep.subr.mxu0 0.0
    %1146 = vmatpush1.msra.mxu0 0.0
    %1147 = vmatprep.subr.mxu0 0.0
    %1148 = vmatpush1.msra.mxu0 0.0
    %1149 = vmatprep.subr.mxu0 0.0
    %1150 = vmatpush1.msra.mxu0 0.0
    %1151 = vmatprep.subr.mxu0 0.0
    %1152 = vmatpush1.msra.mxu0 0.0
    %1153 = vmatprep.subr.mxu0 0.0
    %1154 = vmatpush1.msra.mxu0 0.0
    %1155 = vmatprep.subr.mxu0 0.0
    %1156 = vmatpush1.msra.mxu0 0.0
    %1157 = vmatprep.subr.mxu0 0.0
    %1158 = vmatpush1.msra.mxu0 0.0
    %1159 = vmatprep.subr.mxu0 0.0
    %1160 = vmatpush1.msra.mxu0 0.0
    %1161 = vmatprep.subr.mxu0 0.0
    %1162 = vmatpush1.msra.mxu0 0.0
    %1163 = vmatprep.subr.mxu0 0.0
    %1164 = vmatpush1.msra.mxu0 0.0
    %1165 = vmatprep.subr.mxu0 0.0
    %1166 = vmatpush1.msra.mxu0 0.0
    %1167 = vmatprep.subr.mxu0 0.0
    %1168 = vmatpush1.msra.mxu0 0.0
    %1169 = vmatprep.subr.mxu0 0.0
    %1170 = vmatpush1.msra.mxu0 0.0
    %1171 = vmatprep.subr.mxu0 0.0
    %1172 = vmatpush1.msra.mxu0 0.0
    %1173 = vmatprep.subr.mxu0 0.0
    %1174 = vmatpush1.msra.mxu0 0.0
    %1175 = vmatprep.subr.mxu0 0.0
    %1176 = vmatpush1.msra.mxu0 0.0
    %1177 = vmatprep.subr.mxu0 0.0
    %1178 = vmatpush1.msra.mxu0 0.0
    %1179 = vmatprep.subr.mxu0 0.0
    %1180 = vmatpush1.msra.mxu0 0.0
    %1181 = vmatprep.subr.mxu0 0.0
    %1182 = vmatpush1.msra.mxu0 0.0
    %1183 = vmatprep.subr.mxu0 0.0
    %1184 = vmatpush1.msra.mxu0 0.0
    %1185 = vmatprep.subr.mxu0 0.0
    %1186 = vmatpush1.msra.mxu0 0.0
    %1187 = vmatprep.subr.mxu0 0.0
    %1188 = vmatpush1.msra.mxu0 0.0
    %1189 = vmatprep.subr.mxu0 0.0
    %1190 = vmatpush1.msra.mxu0 0.0
    %1191 = vmatprep.subr.mxu0 0.0
    %1192 = vmatpush1.msra.mxu0 0.0
    %1193 = vmatprep.subr.mxu0 0.0
    %1194 = vmatpush1.msra.mxu0 0.0
    %1195 = vmatprep.subr.mxu0 0.0
    %1196 = vmatpush1.msra.mxu0 0.0
    %1197 = vmatprep.subr.mxu0 0.0
    %1198 = vmatpush1.msra.mxu0 0.0
    %1199 = vmatprep.subr.mxu0 0.0
    %1200 = vmatpush1.msra.mxu0 0.0
    %1201 = vmatprep.mubr.f32.mxu0 0.0
    %1202 = vmatmul.mubr.f32.gmra.mrb[0].mxu0 %v350
    %v1203 = vpop.f32.mrb[0].mxu0
    %v1204 = vadd.f32 %v1131, %v1203
    %v1205 = vpop.f32.mrb[0].mxu0
    %1206 = vdwg.mxu0
    %v1207 = vrcp.pop %v914
    %v1208 = vmul.f32 %v1058, %v1207
    %v1209 = vmul.f32 %v1058, %v1208
    %v1210 = vsub.f32 %v1204, %v1209
    %v1211 = vmax.f32 %v1210, 0.0
    %v1212 = vsub.f32 %v914, 1.0
    %v1213 = vmax.f32 %v1212, 1.0
    %v1214 = vrcp.pop %v1213
    %v1215 = vmul.f32 %v1211, %v1214
    %v1216 = vrsqrt.pop %v1215
    %v1217 = vmul.f32 %v1215, %v1216
    %vm1218 = vcmp.eq.f32.partialorder %v1215, inf
    %v1219 = vsel %vm1218, %v1215, %v1217
    %vm1220 = vcmp.eq.f32.partialorder %v1215, 0.0
    %v1221 = vand.u32 %v1215, 2147483648
    %v1222 = vsel %vm1220, %v1221, %v1219
    %v1223 = vmul.f32 %v910, %v910
    %v1224 = vsel %vm506, %v1223, 0.0
    %1225 = vadd.xlane.f32.xlu0 %v1224
    %v1226 = vpop.xlane.xlu0 %1225
    %v1227 = vmul.f32 %v1226, 0.01
    %v1228 = vsub.f32 1.0, %v1227
    %v1229 = vmax.f32 %v1228, 1e-15
    %v1230 = vrcp.pop %v1229
    %v1231 = vmul.f32 %v1230, 2.0
    %v1232 = vld [vmem:[%s2] sm:$0x1f]
    %v1233 = vld [vmem:[%s2 + $0x8] sm:$0x1f]
    %v1234 = vld [vmem:[%s2 + $0x10] sm:$0x1f]
    %v1235 = vld [vmem:[%s2 + $0x18] sm:$0x1f]
    %v1236 = vld [vmem:[%s2 + $0x20] sm:$0x1f]
    %v1237 = vld [vmem:[%s2 + $0x28] sm:$0x1f]
    %v1238 = vld [vmem:[%s2 + $0x30] sm:$0x1f]
    %v1239 = vld [vmem:[%s2 + $0x38] sm:$0x1f]
    %v1240 = vld [vmem:[%s2 + $0x40] sm:$0x1f]
    %v1241 = vld [vmem:[%s2 + $0x48] sm:$0x1f]
    %v1242 = vld [vmem:[%s2 + $0x50] sm:$0x1f]
    %v1243 = vld [vmem:[%s2 + $0x58] sm:$0x1f]
    %v1244 = vld [vmem:[%s2 + $0x60] sm:$0x1f]
    %v1245 = vld [vmem:[%s2 + $0x68] sm:$0x1f]
    %v1246 = vld [vmem:[%s2 + $0x70] sm:$0x1f]
    %v1247 = vld [vmem:[%s2 + $0x78] sm:$0x1f]
    %v1248 = vld [vmem:[%s2 + $0x80] sm:$0x1f]
    %v1249 = vld [vmem:[%s2 + $0x88] sm:$0x1f]
    %v1250 = vld [vmem:[%s2 + $0x90] sm:$0x1f]
    %v1251 = vld [vmem:[%s2 + $0x98] sm:$0x1f]
    %v1252 = vld [vmem:[%s2 + $0xa0] sm:$0x1f]
    %v1253 = vld [vmem:[%s2 + $0xa8] sm:$0x1f]
    %v1254 = vld [vmem:[%s2 + $0xb0] sm:$0x1f]
    %v1255 = vld [vmem:[%s2 + $0xb8] sm:$0x1f]
    %v1256 = vld [vmem:[%s2 + $0xc0] sm:$0x1f]
    %v1257 = vld [vmem:[%s2 + $0xc8] sm:$0x1f]
    %v1258 = vld [vmem:[%s2 + $0xd0] sm:$0x1f]
    %v1259 = vld [vmem:[%s2 + $0xd8] sm:$0x1f]
    %v1260 = vld [vmem:[%s2 + $0xe0] sm:$0x1f]
    %v1261 = vld [vmem:[%s2 + $0xe8] sm:$0x1f]
    %v1262 = vld [vmem:[%s2 + $0xf0] sm:$0x1f]
    %v1263 = vld [vmem:[%s2 + $0xf8] sm:$0x1f]
    %v1264 = vld [vmem:[%s2 + $0x100] sm:$0x1f]
    %v1265 = vld [vmem:[%s2 + $0x108] sm:$0x1f]
    %v1266 = vld [vmem:[%s2 + $0x110] sm:$0x1f]
    %v1267 = vld [vmem:[%s2 + $0x118] sm:$0x1f]
    %v1268 = vld [vmem:[%s2 + $0x120] sm:$0x1f]
    %v1269 = vld [vmem:[%s2 + $0x128] sm:$0x1f]
    %v1270 = vld [vmem:[%s2 + $0x130] sm:$0x1f]
    %v1271 = vld [vmem:[%s2 + $0x138] sm:$0x1f]
    %v1272 = vmul.f32 %v1232, %v1222
    %v1273 = vmul.f32 %v1233, %v1222
    %v1274 = vmul.f32 %v1234, %v1222
    %v1275 = vmul.f32 %v1235, %v1222
    %v1276 = vmul.f32 %v1236, %v1222
    %v1277 = vmul.f32 %v1237, %v1222
    %v1278 = vmul.f32 %v1238, %v1222
    %v1279 = vmul.f32 %v1239, %v1222
    %v1280 = vmul.f32 %v1240, %v1222
    %v1281 = vmul.f32 %v1241, %v1222
    %v1282 = vmul.f32 %v1242, %v1222
    %v1283 = vmul.f32 %v1243, %v1222
    %v1284 = vmul.f32 %v1244, %v1222
    %v1285 = vmul.f32 %v1245, %v1222
    %v1286 = vmul.f32 %v1246, %v1222
    %v1287 = vmul.f32 %v1247, %v1222
    %v1288 = vmul.f32 %v1248, %v1222
    %v1289 = vmul.f32 %v1249, %v1222
    %v1290 = vmul.f32 %v1250, %v1222
    %v1291 = vmul.f32 %v1251, %v1222
    %v1292 = vmul.f32 %v1252, %v1222
    %v1293 = vmul.f32 %v1253, %v1222
    %v1294 = vmul.f32 %v1254, %v1222
    %v1295 = vmul.f32 %v1255, %v1222
    %v1296 = vmul.f32 %v1256, %v1222
    %v1297 = vmul.f32 %v1257, %v1222
    %v1298 = vmul.f32 %v1258, %v1222
    %v1299 = vmul.f32 %v1259, %v1222
    %v1300 = vmul.f32 %v1260, %v1222
    %v1301 = vmul.f32 %v1261, %v1222
    %v1302 = vmul.f32 %v1262, %v1222
    %v1303 = vmul.f32 %v1263, %v1222
    %v1304 = vmul.f32 %v1264, %v1222
    %v1305 = vmul.f32 %v1265, %v1222
    %v1306 = vmul.f32 %v1266, %v1222
    %v1307 = vmul.f32 %v1267, %v1222
    %v1308 = vmul.f32 %v1268, %v1222
    %v1309 = vmul.f32 %v1269, %v1222
    %v1310 = vmul.f32 %v1270, %v1222
    %v1311 = vmul.f32 %v1271, %v1222
    %v1312 = vmul.f32 %v1272, %v1229
    %v1313 = vmul.f32 %v1273, %v1229
    %v1314 = vmul.f32 %v1274, %v1229
    %v1315 = vmul.f32 %v1275, %v1229
    %v1316 = vmul.f32 %v1276, %v1229
    %v1317 = vmul.f32 %v1277, %v1229
    %v1318 = vmul.f32 %v1278, %v1229
    %v1319 = vmul.f32 %v1279, %v1229
    %v1320 = vmul.f32 %v1280, %v1229
    %v1321 = vmul.f32 %v1281, %v1229
    %v1322 = vmul.f32 %v1282, %v1229
    %v1323 = vmul.f32 %v1283, %v1229
    %v1324 = vmul.f32 %v1284, %v1229
    %v1325 = vmul.f32 %v1285, %v1229
    %v1326 = vmul.f32 %v1286, %v1229
    %v1327 = vmul.f32 %v1287, %v1229
    %v1328 = vmul.f32 %v1288, %v1229
    %v1329 = vmul.f32 %v1289, %v1229
    %v1330 = vmul.f32 %v1290, %v1229
    %v1331 = vmul.f32 %v1291, %v1229
    %v1332 = vmul.f32 %v1292, %v1229
    %v1333 = vmul.f32 %v1293, %v1229
    %v1334 = vmul.f32 %v1294, %v1229
    %v1335 = vmul.f32 %v1295, %v1229
    %v1336 = vmul.f32 %v1296, %v1229
    %v1337 = vmul.f32 %v1297, %v1229
    %v1338 = vmul.f32 %v1298, %v1229
    %v1339 = vmul.f32 %v1299, %v1229
    %v1340 = vmul.f32 %v1300, %v1229
    %v1341 = vmul.f32 %v1301, %v1229
    %v1342 = vmul.f32 %v1302, %v1229
    %v1343 = vmul.f32 %v1303, %v1229
    %v1344 = vmul.f32 %v1304, %v1229
    %v1345 = vmul.f32 %v1305, %v1229
    %v1346 = vmul.f32 %v1306, %v1229
    %v1347 = vmul.f32 %v1307, %v1229
    %v1348 = vmul.f32 %v1308, %v1229
    %v1349 = vmul.f32 %v1309, %v1229
    %v1350 = vmul.f32 %v1310, %v1229
    %v1351 = vmul.f32 %v1311, %v1229
    %v1352 = vmul.f32 %v1312, %v1312
    %v1353 = vmul.f32 %v1313, %v1313
    %v1354 = vmul.f32 %v1314, %v1314
    %v1355 = vmul.f32 %v1315, %v1315
    %v1356 = vmul.f32 %v1316, %v1316
    %v1357 = vmul.f32 %v1317, %v1317
    %v1358 = vmul.f32 %v1318, %v1318
    %v1359 = vmul.f32 %v1319, %v1319
    %v1360 = vmul.f32 %v1320, %v1320
    %v1361 = vmul.f32 %v1321, %v1321
    %v1362 = vmul.f32 %v1322, %v1322
    %v1363 = vmul.f32 %v1323, %v1323
    %v1364 = vmul.f32 %v1324, %v1324
    %v1365 = vmul.f32 %v1325, %v1325
    %v1366 = vmul.f32 %v1326, %v1326
    %v1367 = vmul.f32 %v1327, %v1327
    %v1368 = vmul.f32 %v1328, %v1328
    %v1369 = vmul.f32 %v1329, %v1329
    %v1370 = vmul.f32 %v1330, %v1330
    %v1371 = vmul.f32 %v1331, %v1331
    %v1372 = vmul.f32 %v1332, %v1332
    %v1373 = vmul.f32 %v1333, %v1333
    %v1374 = vmul.f32 %v1334, %v1334
    %v1375 = vmul.f32 %v1335, %v1335
    %v1376 = vmul.f32 %v1336, %v1336
    %v1377 = vmul.f32 %v1337, %v1337
    %v1378 = vmul.f32 %v1338, %v1338
    %v1379 = vmul.f32 %v1339, %v1339
    %v1380 = vmul.f32 %v1340, %v1340
    %v1381 = vmul.f32 %v1341, %v1341
    %v1382 = vmul.f32 %v1342, %v1342
    %v1383 = vmul.f32 %v1343, %v1343
    %v1384 = vmul.f32 %v1344, %v1344
    %v1385 = vmul.f32 %v1345, %v1345
    %v1386 = vmul.f32 %v1346, %v1346
    %v1387 = vmul.f32 %v1347, %v1347
    %v1388 = vmul.f32 %v1348, %v1348
    %v1389 = vmul.f32 %v1349, %v1349
    %v1390 = vmul.f32 %v1350, %v1350
    %v1391 = vmul.f32 %v1351, %v1351
    %v1392 = vsel %vm506, %v1352, 0.0
    %1393 = vadd.xlane.f32.xlu0 %v1392
    %v1394 = vpop.xlane.xlu0 %1393
    %v1395 = vsel %vm506, %v1353, 0.0
    %1396 = vadd.xlane.f32.xlu0 %v1395
    %v1397 = vpop.xlane.xlu0 %1396
    %v1398 = vsel %vm506, %v1354, 0.0
    %1399 = vadd.xlane.f32.xlu0 %v1398
    %v1400 = vpop.xlane.xlu0 %1399
    %v1401 = vsel %vm506, %v1355, 0.0
    %1402 = vadd.xlane.f32.xlu0 %v1401
    %v1403 = vpop.xlane.xlu0 %1402
    %v1404 = vsel %vm506, %v1356, 0.0
    %1405 = vadd.xlane.f32.xlu0 %v1404
    %v1406 = vpop.xlane.xlu0 %1405
    %v1407 = vsel %vm506, %v1357, 0.0
    %1408 = vadd.xlane.f32.xlu0 %v1407
    %v1409 = vpop.xlane.xlu0 %1408
    %v1410 = vsel %vm506, %v1358, 0.0
    %1411 = vadd.xlane.f32.xlu0 %v1410
    %v1412 = vpop.xlane.xlu0 %1411
    %v1413 = vsel %vm506, %v1359, 0.0
    %1414 = vadd.xlane.f32.xlu0 %v1413
    %v1415 = vpop.xlane.xlu0 %1414
    %v1416 = vsel %vm506, %v1360, 0.0
    %1417 = vadd.xlane.f32.xlu0 %v1416
    %v1418 = vpop.xlane.xlu0 %1417
    %v1419 = vsel %vm506, %v1361, 0.0
    %1420 = vadd.xlane.f32.xlu0 %v1419
    %v1421 = vpop.xlane.xlu0 %1420
    %v1422 = vsel %vm506, %v1362, 0.0
    %1423 = vadd.xlane.f32.xlu0 %v1422
    %v1424 = vpop.xlane.xlu0 %1423
    %v1425 = vsel %vm506, %v1363, 0.0
    %1426 = vadd.xlane.f32.xlu0 %v1425
    %v1427 = vpop.xlane.xlu0 %1426
    %v1428 = vsel %vm506, %v1364, 0.0
    %1429 = vadd.xlane.f32.xlu0 %v1428
    %v1430 = vpop.xlane.xlu0 %1429
    %v1431 = vsel %vm506, %v1365, 0.0
    %1432 = vadd.xlane.f32.xlu0 %v1431
    %v1433 = vpop.xlane.xlu0 %1432
    %v1434 = vsel %vm506, %v1366, 0.0
    %1435 = vadd.xlane.f32.xlu0 %v1434
    %v1436 = vpop.xlane.xlu0 %1435
    %v1437 = vsel %vm506, %v1367, 0.0
    %1438 = vadd.xlane.f32.xlu0 %v1437
    %v1439 = vpop.xlane.xlu0 %1438
    %v1440 = vsel %vm506, %v1368, 0.0
    %1441 = vadd.xlane.f32.xlu0 %v1440
    %v1442 = vpop.xlane.xlu0 %1441
    %v1443 = vsel %vm506, %v1369, 0.0
    %1444 = vadd.xlane.f32.xlu0 %v1443
    %v1445 = vpop.xlane.xlu0 %1444
    %v1446 = vsel %vm506, %v1370, 0.0
    %1447 = vadd.xlane.f32.xlu0 %v1446
    %v1448 = vpop.xlane.xlu0 %1447
    %v1449 = vsel %vm506, %v1371, 0.0
    %1450 = vadd.xlane.f32.xlu0 %v1449
    %v1451 = vpop.xlane.xlu0 %1450
    %v1452 = vsel %vm506, %v1372, 0.0
    %1453 = vadd.xlane.f32.xlu0 %v1452
    %v1454 = vpop.xlane.xlu0 %1453
    %v1455 = vsel %vm506, %v1373, 0.0
    %1456 = vadd.xlane.f32.xlu0 %v1455
    %v1457 = vpop.xlane.xlu0 %1456
    %v1458 = vsel %vm506, %v1374, 0.0
    %1459 = vadd.xlane.f32.xlu0 %v1458
    %v1460 = vpop.xlane.xlu0 %1459
    %v1461 = vsel %vm506, %v1375, 0.0
    %1462 = vadd.xlane.f32.xlu0 %v1461
    %v1463 = vpop.xlane.xlu0 %1462
    %v1464 = vsel %vm506, %v1376, 0.0
    %1465 = vadd.xlane.f32.xlu0 %v1464
    %v1466 = vpop.xlane.xlu0 %1465
    %v1467 = vsel %vm506, %v1377, 0.0
    %1468 = vadd.xlane.f32.xlu0 %v1467
    %v1469 = vpop.xlane.xlu0 %1468
    %v1470 = vsel %vm506, %v1378, 0.0
    %1471 = vadd.xlane.f32.xlu0 %v1470
    %v1472 = vpop.xlane.xlu0 %1471
    %v1473 = vsel %vm506, %v1379, 0.0
    %1474 = vadd.xlane.f32.xlu0 %v1473
    %v1475 = vpop.xlane.xlu0 %1474
    %v1476 = vsel %vm506, %v1380, 0.0
    %1477 = vadd.xlane.f32.xlu0 %v1476
    %v1478 = vpop.xlane.xlu0 %1477
    %v1479 = vsel %vm506, %v1381, 0.0
    %1480 = vadd.xlane.f32.xlu0 %v1479
    %v1481 = vpop.xlane.xlu0 %1480
    %v1482 = vsel %vm506, %v1382, 0.0
    %1483 = vadd.xlane.f32.xlu0 %v1482
    %v1484 = vpop.xlane.xlu0 %1483
    %v1485 = vsel %vm506, %v1383, 0.0
    %1486 = vadd.xlane.f32.xlu0 %v1485
    %v1487 = vpop.xlane.xlu0 %1486
    %v1488 = vsel %vm506, %v1384, 0.0
    %1489 = vadd.xlane.f32.xlu0 %v1488
    %v1490 = vpop.xlane.xlu0 %1489
    %v1491 = vsel %vm506, %v1385, 0.0
    %1492 = vadd.xlane.f32.xlu0 %v1491
    %v1493 = vpop.xlane.xlu0 %1492
    %v1494 = vsel %vm506, %v1386, 0.0
    %1495 = vadd.xlane.f32.xlu0 %v1494
    %v1496 = vpop.xlane.xlu0 %1495
    %v1497 = vsel %vm506, %v1387, 0.0
    %1498 = vadd.xlane.f32.xlu0 %v1497
    %v1499 = vpop.xlane.xlu0 %1498
    %v1500 = vsel %vm506, %v1388, 0.0
    %1501 = vadd.xlane.f32.xlu0 %v1500
    %v1502 = vpop.xlane.xlu0 %1501
    %v1503 = vsel %vm506, %v1389, 0.0
    %1504 = vadd.xlane.f32.xlu0 %v1503
    %v1505 = vpop.xlane.xlu0 %1504
    %v1506 = vsel %vm506, %v1390, 0.0
    %1507 = vadd.xlane.f32.xlu0 %v1506
    %v1508 = vpop.xlane.xlu0 %1507
    %v1509 = vsel %vm506, %v1391, 0.0
    %1510 = vadd.xlane.f32.xlu0 %v1509
    %v1511 = vpop.xlane.xlu0 %1510
    %v1512 = vrsqrt.pop %v1394
    %v1513 = vmul.f32 %v1394, %v1512
    %vm1514 = vcmp.eq.f32.partialorder %v1394, inf
    %v1515 = vsel %vm1514, %v1394, %v1513
    %vm1516 = vcmp.eq.f32.partialorder %v1394, 0.0
    %v1517 = vand.u32 %v1394, 2147483648
    %v1518 = vsel %vm1516, %v1517, %v1515
    %v1519 = vrsqrt.pop %v1397
    %v1520 = vmul.f32 %v1397, %v1519
    %vm1521 = vcmp.eq.f32.partialorder %v1397, inf
    %v1522 = vsel %vm1521, %v1397, %v1520
    %vm1523 = vcmp.eq.f32.partialorder %v1397, 0.0
    %v1524 = vand.u32 %v1397, 2147483648
    %v1525 = vsel %vm1523, %v1524, %v1522
    %v1526 = vrsqrt.pop %v1400
    %v1527 = vmul.f32 %v1400, %v1526
    %vm1528 = vcmp.eq.f32.partialorder %v1400, inf
    %v1529 = vsel %vm1528, %v1400, %v1527
    %vm1530 = vcmp.eq.f32.partialorder %v1400, 0.0
    %v1531 = vand.u32 %v1400, 2147483648
    %v1532 = vsel %vm1530, %v1531, %v1529
    %v1533 = vrsqrt.pop %v1403
    %v1534 = vmul.f32 %v1403, %v1533
    %vm1535 = vcmp.eq.f32.partialorder %v1403, inf
    %v1536 = vsel %vm1535, %v1403, %v1534
    %vm1537 = vcmp.eq.f32.partialorder %v1403, 0.0
    %v1538 = vand.u32 %v1403, 2147483648
    %v1539 = vsel %vm1537, %v1538, %v1536
    %v1540 = vrsqrt.pop %v1406
    %v1541 = vmul.f32 %v1406, %v1540
    %vm1542 = vcmp.eq.f32.partialorder %v1406, inf
    %v1543 = vsel %vm1542, %v1406, %v1541
    %vm1544 = vcmp.eq.f32.partialorder %v1406, 0.0
    %v1545 = vand.u32 %v1406, 2147483648
    %v1546 = vsel %vm1544, %v1545, %v1543
    %v1547 = vrsqrt.pop %v1409
    %v1548 = vmul.f32 %v1409, %v1547
    %vm1549 = vcmp.eq.f32.partialorder %v1409, inf
    %v1550 = vsel %vm1549, %v1409, %v1548
    %vm1551 = vcmp.eq.f32.partialorder %v1409, 0.0
    %v1552 = vand.u32 %v1409, 2147483648
    %v1553 = vsel %vm1551, %v1552, %v1550
    %v1554 = vrsqrt.pop %v1412
    %v1555 = vmul.f32 %v1412, %v1554
    %vm1556 = vcmp.eq.f32.partialorder %v1412, inf
    %v1557 = vsel %vm1556, %v1412, %v1555
    %vm1558 = vcmp.eq.f32.partialorder %v1412, 0.0
    %v1559 = vand.u32 %v1412, 2147483648
    %v1560 = vsel %vm1558, %v1559, %v1557
    %v1561 = vrsqrt.pop %v1415
    %v1562 = vmul.f32 %v1415, %v1561
    %vm1563 = vcmp.eq.f32.partialorder %v1415, inf
    %v1564 = vsel %vm1563, %v1415, %v1562
    %vm1565 = vcmp.eq.f32.partialorder %v1415, 0.0
    %v1566 = vand.u32 %v1415, 2147483648
    %v1567 = vsel %vm1565, %v1566, %v1564
    %v1568 = vrsqrt.pop %v1418
    %v1569 = vmul.f32 %v1418, %v1568
    %vm1570 = vcmp.eq.f32.partialorder %v1418, inf
    %v1571 = vsel %vm1570, %v1418, %v1569
    %vm1572 = vcmp.eq.f32.partialorder %v1418, 0.0
    %v1573 = vand.u32 %v1418, 2147483648
    %v1574 = vsel %vm1572, %v1573, %v1571
    %v1575 = vrsqrt.pop %v1421
    %v1576 = vmul.f32 %v1421, %v1575
    %vm1577 = vcmp.eq.f32.partialorder %v1421, inf
    %v1578 = vsel %vm1577, %v1421, %v1576
    %vm1579 = vcmp.eq.f32.partialorder %v1421, 0.0
    %v1580 = vand.u32 %v1421, 2147483648
    %v1581 = vsel %vm1579, %v1580, %v1578
    %v1582 = vrsqrt.pop %v1424
    %v1583 = vmul.f32 %v1424, %v1582
    %vm1584 = vcmp.eq.f32.partialorder %v1424, inf
    %v1585 = vsel %vm1584, %v1424, %v1583
    %vm1586 = vcmp.eq.f32.partialorder %v1424, 0.0
    %v1587 = vand.u32 %v1424, 2147483648
    %v1588 = vsel %vm1586, %v1587, %v1585
    %v1589 = vrsqrt.pop %v1427
    %v1590 = vmul.f32 %v1427, %v1589
    %vm1591 = vcmp.eq.f32.partialorder %v1427, inf
    %v1592 = vsel %vm1591, %v1427, %v1590
    %vm1593 = vcmp.eq.f32.partialorder %v1427, 0.0
    %v1594 = vand.u32 %v1427, 2147483648
    %v1595 = vsel %vm1593, %v1594, %v1592
    %v1596 = vrsqrt.pop %v1430
    %v1597 = vmul.f32 %v1430, %v1596
    %vm1598 = vcmp.eq.f32.partialorder %v1430, inf
    %v1599 = vsel %vm1598, %v1430, %v1597
    %vm1600 = vcmp.eq.f32.partialorder %v1430, 0.0
    %v1601 = vand.u32 %v1430, 2147483648
    %v1602 = vsel %vm1600, %v1601, %v1599
    %v1603 = vrsqrt.pop %v1433
    %v1604 = vmul.f32 %v1433, %v1603
    %vm1605 = vcmp.eq.f32.partialorder %v1433, inf
    %v1606 = vsel %vm1605, %v1433, %v1604
    %vm1607 = vcmp.eq.f32.partialorder %v1433, 0.0
    %v1608 = vand.u32 %v1433, 2147483648
    %v1609 = vsel %vm1607, %v1608, %v1606
    %v1610 = vrsqrt.pop %v1436
    %v1611 = vmul.f32 %v1436, %v1610
    %vm1612 = vcmp.eq.f32.partialorder %v1436, inf
    %v1613 = vsel %vm1612, %v1436, %v1611
    %vm1614 = vcmp.eq.f32.partialorder %v1436, 0.0
    %v1615 = vand.u32 %v1436, 2147483648
    %v1616 = vsel %vm1614, %v1615, %v1613
    %v1617 = vrsqrt.pop %v1439
    %v1618 = vmul.f32 %v1439, %v1617
    %vm1619 = vcmp.eq.f32.partialorder %v1439, inf
    %v1620 = vsel %vm1619, %v1439, %v1618
    %vm1621 = vcmp.eq.f32.partialorder %v1439, 0.0
    %v1622 = vand.u32 %v1439, 2147483648
    %v1623 = vsel %vm1621, %v1622, %v1620
    %v1624 = vrsqrt.pop %v1442
    %v1625 = vmul.f32 %v1442, %v1624
    %vm1626 = vcmp.eq.f32.partialorder %v1442, inf
    %v1627 = vsel %vm1626, %v1442, %v1625
    %vm1628 = vcmp.eq.f32.partialorder %v1442, 0.0
    %v1629 = vand.u32 %v1442, 2147483648
    %v1630 = vsel %vm1628, %v1629, %v1627
    %v1631 = vrsqrt.pop %v1445
    %v1632 = vmul.f32 %v1445, %v1631
    %vm1633 = vcmp.eq.f32.partialorder %v1445, inf
    %v1634 = vsel %vm1633, %v1445, %v1632
    %vm1635 = vcmp.eq.f32.partialorder %v1445, 0.0
    %v1636 = vand.u32 %v1445, 2147483648
    %v1637 = vsel %vm1635, %v1636, %v1634
    %v1638 = vrsqrt.pop %v1448
    %v1639 = vmul.f32 %v1448, %v1638
    %vm1640 = vcmp.eq.f32.partialorder %v1448, inf
    %v1641 = vsel %vm1640, %v1448, %v1639
    %vm1642 = vcmp.eq.f32.partialorder %v1448, 0.0
    %v1643 = vand.u32 %v1448, 2147483648
    %v1644 = vsel %vm1642, %v1643, %v1641
    %v1645 = vrsqrt.pop %v1451
    %v1646 = vmul.f32 %v1451, %v1645
    %vm1647 = vcmp.eq.f32.partialorder %v1451, inf
    %v1648 = vsel %vm1647, %v1451, %v1646
    %vm1649 = vcmp.eq.f32.partialorder %v1451, 0.0
    %v1650 = vand.u32 %v1451, 2147483648
    %v1651 = vsel %vm1649, %v1650, %v1648
    %v1652 = vrsqrt.pop %v1454
    %v1653 = vmul.f32 %v1454, %v1652
    %vm1654 = vcmp.eq.f32.partialorder %v1454, inf
    %v1655 = vsel %vm1654, %v1454, %v1653
    %vm1656 = vcmp.eq.f32.partialorder %v1454, 0.0
    %v1657 = vand.u32 %v1454, 2147483648
    %v1658 = vsel %vm1656, %v1657, %v1655
    %v1659 = vrsqrt.pop %v1457
    %v1660 = vmul.f32 %v1457, %v1659
    %vm1661 = vcmp.eq.f32.partialorder %v1457, inf
    %v1662 = vsel %vm1661, %v1457, %v1660
    %vm1663 = vcmp.eq.f32.partialorder %v1457, 0.0
    %v1664 = vand.u32 %v1457, 2147483648
    %v1665 = vsel %vm1663, %v1664, %v1662
    %v1666 = vrsqrt.pop %v1460
    %v1667 = vmul.f32 %v1460, %v1666
    %vm1668 = vcmp.eq.f32.partialorder %v1460, inf
    %v1669 = vsel %vm1668, %v1460, %v1667
    %vm1670 = vcmp.eq.f32.partialorder %v1460, 0.0
    %v1671 = vand.u32 %v1460, 2147483648
    %v1672 = vsel %vm1670, %v1671, %v1669
    %v1673 = vrsqrt.pop %v1463
    %v1674 = vmul.f32 %v1463, %v1673
    %vm1675 = vcmp.eq.f32.partialorder %v1463, inf
    %v1676 = vsel %vm1675, %v1463, %v1674
    %vm1677 = vcmp.eq.f32.partialorder %v1463, 0.0
    %v1678 = vand.u32 %v1463, 2147483648
    %v1679 = vsel %vm1677, %v1678, %v1676
    %v1680 = vrsqrt.pop %v1466
    %v1681 = vmul.f32 %v1466, %v1680
    %vm1682 = vcmp.eq.f32.partialorder %v1466, inf
    %v1683 = vsel %vm1682, %v1466, %v1681
    %vm1684 = vcmp.eq.f32.partialorder %v1466, 0.0
    %v1685 = vand.u32 %v1466, 2147483648
    %v1686 = vsel %vm1684, %v1685, %v1683
    %v1687 = vrsqrt.pop %v1469
    %v1688 = vmul.f32 %v1469, %v1687
    %vm1689 = vcmp.eq.f32.partialorder %v1469, inf
    %v1690 = vsel %vm1689, %v1469, %v1688
    %vm1691 = vcmp.eq.f32.partialorder %v1469, 0.0
    %v1692 = vand.u32 %v1469, 2147483648
    %v1693 = vsel %vm1691, %v1692, %v1690
    %v1694 = vrsqrt.pop %v1472
    %v1695 = vmul.f32 %v1472, %v1694
    %vm1696 = vcmp.eq.f32.partialorder %v1472, inf
    %v1697 = vsel %vm1696, %v1472, %v1695
    %vm1698 = vcmp.eq.f32.partialorder %v1472, 0.0
    %v1699 = vand.u32 %v1472, 2147483648
    %v1700 = vsel %vm1698, %v1699, %v1697
    %v1701 = vrsqrt.pop %v1475
    %v1702 = vmul.f32 %v1475, %v1701
    %vm1703 = vcmp.eq.f32.partialorder %v1475, inf
    %v1704 = vsel %vm1703, %v1475, %v1702
    %vm1705 = vcmp.eq.f32.partialorder %v1475, 0.0
    %v1706 = vand.u32 %v1475, 2147483648
    %v1707 = vsel %vm1705, %v1706, %v1704
    %v1708 = vrsqrt.pop %v1478
    %v1709 = vmul.f32 %v1478, %v1708
    %vm1710 = vcmp.eq.f32.partialorder %v1478, inf
    %v1711 = vsel %vm1710, %v1478, %v1709
    %vm1712 = vcmp.eq.f32.partialorder %v1478, 0.0
    %v1713 = vand.u32 %v1478, 2147483648
    %v1714 = vsel %vm1712, %v1713, %v1711
    %v1715 = vrsqrt.pop %v1481
    %v1716 = vmul.f32 %v1481, %v1715
    %vm1717 = vcmp.eq.f32.partialorder %v1481, inf
    %v1718 = vsel %vm1717, %v1481, %v1716
    %vm1719 = vcmp.eq.f32.partialorder %v1481, 0.0
    %v1720 = vand.u32 %v1481, 2147483648
    %v1721 = vsel %vm1719, %v1720, %v1718
    %v1722 = vrsqrt.pop %v1484
    %v1723 = vmul.f32 %v1484, %v1722
    %vm1724 = vcmp.eq.f32.partialorder %v1484, inf
    %v1725 = vsel %vm1724, %v1484, %v1723
    %vm1726 = vcmp.eq.f32.partialorder %v1484, 0.0
    %v1727 = vand.u32 %v1484, 2147483648
    %v1728 = vsel %vm1726, %v1727, %v1725
    %v1729 = vrsqrt.pop %v1487
    %v1730 = vmul.f32 %v1487, %v1729
    %vm1731 = vcmp.eq.f32.partialorder %v1487, inf
    %v1732 = vsel %vm1731, %v1487, %v1730
    %vm1733 = vcmp.eq.f32.partialorder %v1487, 0.0
    %v1734 = vand.u32 %v1487, 2147483648
    %v1735 = vsel %vm1733, %v1734, %v1732
    %v1736 = vrsqrt.pop %v1490
    %v1737 = vmul.f32 %v1490, %v1736
    %vm1738 = vcmp.eq.f32.partialorder %v1490, inf
    %v1739 = vsel %vm1738, %v1490, %v1737
    %vm1740 = vcmp.eq.f32.partialorder %v1490, 0.0
    %v1741 = vand.u32 %v1490, 2147483648
    %v1742 = vsel %vm1740, %v1741, %v1739
    %v1743 = vrsqrt.pop %v1493
    %v1744 = vmul.f32 %v1493, %v1743
    %vm1745 = vcmp.eq.f32.partialorder %v1493, inf
    %v1746 = vsel %vm1745, %v1493, %v1744
    %vm1747 = vcmp.eq.f32.partialorder %v1493, 0.0
    %v1748 = vand.u32 %v1493, 2147483648
    %v1749 = vsel %vm1747, %v1748, %v1746
    %v1750 = vrsqrt.pop %v1496
    %v1751 = vmul.f32 %v1496, %v1750
    %vm1752 = vcmp.eq.f32.partialorder %v1496, inf
    %v1753 = vsel %vm1752, %v1496, %v1751
    %vm1754 = vcmp.eq.f32.partialorder %v1496, 0.0
    %v1755 = vand.u32 %v1496, 2147483648
    %v1756 = vsel %vm1754, %v1755, %v1753
    %v1757 = vrsqrt.pop %v1499
    %v1758 = vmul.f32 %v1499, %v1757
    %vm1759 = vcmp.eq.f32.partialorder %v1499, inf
    %v1760 = vsel %vm1759, %v1499, %v1758
    %vm1761 = vcmp.eq.f32.partialorder %v1499, 0.0
    %v1762 = vand.u32 %v1499, 2147483648
    %v1763 = vsel %vm1761, %v1762, %v1760
    %v1764 = vrsqrt.pop %v1502
    %v1765 = vmul.f32 %v1502, %v1764
    %vm1766 = vcmp.eq.f32.partialorder %v1502, inf
    %v1767 = vsel %vm1766, %v1502, %v1765
    %vm1768 = vcmp.eq.f32.partialorder %v1502, 0.0
    %v1769 = vand.u32 %v1502, 2147483648
    %v1770 = vsel %vm1768, %v1769, %v1767
    %v1771 = vrsqrt.pop %v1505
    %v1772 = vmul.f32 %v1505, %v1771
    %vm1773 = vcmp.eq.f32.partialorder %v1505, inf
    %v1774 = vsel %vm1773, %v1505, %v1772
    %vm1775 = vcmp.eq.f32.partialorder %v1505, 0.0
    %v1776 = vand.u32 %v1505, 2147483648
    %v1777 = vsel %vm1775, %v1776, %v1774
    %v1778 = vrsqrt.pop %v1508
    %v1779 = vmul.f32 %v1508, %v1778
    %vm1780 = vcmp.eq.f32.partialorder %v1508, inf
    %v1781 = vsel %vm1780, %v1508, %v1779
    %vm1782 = vcmp.eq.f32.partialorder %v1508, 0.0
    %v1783 = vand.u32 %v1508, 2147483648
    %v1784 = vsel %vm1782, %v1783, %v1781
    %v1785 = vrsqrt.pop %v1511
    %v1786 = vmul.f32 %v1511, %v1785
    %vm1787 = vcmp.eq.f32.partialorder %v1511, inf
    %v1788 = vsel %vm1787, %v1511, %v1786
    %vm1789 = vcmp.eq.f32.partialorder %v1511, 0.0
    %v1790 = vand.u32 %v1511, 2147483648
    %v1791 = vsel %vm1789, %v1790, %v1788
    %v1792 = vmax.f32 %v1518, 1e-15
    %v1793 = vmax.f32 %v1525, 1e-15
    %v1794 = vmax.f32 %v1532, 1e-15
    %v1795 = vmax.f32 %v1539, 1e-15
    %v1796 = vmax.f32 %v1546, 1e-15
    %v1797 = vmax.f32 %v1553, 1e-15
    %v1798 = vmax.f32 %v1560, 1e-15
    %v1799 = vmax.f32 %v1567, 1e-15
    %v1800 = vmax.f32 %v1574, 1e-15
    %v1801 = vmax.f32 %v1581, 1e-15
    %v1802 = vmax.f32 %v1588, 1e-15
    %v1803 = vmax.f32 %v1595, 1e-15
    %v1804 = vmax.f32 %v1602, 1e-15
    %v1805 = vmax.f32 %v1609, 1e-15
    %v1806 = vmax.f32 %v1616, 1e-15
    %v1807 = vmax.f32 %v1623, 1e-15
    %v1808 = vmax.f32 %v1630, 1e-15
    %v1809 = vmax.f32 %v1637, 1e-15
    %v1810 = vmax.f32 %v1644, 1e-15
    %v1811 = vmax.f32 %v1651, 1e-15
    %v1812 = vmax.f32 %v1658, 1e-15
    %v1813 = vmax.f32 %v1665, 1e-15
    %v1814 = vmax.f32 %v1672, 1e-15
    %v1815 = vmax.f32 %v1679, 1e-15
    %v1816 = vmax.f32 %v1686, 1e-15
    %v1817 = vmax.f32 %v1693, 1e-15
    %v1818 = vmax.f32 %v1700, 1e-15
    %v1819 = vmax.f32 %v1707, 1e-15
    %v1820 = vmax.f32 %v1714, 1e-15
    %v1821 = vmax.f32 %v1721, 1e-15
    %v1822 = vmax.f32 %v1728, 1e-15
    %v1823 = vmax.f32 %v1735, 1e-15
    %v1824 = vmax.f32 %v1742, 1e-15
    %v1825 = vmax.f32 %v1749, 1e-15
    %v1826 = vmax.f32 %v1756, 1e-15
    %v1827 = vmax.f32 %v1763, 1e-15
    %v1828 = vmax.f32 %v1770, 1e-15
    %v1829 = vmax.f32 %v1777, 1e-15
    %v1830 = vmax.f32 %v1784, 1e-15
    %v1831 = vmax.f32 %v1791, 1e-15
    %v1832 = vmul.f32 %v1231, 0.05
    %v1833 = vmul.f32 %v1832, %v1792
    %v1834 = vmul.f32 %v1832, %v1793
    %v1835 = vmul.f32 %v1832, %v1794
    %v1836 = vmul.f32 %v1832, %v1795
    %v1837 = vmul.f32 %v1832, %v1796
    %v1838 = vmul.f32 %v1832, %v1797
    %v1839 = vmul.f32 %v1832, %v1798
    %v1840 = vmul.f32 %v1832, %v1799
    %v1841 = vmul.f32 %v1832, %v1800
    %v1842 = vmul.f32 %v1832, %v1801
    %v1843 = vmul.f32 %v1832, %v1802
    %v1844 = vmul.f32 %v1832, %v1803
    %v1845 = vmul.f32 %v1832, %v1804
    %v1846 = vmul.f32 %v1832, %v1805
    %v1847 = vmul.f32 %v1832, %v1806
    %v1848 = vmul.f32 %v1832, %v1807
    %v1849 = vmul.f32 %v1832, %v1808
    %v1850 = vmul.f32 %v1832, %v1809
    %v1851 = vmul.f32 %v1832, %v1810
    %v1852 = vmul.f32 %v1832, %v1811
    %v1853 = vmul.f32 %v1832, %v1812
    %v1854 = vmul.f32 %v1832, %v1813
    %v1855 = vmul.f32 %v1832, %v1814
    %v1856 = vmul.f32 %v1832, %v1815
    %v1857 = vmul.f32 %v1832, %v1816
    %v1858 = vmul.f32 %v1832, %v1817
    %v1859 = vmul.f32 %v1832, %v1818
    %v1860 = vmul.f32 %v1832, %v1819
    %v1861 = vmul.f32 %v1832, %v1820
    %v1862 = vmul.f32 %v1832, %v1821
    %v1863 = vmul.f32 %v1832, %v1822
    %v1864 = vmul.f32 %v1832, %v1823
    %v1865 = vmul.f32 %v1832, %v1824
    %v1866 = vmul.f32 %v1832, %v1825
    %v1867 = vmul.f32 %v1832, %v1826
    %v1868 = vmul.f32 %v1832, %v1827
    %v1869 = vmul.f32 %v1832, %v1828
    %v1870 = vmul.f32 %v1832, %v1829
    %v1871 = vmul.f32 %v1832, %v1830
    %v1872 = vmul.f32 %v1832, %v1831
    %v1873 = vtanh.pop %v1833
    %v1874 = vtanh.pop %v1834
    %v1875 = vtanh.pop %v1835
    %v1876 = vtanh.pop %v1836
    %v1877 = vtanh.pop %v1837
    %v1878 = vtanh.pop %v1838
    %v1879 = vtanh.pop %v1839
    %v1880 = vtanh.pop %v1840
    %v1881 = vtanh.pop %v1841
    %v1882 = vtanh.pop %v1842
    %v1883 = vtanh.pop %v1843
    %v1884 = vtanh.pop %v1844
    %v1885 = vtanh.pop %v1845
    %v1886 = vtanh.pop %v1846
    %v1887 = vtanh.pop %v1847
    %v1888 = vtanh.pop %v1848
    %v1889 = vtanh.pop %v1849
    %v1890 = vtanh.pop %v1850
    %v1891 = vtanh.pop %v1851
    %v1892 = vtanh.pop %v1852
    %v1893 = vtanh.pop %v1853
    %v1894 = vtanh.pop %v1854
    %v1895 = vtanh.pop %v1855
    %v1896 = vtanh.pop %v1856
    %v1897 = vtanh.pop %v1857
    %v1898 = vtanh.pop %v1858
    %v1899 = vtanh.pop %v1859
    %v1900 = vtanh.pop %v1860
    %v1901 = vtanh.pop %v1861
    %v1902 = vtanh.pop %v1862
    %v1903 = vtanh.pop %v1863
    %v1904 = vtanh.pop %v1864
    %v1905 = vtanh.pop %v1865
    %v1906 = vtanh.pop %v1866
    %v1907 = vtanh.pop %v1867
    %v1908 = vtanh.pop %v1868
    %v1909 = vtanh.pop %v1869
    %v1910 = vtanh.pop %v1870
    %v1911 = vtanh.pop %v1871
    %v1912 = vtanh.pop %v1872
    %v1913 = vmul.f32 %v1873, %v1312
    %v1914 = vmul.f32 %v1874, %v1313
    %v1915 = vmul.f32 %v1875, %v1314
    %v1916 = vmul.f32 %v1876, %v1315
    %v1917 = vmul.f32 %v1877, %v1316
    %v1918 = vmul.f32 %v1878, %v1317
    %v1919 = vmul.f32 %v1879, %v1318
    %v1920 = vmul.f32 %v1880, %v1319
    %v1921 = vmul.f32 %v1881, %v1320
    %v1922 = vmul.f32 %v1882, %v1321
    %v1923 = vmul.f32 %v1883, %v1322
    %v1924 = vmul.f32 %v1884, %v1323
    %v1925 = vmul.f32 %v1885, %v1324
    %v1926 = vmul.f32 %v1886, %v1325
    %v1927 = vmul.f32 %v1887, %v1326
    %v1928 = vmul.f32 %v1888, %v1327
    %v1929 = vmul.f32 %v1889, %v1328
    %v1930 = vmul.f32 %v1890, %v1329
    %v1931 = vmul.f32 %v1891, %v1330
    %v1932 = vmul.f32 %v1892, %v1331
    %v1933 = vmul.f32 %v1893, %v1332
    %v1934 = vmul.f32 %v1894, %v1333
    %v1935 = vmul.f32 %v1895, %v1334
    %v1936 = vmul.f32 %v1896, %v1335
    %v1937 = vmul.f32 %v1897, %v1336
    %v1938 = vmul.f32 %v1898, %v1337
    %v1939 = vmul.f32 %v1899, %v1338
    %v1940 = vmul.f32 %v1900, %v1339
    %v1941 = vmul.f32 %v1901, %v1340
    %v1942 = vmul.f32 %v1902, %v1341
    %v1943 = vmul.f32 %v1903, %v1342
    %v1944 = vmul.f32 %v1904, %v1343
    %v1945 = vmul.f32 %v1905, %v1344
    %v1946 = vmul.f32 %v1906, %v1345
    %v1947 = vmul.f32 %v1907, %v1346
    %v1948 = vmul.f32 %v1908, %v1347
    %v1949 = vmul.f32 %v1909, %v1348
    %v1950 = vmul.f32 %v1910, %v1349
    %v1951 = vmul.f32 %v1911, %v1350
    %v1952 = vmul.f32 %v1912, %v1351
    %v1953 = vmul.f32 %v1792, 0.1
    %v1954 = vmul.f32 %v1793, 0.1
    %v1955 = vmul.f32 %v1794, 0.1
    %v1956 = vmul.f32 %v1795, 0.1
    %v1957 = vmul.f32 %v1796, 0.1
    %v1958 = vmul.f32 %v1797, 0.1
    %v1959 = vmul.f32 %v1798, 0.1
    %v1960 = vmul.f32 %v1799, 0.1
    %v1961 = vmul.f32 %v1800, 0.1
    %v1962 = vmul.f32 %v1801, 0.1
    %v1963 = vmul.f32 %v1802, 0.1
    %v1964 = vmul.f32 %v1803, 0.1
    %v1965 = vmul.f32 %v1804, 0.1
    %v1966 = vmul.f32 %v1805, 0.1
    %v1967 = vmul.f32 %v1806, 0.1
    %v1968 = vmul.f32 %v1807, 0.1
    %v1969 = vmul.f32 %v1808, 0.1
    %v1970 = vmul.f32 %v1809, 0.1
    %v1971 = vmul.f32 %v1810, 0.1
    %v1972 = vmul.f32 %v1811, 0.1
    %v1973 = vmul.f32 %v1812, 0.1
    %v1974 = vmul.f32 %v1813, 0.1
    %v1975 = vmul.f32 %v1814, 0.1
    %v1976 = vmul.f32 %v1815, 0.1
    %v1977 = vmul.f32 %v1816, 0.1
    %v1978 = vmul.f32 %v1817, 0.1
    %v1979 = vmul.f32 %v1818, 0.1
    %v1980 = vmul.f32 %v1819, 0.1
    %v1981 = vmul.f32 %v1820, 0.1
    %v1982 = vmul.f32 %v1821, 0.1
    %v1983 = vmul.f32 %v1822, 0.1
    %v1984 = vmul.f32 %v1823, 0.1
    %v1985 = vmul.f32 %v1824, 0.1
    %v1986 = vmul.f32 %v1825, 0.1
    %v1987 = vmul.f32 %v1826, 0.1
    %v1988 = vmul.f32 %v1827, 0.1
    %v1989 = vmul.f32 %v1828, 0.1
    %v1990 = vmul.f32 %v1829, 0.1
    %v1991 = vmul.f32 %v1830, 0.1
    %v1992 = vmul.f32 %v1831, 0.1
    %v1993 = vrcp.pop %v1953
    %v1994 = vrcp.pop %v1954
    %v1995 = vrcp.pop %v1955
    %v1996 = vrcp.pop %v1956
    %v1997 = vrcp.pop %v1957
    %v1998 = vrcp.pop %v1958
    %v1999 = vrcp.pop %v1959
    %v2000 = vrcp.pop %v1960
    %v2001 = vrcp.pop %v1961
    %v2002 = vrcp.pop %v1962
    %v2003 = vrcp.pop %v1963
    %v2004 = vrcp.pop %v1964
    %v2005 = vrcp.pop %v1965
    %v2006 = vrcp.pop %v1966
    %v2007 = vrcp.pop %v1967
    %v2008 = vrcp.pop %v1968
    %v2009 = vrcp.pop %v1969
    %v2010 = vrcp.pop %v1970
    %v2011 = vrcp.pop %v1971
    %v2012 = vrcp.pop %v1972
    %v2013 = vrcp.pop %v1973
    %v2014 = vrcp.pop %v1974
    %v2015 = vrcp.pop %v1975
    %v2016 = vrcp.pop %v1976
    %v2017 = vrcp.pop %v1977
    %v2018 = vrcp.pop %v1978
    %v2019 = vrcp.pop %v1979
    %v2020 = vrcp.pop %v1980
    %v2021 = vrcp.pop %v1981
    %v2022 = vrcp.pop %v1982
    %v2023 = vrcp.pop %v1983
    %v2024 = vrcp.pop %v1984
    %v2025 = vrcp.pop %v1985
    %v2026 = vrcp.pop %v1986
    %v2027 = vrcp.pop %v1987
    %v2028 = vrcp.pop %v1988
    %v2029 = vrcp.pop %v1989
    %v2030 = vrcp.pop %v1990
    %v2031 = vrcp.pop %v1991
    %v2032 = vrcp.pop %v1992
    %v2033 = vmul.f32 %v1913, %v1993
    %v2034 = vmul.f32 %v1914, %v1994
    %v2035 = vmul.f32 %v1915, %v1995
    %v2036 = vmul.f32 %v1916, %v1996
    %v2037 = vmul.f32 %v1917, %v1997
    %v2038 = vmul.f32 %v1918, %v1998
    %v2039 = vmul.f32 %v1919, %v1999
    %v2040 = vmul.f32 %v1920, %v2000
    %v2041 = vmul.f32 %v1921, %v2001
    %v2042 = vmul.f32 %v1922, %v2002
    %v2043 = vmul.f32 %v1923, %v2003
    %v2044 = vmul.f32 %v1924, %v2004
    %v2045 = vmul.f32 %v1925, %v2005
    %v2046 = vmul.f32 %v1926, %v2006
    %v2047 = vmul.f32 %v1927, %v2007
    %v2048 = vmul.f32 %v1928, %v2008
    %v2049 = vmul.f32 %v1929, %v2009
    %v2050 = vmul.f32 %v1930, %v2010
    %v2051 = vmul.f32 %v1931, %v2011
    %v2052 = vmul.f32 %v1932, %v2012
    %v2053 = vmul.f32 %v1933, %v2013
    %v2054 = vmul.f32 %v1934, %v2014
    %v2055 = vmul.f32 %v1935, %v2015
    %v2056 = vmul.f32 %v1936, %v2016
    %v2057 = vmul.f32 %v1937, %v2017
    %v2058 = vmul.f32 %v1938, %v2018
    %v2059 = vmul.f32 %v1939, %v2019
    %v2060 = vmul.f32 %v1940, %v2020
    %v2061 = vmul.f32 %v1941, %v2021
    %v2062 = vmul.f32 %v1942, %v2022
    %v2063 = vmul.f32 %v1943, %v2023
    %v2064 = vmul.f32 %v1944, %v2024
    %v2065 = vmul.f32 %v1945, %v2025
    %v2066 = vmul.f32 %v1946, %v2026
    %v2067 = vmul.f32 %v1947, %v2027
    %v2068 = vmul.f32 %v1948, %v2028
    %v2069 = vmul.f32 %v1949, %v2029
    %v2070 = vmul.f32 %v1950, %v2030
    %v2071 = vmul.f32 %v1951, %v2031
    %v2072 = vmul.f32 %v1952, %v2032
    %v2073 = vmul.f32 %v910, %v2033
    %v2074 = vmul.f32 %v910, %v2034
    %v2075 = vmul.f32 %v910, %v2035
    %v2076 = vmul.f32 %v910, %v2036
    %v2077 = vmul.f32 %v910, %v2037
    %v2078 = vmul.f32 %v910, %v2038
    %v2079 = vmul.f32 %v910, %v2039
    %v2080 = vmul.f32 %v910, %v2040
    %v2081 = vmul.f32 %v910, %v2041
    %v2082 = vmul.f32 %v910, %v2042
    %v2083 = vmul.f32 %v910, %v2043
    %v2084 = vmul.f32 %v910, %v2044
    %v2085 = vmul.f32 %v910, %v2045
    %v2086 = vmul.f32 %v910, %v2046
    %v2087 = vmul.f32 %v910, %v2047
    %v2088 = vmul.f32 %v910, %v2048
    %v2089 = vmul.f32 %v910, %v2049
    %v2090 = vmul.f32 %v910, %v2050
    %v2091 = vmul.f32 %v910, %v2051
    %v2092 = vmul.f32 %v910, %v2052
    %v2093 = vmul.f32 %v910, %v2053
    %v2094 = vmul.f32 %v910, %v2054
    %v2095 = vmul.f32 %v910, %v2055
    %v2096 = vmul.f32 %v910, %v2056
    %v2097 = vmul.f32 %v910, %v2057
    %v2098 = vmul.f32 %v910, %v2058
    %v2099 = vmul.f32 %v910, %v2059
    %v2100 = vmul.f32 %v910, %v2060
    %v2101 = vmul.f32 %v910, %v2061
    %v2102 = vmul.f32 %v910, %v2062
    %v2103 = vmul.f32 %v910, %v2063
    %v2104 = vmul.f32 %v910, %v2064
    %v2105 = vmul.f32 %v910, %v2065
    %v2106 = vmul.f32 %v910, %v2066
    %v2107 = vmul.f32 %v910, %v2067
    %v2108 = vmul.f32 %v910, %v2068
    %v2109 = vmul.f32 %v910, %v2069
    %v2110 = vmul.f32 %v910, %v2070
    %v2111 = vmul.f32 %v910, %v2071
    %v2112 = vmul.f32 %v910, %v2072
    %v2113 = vsel %vm506, %v2073, 0.0
    %2114 = vadd.xlane.f32.xlu0 %v2113
    %v2115 = vpop.xlane.xlu0 %2114
    %v2116 = vsel %vm506, %v2074, 0.0
    %2117 = vadd.xlane.f32.xlu0 %v2116
    %v2118 = vpop.xlane.xlu0 %2117
    %v2119 = vsel %vm506, %v2075, 0.0
    %2120 = vadd.xlane.f32.xlu0 %v2119
    %v2121 = vpop.xlane.xlu0 %2120
    %v2122 = vsel %vm506, %v2076, 0.0
    %2123 = vadd.xlane.f32.xlu0 %v2122
    %v2124 = vpop.xlane.xlu0 %2123
    %v2125 = vsel %vm506, %v2077, 0.0
    %2126 = vadd.xlane.f32.xlu0 %v2125
    %v2127 = vpop.xlane.xlu0 %2126
    %v2128 = vsel %vm506, %v2078, 0.0
    %2129 = vadd.xlane.f32.xlu0 %v2128
    %v2130 = vpop.xlane.xlu0 %2129
    %v2131 = vsel %vm506, %v2079, 0.0
    %2132 = vadd.xlane.f32.xlu0 %v2131
    %v2133 = vpop.xlane.xlu0 %2132
    %v2134 = vsel %vm506, %v2080, 0.0
    %2135 = vadd.xlane.f32.xlu0 %v2134
    %v2136 = vpop.xlane.xlu0 %2135
    %v2137 = vsel %vm506, %v2081, 0.0
    %2138 = vadd.xlane.f32.xlu0 %v2137
    %v2139 = vpop.xlane.xlu0 %2138
    %v2140 = vsel %vm506, %v2082, 0.0
    %2141 = vadd.xlane.f32.xlu0 %v2140
    %v2142 = vpop.xlane.xlu0 %2141
    %v2143 = vsel %vm506, %v2083, 0.0
    %2144 = vadd.xlane.f32.xlu0 %v2143
    %v2145 = vpop.xlane.xlu0 %2144
    %v2146 = vsel %vm506, %v2084, 0.0
    %2147 = vadd.xlane.f32.xlu0 %v2146
    %v2148 = vpop.xlane.xlu0 %2147
    %v2149 = vsel %vm506, %v2085, 0.0
    %2150 = vadd.xlane.f32.xlu0 %v2149
    %v2151 = vpop.xlane.xlu0 %2150
    %v2152 = vsel %vm506, %v2086, 0.0
    %2153 = vadd.xlane.f32.xlu0 %v2152
    %v2154 = vpop.xlane.xlu0 %2153
    %v2155 = vsel %vm506, %v2087, 0.0
    %2156 = vadd.xlane.f32.xlu0 %v2155
    %v2157 = vpop.xlane.xlu0 %2156
    %v2158 = vsel %vm506, %v2088, 0.0
    %2159 = vadd.xlane.f32.xlu0 %v2158
    %v2160 = vpop.xlane.xlu0 %2159
    %v2161 = vsel %vm506, %v2089, 0.0
    %2162 = vadd.xlane.f32.xlu0 %v2161
    %v2163 = vpop.xlane.xlu0 %2162
    %v2164 = vsel %vm506, %v2090, 0.0
    %2165 = vadd.xlane.f32.xlu0 %v2164
    %v2166 = vpop.xlane.xlu0 %2165
    %v2167 = vsel %vm506, %v2091, 0.0
    %2168 = vadd.xlane.f32.xlu0 %v2167
    %v2169 = vpop.xlane.xlu0 %2168
    %v2170 = vsel %vm506, %v2092, 0.0
    %2171 = vadd.xlane.f32.xlu0 %v2170
    %v2172 = vpop.xlane.xlu0 %2171
    %v2173 = vsel %vm506, %v2093, 0.0
    %2174 = vadd.xlane.f32.xlu0 %v2173
    %v2175 = vpop.xlane.xlu0 %2174
    %v2176 = vsel %vm506, %v2094, 0.0
    %2177 = vadd.xlane.f32.xlu0 %v2176
    %v2178 = vpop.xlane.xlu0 %2177
    %v2179 = vsel %vm506, %v2095, 0.0
    %2180 = vadd.xlane.f32.xlu0 %v2179
    %v2181 = vpop.xlane.xlu0 %2180
    %v2182 = vsel %vm506, %v2096, 0.0
    %2183 = vadd.xlane.f32.xlu0 %v2182
    %v2184 = vpop.xlane.xlu0 %2183
    %v2185 = vsel %vm506, %v2097, 0.0
    %2186 = vadd.xlane.f32.xlu0 %v2185
    %v2187 = vpop.xlane.xlu0 %2186
    %v2188 = vsel %vm506, %v2098, 0.0
    %2189 = vadd.xlane.f32.xlu0 %v2188
    %v2190 = vpop.xlane.xlu0 %2189
    %v2191 = vsel %vm506, %v2099, 0.0
    %2192 = vadd.xlane.f32.xlu0 %v2191
    %v2193 = vpop.xlane.xlu0 %2192
    %v2194 = vsel %vm506, %v2100, 0.0
    %2195 = vadd.xlane.f32.xlu0 %v2194
    %v2196 = vpop.xlane.xlu0 %2195
    %v2197 = vsel %vm506, %v2101, 0.0
    %2198 = vadd.xlane.f32.xlu0 %v2197
    %v2199 = vpop.xlane.xlu0 %2198
    %v2200 = vsel %vm506, %v2102, 0.0
    %2201 = vadd.xlane.f32.xlu0 %v2200
    %v2202 = vpop.xlane.xlu0 %2201
    %v2203 = vsel %vm506, %v2103, 0.0
    %2204 = vadd.xlane.f32.xlu0 %v2203
    %v2205 = vpop.xlane.xlu0 %2204
    %v2206 = vsel %vm506, %v2104, 0.0
    %2207 = vadd.xlane.f32.xlu0 %v2206
    %v2208 = vpop.xlane.xlu0 %2207
    %v2209 = vsel %vm506, %v2105, 0.0
    %2210 = vadd.xlane.f32.xlu0 %v2209
    %v2211 = vpop.xlane.xlu0 %2210
    %v2212 = vsel %vm506, %v2106, 0.0
    %2213 = vadd.xlane.f32.xlu0 %v2212
    %v2214 = vpop.xlane.xlu0 %2213
    %v2215 = vsel %vm506, %v2107, 0.0
    %2216 = vadd.xlane.f32.xlu0 %v2215
    %v2217 = vpop.xlane.xlu0 %2216
    %v2218 = vsel %vm506, %v2108, 0.0
    %2219 = vadd.xlane.f32.xlu0 %v2218
    %v2220 = vpop.xlane.xlu0 %2219
    %v2221 = vsel %vm506, %v2109, 0.0
    %2222 = vadd.xlane.f32.xlu0 %v2221
    %v2223 = vpop.xlane.xlu0 %2222
    %v2224 = vsel %vm506, %v2110, 0.0
    %2225 = vadd.xlane.f32.xlu0 %v2224
    %v2226 = vpop.xlane.xlu0 %2225
    %v2227 = vsel %vm506, %v2111, 0.0
    %2228 = vadd.xlane.f32.xlu0 %v2227
    %v2229 = vpop.xlane.xlu0 %2228
    %v2230 = vsel %vm506, %v2112, 0.0
    %2231 = vadd.xlane.f32.xlu0 %v2230
    %v2232 = vpop.xlane.xlu0 %2231
    %v2233 = vmul.f32 %v2033, %v2033
    %v2234 = vmul.f32 %v2034, %v2034
    %v2235 = vmul.f32 %v2035, %v2035
    %v2236 = vmul.f32 %v2036, %v2036
    %v2237 = vmul.f32 %v2037, %v2037
    %v2238 = vmul.f32 %v2038, %v2038
    %v2239 = vmul.f32 %v2039, %v2039
    %v2240 = vmul.f32 %v2040, %v2040
    %v2241 = vmul.f32 %v2041, %v2041
    %v2242 = vmul.f32 %v2042, %v2042
    %v2243 = vmul.f32 %v2043, %v2043
    %v2244 = vmul.f32 %v2044, %v2044
    %v2245 = vmul.f32 %v2045, %v2045
    %v2246 = vmul.f32 %v2046, %v2046
    %v2247 = vmul.f32 %v2047, %v2047
    %v2248 = vmul.f32 %v2048, %v2048
    %v2249 = vmul.f32 %v2049, %v2049
    %v2250 = vmul.f32 %v2050, %v2050
    %v2251 = vmul.f32 %v2051, %v2051
    %v2252 = vmul.f32 %v2052, %v2052
    %v2253 = vmul.f32 %v2053, %v2053
    %v2254 = vmul.f32 %v2054, %v2054
    %v2255 = vmul.f32 %v2055, %v2055
    %v2256 = vmul.f32 %v2056, %v2056
    %v2257 = vmul.f32 %v2057, %v2057
    %v2258 = vmul.f32 %v2058, %v2058
    %v2259 = vmul.f32 %v2059, %v2059
    %v2260 = vmul.f32 %v2060, %v2060
    %v2261 = vmul.f32 %v2061, %v2061
    %v2262 = vmul.f32 %v2062, %v2062
    %v2263 = vmul.f32 %v2063, %v2063
    %v2264 = vmul.f32 %v2064, %v2064
    %v2265 = vmul.f32 %v2065, %v2065
    %v2266 = vmul.f32 %v2066, %v2066
    %v2267 = vmul.f32 %v2067, %v2067
    %v2268 = vmul.f32 %v2068, %v2068
    %v2269 = vmul.f32 %v2069, %v2069
    %v2270 = vmul.f32 %v2070, %v2070
    %v2271 = vmul.f32 %v2071, %v2071
    %v2272 = vmul.f32 %v2072, %v2072
    %v2273 = vsel %vm506, %v2233, 0.0
    %2274 = vadd.xlane.f32.xlu0 %v2273
    %v2275 = vpop.xlane.xlu0 %2274
    %v2276 = vsel %vm506, %v2234, 0.0
    %2277 = vadd.xlane.f32.xlu0 %v2276
    %v2278 = vpop.xlane.xlu0 %2277
    %v2279 = vsel %vm506, %v2235, 0.0
    %2280 = vadd.xlane.f32.xlu0 %v2279
    %v2281 = vpop.xlane.xlu0 %2280
    %v2282 = vsel %vm506, %v2236, 0.0
    %2283 = vadd.xlane.f32.xlu0 %v2282
    %v2284 = vpop.xlane.xlu0 %2283
    %v2285 = vsel %vm506, %v2237, 0.0
    %2286 = vadd.xlane.f32.xlu0 %v2285
    %v2287 = vpop.xlane.xlu0 %2286
    %v2288 = vsel %vm506, %v2238, 0.0
    %2289 = vadd.xlane.f32.xlu0 %v2288
    %v2290 = vpop.xlane.xlu0 %2289
    %v2291 = vsel %vm506, %v2239, 0.0
    %2292 = vadd.xlane.f32.xlu0 %v2291
    %v2293 = vpop.xlane.xlu0 %2292
    %v2294 = vsel %vm506, %v2240, 0.0
    %2295 = vadd.xlane.f32.xlu0 %v2294
    %v2296 = vpop.xlane.xlu0 %2295
    %v2297 = vsel %vm506, %v2241, 0.0
    %2298 = vadd.xlane.f32.xlu0 %v2297
    %v2299 = vpop.xlane.xlu0 %2298
    %v2300 = vsel %vm506, %v2242, 0.0
    %2301 = vadd.xlane.f32.xlu0 %v2300
    %v2302 = vpop.xlane.xlu0 %2301
    %v2303 = vsel %vm506, %v2243, 0.0
    %2304 = vadd.xlane.f32.xlu0 %v2303
    %v2305 = vpop.xlane.xlu0 %2304
    %v2306 = vsel %vm506, %v2244, 0.0
    %2307 = vadd.xlane.f32.xlu0 %v2306
    %v2308 = vpop.xlane.xlu0 %2307
    %v2309 = vsel %vm506, %v2245, 0.0
    %2310 = vadd.xlane.f32.xlu0 %v2309
    %v2311 = vpop.xlane.xlu0 %2310
    %v2312 = vsel %vm506, %v2246, 0.0
    %2313 = vadd.xlane.f32.xlu0 %v2312
    %v2314 = vpop.xlane.xlu0 %2313
    %v2315 = vsel %vm506, %v2247, 0.0
    %2316 = vadd.xlane.f32.xlu0 %v2315
    %v2317 = vpop.xlane.xlu0 %2316
    %v2318 = vsel %vm506, %v2248, 0.0
    %2319 = vadd.xlane.f32.xlu0 %v2318
    %v2320 = vpop.xlane.xlu0 %2319
    %v2321 = vsel %vm506, %v2249, 0.0
    %2322 = vadd.xlane.f32.xlu0 %v2321
    %v2323 = vpop.xlane.xlu0 %2322
    %v2324 = vsel %vm506, %v2250, 0.0
    %2325 = vadd.xlane.f32.xlu0 %v2324
    %v2326 = vpop.xlane.xlu0 %2325
    %v2327 = vsel %vm506, %v2251, 0.0
    %2328 = vadd.xlane.f32.xlu0 %v2327
    %v2329 = vpop.xlane.xlu0 %2328
    %v2330 = vsel %vm506, %v2252, 0.0
    %2331 = vadd.xlane.f32.xlu0 %v2330
    %v2332 = vpop.xlane.xlu0 %2331
    %v2333 = vsel %vm506, %v2253, 0.0
    %2334 = vadd.xlane.f32.xlu0 %v2333
    %v2335 = vpop.xlane.xlu0 %2334
    %v2336 = vsel %vm506, %v2254, 0.0
    %2337 = vadd.xlane.f32.xlu0 %v2336
    %v2338 = vpop.xlane.xlu0 %2337
    %v2339 = vsel %vm506, %v2255, 0.0
    %2340 = vadd.xlane.f32.xlu0 %v2339
    %v2341 = vpop.xlane.xlu0 %2340
    %v2342 = vsel %vm506, %v2256, 0.0
    %2343 = vadd.xlane.f32.xlu0 %v2342
    %v2344 = vpop.xlane.xlu0 %2343
    %v2345 = vsel %vm506, %v2257, 0.0
    %2346 = vadd.xlane.f32.xlu0 %v2345
    %v2347 = vpop.xlane.xlu0 %2346
    %v2348 = vsel %vm506, %v2258, 0.0
    %2349 = vadd.xlane.f32.xlu0 %v2348
    %v2350 = vpop.xlane.xlu0 %2349
    %v2351 = vsel %vm506, %v2259, 0.0
    %2352 = vadd.xlane.f32.xlu0 %v2351
    %v2353 = vpop.xlane.xlu0 %2352
    %v2354 = vsel %vm506, %v2260, 0.0
    %2355 = vadd.xlane.f32.xlu0 %v2354
    %v2356 = vpop.xlane.xlu0 %2355
    %v2357 = vsel %vm506, %v2261, 0.0
    %2358 = vadd.xlane.f32.xlu0 %v2357
    %v2359 = vpop.xlane.xlu0 %2358
    %v2360 = vsel %vm506, %v2262, 0.0
    %2361 = vadd.xlane.f32.xlu0 %v2360
    %v2362 = vpop.xlane.xlu0 %2361
    %v2363 = vsel %vm506, %v2263, 0.0
    %2364 = vadd.xlane.f32.xlu0 %v2363
    %v2365 = vpop.xlane.xlu0 %2364
    %v2366 = vsel %vm506, %v2264, 0.0
    %2367 = vadd.xlane.f32.xlu0 %v2366
    %v2368 = vpop.xlane.xlu0 %2367
    %v2369 = vsel %vm506, %v2265, 0.0
    %2370 = vadd.xlane.f32.xlu0 %v2369
    %v2371 = vpop.xlane.xlu0 %2370
    %v2372 = vsel %vm506, %v2266, 0.0
    %2373 = vadd.xlane.f32.xlu0 %v2372
    %v2374 = vpop.xlane.xlu0 %2373
    %v2375 = vsel %vm506, %v2267, 0.0
    %2376 = vadd.xlane.f32.xlu0 %v2375
    %v2377 = vpop.xlane.xlu0 %2376
    %v2378 = vsel %vm506, %v2268, 0.0
    %2379 = vadd.xlane.f32.xlu0 %v2378
    %v2380 = vpop.xlane.xlu0 %2379
    %v2381 = vsel %vm506, %v2269, 0.0
    %2382 = vadd.xlane.f32.xlu0 %v2381
    %v2383 = vpop.xlane.xlu0 %2382
    %v2384 = vsel %vm506, %v2270, 0.0
    %2385 = vadd.xlane.f32.xlu0 %v2384
    %v2386 = vpop.xlane.xlu0 %2385
    %v2387 = vsel %vm506, %v2271, 0.0
    %2388 = vadd.xlane.f32.xlu0 %v2387
    %v2389 = vpop.xlane.xlu0 %2388
    %v2390 = vsel %vm506, %v2272, 0.0
    %2391 = vadd.xlane.f32.xlu0 %v2390
    %v2392 = vpop.xlane.xlu0 %2391
    %v2393 = vmul.f32 %v2115, 0.02
    %v2394 = vmul.f32 %v2118, 0.02
    %v2395 = vmul.f32 %v2121, 0.02
    %v2396 = vmul.f32 %v2124, 0.02
    %v2397 = vmul.f32 %v2127, 0.02
    %v2398 = vmul.f32 %v2130, 0.02
    %v2399 = vmul.f32 %v2133, 0.02
    %v2400 = vmul.f32 %v2136, 0.02
    %v2401 = vmul.f32 %v2139, 0.02
    %v2402 = vmul.f32 %v2142, 0.02
    %v2403 = vmul.f32 %v2145, 0.02
    %v2404 = vmul.f32 %v2148, 0.02
    %v2405 = vmul.f32 %v2151, 0.02
    %v2406 = vmul.f32 %v2154, 0.02
    %v2407 = vmul.f32 %v2157, 0.02
    %v2408 = vmul.f32 %v2160, 0.02
    %v2409 = vmul.f32 %v2163, 0.02
    %v2410 = vmul.f32 %v2166, 0.02
    %v2411 = vmul.f32 %v2169, 0.02
    %v2412 = vmul.f32 %v2172, 0.02
    %v2413 = vmul.f32 %v2175, 0.02
    %v2414 = vmul.f32 %v2178, 0.02
    %v2415 = vmul.f32 %v2181, 0.02
    %v2416 = vmul.f32 %v2184, 0.02
    %v2417 = vmul.f32 %v2187, 0.02
    %v2418 = vmul.f32 %v2190, 0.02
    %v2419 = vmul.f32 %v2193, 0.02
    %v2420 = vmul.f32 %v2196, 0.02
    %v2421 = vmul.f32 %v2199, 0.02
    %v2422 = vmul.f32 %v2202, 0.02
    %v2423 = vmul.f32 %v2205, 0.02
    %v2424 = vmul.f32 %v2208, 0.02
    %v2425 = vmul.f32 %v2211, 0.02
    %v2426 = vmul.f32 %v2214, 0.02
    %v2427 = vmul.f32 %v2217, 0.02
    %v2428 = vmul.f32 %v2220, 0.02
    %v2429 = vmul.f32 %v2223, 0.02
    %v2430 = vmul.f32 %v2226, 0.02
    %v2431 = vmul.f32 %v2229, 0.02
    %v2432 = vmul.f32 %v2232, 0.02
    %v2433 = vadd.f32 %v2393, 1.0
    %v2434 = vadd.f32 %v2394, 1.0
    %v2435 = vadd.f32 %v2395, 1.0
    %v2436 = vadd.f32 %v2396, 1.0
    %v2437 = vadd.f32 %v2397, 1.0
    %v2438 = vadd.f32 %v2398, 1.0
    %v2439 = vadd.f32 %v2399, 1.0
    %v2440 = vadd.f32 %v2400, 1.0
    %v2441 = vadd.f32 %v2401, 1.0
    %v2442 = vadd.f32 %v2402, 1.0
    %v2443 = vadd.f32 %v2403, 1.0
    %v2444 = vadd.f32 %v2404, 1.0
    %v2445 = vadd.f32 %v2405, 1.0
    %v2446 = vadd.f32 %v2406, 1.0
    %v2447 = vadd.f32 %v2407, 1.0
    %v2448 = vadd.f32 %v2408, 1.0
    %v2449 = vadd.f32 %v2409, 1.0
    %v2450 = vadd.f32 %v2410, 1.0
    %v2451 = vadd.f32 %v2411, 1.0
    %v2452 = vadd.f32 %v2412, 1.0
    %v2453 = vadd.f32 %v2413, 1.0
    %v2454 = vadd.f32 %v2414, 1.0
    %v2455 = vadd.f32 %v2415, 1.0
    %v2456 = vadd.f32 %v2416, 1.0
    %v2457 = vadd.f32 %v2417, 1.0
    %v2458 = vadd.f32 %v2418, 1.0
    %v2459 = vadd.f32 %v2419, 1.0
    %v2460 = vadd.f32 %v2420, 1.0
    %v2461 = vadd.f32 %v2421, 1.0
    %v2462 = vadd.f32 %v2422, 1.0
    %v2463 = vadd.f32 %v2423, 1.0
    %v2464 = vadd.f32 %v2424, 1.0
    %v2465 = vadd.f32 %v2425, 1.0
    %v2466 = vadd.f32 %v2426, 1.0
    %v2467 = vadd.f32 %v2427, 1.0
    %v2468 = vadd.f32 %v2428, 1.0
    %v2469 = vadd.f32 %v2429, 1.0
    %v2470 = vadd.f32 %v2430, 1.0
    %v2471 = vadd.f32 %v2431, 1.0
    %v2472 = vadd.f32 %v2432, 1.0
    %v2473 = vmul.f32 %v2275, 0.01
    %v2474 = vmul.f32 %v2278, 0.01
    %v2475 = vmul.f32 %v2281, 0.01
    %v2476 = vmul.f32 %v2284, 0.01
    %v2477 = vmul.f32 %v2287, 0.01
    %v2478 = vmul.f32 %v2290, 0.01
    %v2479 = vmul.f32 %v2293, 0.01
    %v2480 = vmul.f32 %v2296, 0.01
    %v2481 = vmul.f32 %v2299, 0.01
    %v2482 = vmul.f32 %v2302, 0.01
    %v2483 = vmul.f32 %v2305, 0.01
    %v2484 = vmul.f32 %v2308, 0.01
    %v2485 = vmul.f32 %v2311, 0.01
    %v2486 = vmul.f32 %v2314, 0.01
    %v2487 = vmul.f32 %v2317, 0.01
    %v2488 = vmul.f32 %v2320, 0.01
    %v2489 = vmul.f32 %v2323, 0.01
    %v2490 = vmul.f32 %v2326, 0.01
    %v2491 = vmul.f32 %v2329, 0.01
    %v2492 = vmul.f32 %v2332, 0.01
    %v2493 = vmul.f32 %v2335, 0.01
    %v2494 = vmul.f32 %v2338, 0.01
    %v2495 = vmul.f32 %v2341, 0.01
    %v2496 = vmul.f32 %v2344, 0.01
    %v2497 = vmul.f32 %v2347, 0.01
    %v2498 = vmul.f32 %v2350, 0.01
    %v2499 = vmul.f32 %v2353, 0.01
    %v2500 = vmul.f32 %v2356, 0.01
    %v2501 = vmul.f32 %v2359, 0.01
    %v2502 = vmul.f32 %v2362, 0.01
    %v2503 = vmul.f32 %v2365, 0.01
    %v2504 = vmul.f32 %v2368, 0.01
    %v2505 = vmul.f32 %v2371, 0.01
    %v2506 = vmul.f32 %v2374, 0.01
    %v2507 = vmul.f32 %v2377, 0.01
    %v2508 = vmul.f32 %v2380, 0.01
    %v2509 = vmul.f32 %v2383, 0.01
    %v2510 = vmul.f32 %v2386, 0.01
    %v2511 = vmul.f32 %v2389, 0.01
    %v2512 = vmul.f32 %v2392, 0.01
    %v2513 = vadd.f32 %v2433, %v2473
    %v2514 = vadd.f32 %v2434, %v2474
    %v2515 = vadd.f32 %v2435, %v2475
    %v2516 = vadd.f32 %v2436, %v2476
    %v2517 = vadd.f32 %v2437, %v2477
    %v2518 = vadd.f32 %v2438, %v2478
    %v2519 = vadd.f32 %v2439, %v2479
    %v2520 = vadd.f32 %v2440, %v2480
    %v2521 = vadd.f32 %v2441, %v2481
    %v2522 = vadd.f32 %v2442, %v2482
    %v2523 = vadd.f32 %v2443, %v2483
    %v2524 = vadd.f32 %v2444, %v2484
    %v2525 = vadd.f32 %v2445, %v2485
    %v2526 = vadd.f32 %v2446, %v2486
    %v2527 = vadd.f32 %v2447, %v2487
    %v2528 = vadd.f32 %v2448, %v2488
    %v2529 = vadd.f32 %v2449, %v2489
    %v2530 = vadd.f32 %v2450, %v2490
    %v2531 = vadd.f32 %v2451, %v2491
    %v2532 = vadd.f32 %v2452, %v2492
    %v2533 = vadd.f32 %v2453, %v2493
    %v2534 = vadd.f32 %v2454, %v2494
    %v2535 = vadd.f32 %v2455, %v2495
    %v2536 = vadd.f32 %v2456, %v2496
    %v2537 = vadd.f32 %v2457, %v2497
    %v2538 = vadd.f32 %v2458, %v2498
    %v2539 = vadd.f32 %v2459, %v2499
    %v2540 = vadd.f32 %v2460, %v2500
    %v2541 = vadd.f32 %v2461, %v2501
    %v2542 = vadd.f32 %v2462, %v2502
    %v2543 = vadd.f32 %v2463, %v2503
    %v2544 = vadd.f32 %v2464, %v2504
    %v2545 = vadd.f32 %v2465, %v2505
    %v2546 = vadd.f32 %v2466, %v2506
    %v2547 = vadd.f32 %v2467, %v2507
    %v2548 = vadd.f32 %v2468, %v2508
    %v2549 = vadd.f32 %v2469, %v2509
    %v2550 = vadd.f32 %v2470, %v2510
    %v2551 = vadd.f32 %v2471, %v2511
    %v2552 = vadd.f32 %v2472, %v2512
    %v2553 = vmul.f32 %v2513, %v910
    %v2554 = vmul.f32 %v2514, %v910
    %v2555 = vmul.f32 %v2515, %v910
    %v2556 = vmul.f32 %v2516, %v910
    %v2557 = vmul.f32 %v2517, %v910
    %v2558 = vmul.f32 %v2518, %v910
    %v2559 = vmul.f32 %v2519, %v910
    %v2560 = vmul.f32 %v2520, %v910
    %v2561 = vmul.f32 %v2521, %v910
    %v2562 = vmul.f32 %v2522, %v910
    %v2563 = vmul.f32 %v2523, %v910
    %v2564 = vmul.f32 %v2524, %v910
    %v2565 = vmul.f32 %v2525, %v910
    %v2566 = vmul.f32 %v2526, %v910
    %v2567 = vmul.f32 %v2527, %v910
    %v2568 = vmul.f32 %v2528, %v910
    %v2569 = vmul.f32 %v2529, %v910
    %v2570 = vmul.f32 %v2530, %v910
    %v2571 = vmul.f32 %v2531, %v910
    %v2572 = vmul.f32 %v2532, %v910
    %v2573 = vmul.f32 %v2533, %v910
    %v2574 = vmul.f32 %v2534, %v910
    %v2575 = vmul.f32 %v2535, %v910
    %v2576 = vmul.f32 %v2536, %v910
    %v2577 = vmul.f32 %v2537, %v910
    %v2578 = vmul.f32 %v2538, %v910
    %v2579 = vmul.f32 %v2539, %v910
    %v2580 = vmul.f32 %v2540, %v910
    %v2581 = vmul.f32 %v2541, %v910
    %v2582 = vmul.f32 %v2542, %v910
    %v2583 = vmul.f32 %v2543, %v910
    %v2584 = vmul.f32 %v2544, %v910
    %v2585 = vmul.f32 %v2545, %v910
    %v2586 = vmul.f32 %v2546, %v910
    %v2587 = vmul.f32 %v2547, %v910
    %v2588 = vmul.f32 %v2548, %v910
    %v2589 = vmul.f32 %v2549, %v910
    %v2590 = vmul.f32 %v2550, %v910
    %v2591 = vmul.f32 %v2551, %v910
    %v2592 = vmul.f32 %v2552, %v910
    %v2593 = vmul.f32 %v1228, %v2033
    %v2594 = vmul.f32 %v1228, %v2034
    %v2595 = vmul.f32 %v1228, %v2035
    %v2596 = vmul.f32 %v1228, %v2036
    %v2597 = vmul.f32 %v1228, %v2037
    %v2598 = vmul.f32 %v1228, %v2038
    %v2599 = vmul.f32 %v1228, %v2039
    %v2600 = vmul.f32 %v1228, %v2040
    %v2601 = vmul.f32 %v1228, %v2041
    %v2602 = vmul.f32 %v1228, %v2042
    %v2603 = vmul.f32 %v1228, %v2043
    %v2604 = vmul.f32 %v1228, %v2044
    %v2605 = vmul.f32 %v1228, %v2045
    %v2606 = vmul.f32 %v1228, %v2046
    %v2607 = vmul.f32 %v1228, %v2047
    %v2608 = vmul.f32 %v1228, %v2048
    %v2609 = vmul.f32 %v1228, %v2049
    %v2610 = vmul.f32 %v1228, %v2050
    %v2611 = vmul.f32 %v1228, %v2051
    %v2612 = vmul.f32 %v1228, %v2052
    %v2613 = vmul.f32 %v1228, %v2053
    %v2614 = vmul.f32 %v1228, %v2054
    %v2615 = vmul.f32 %v1228, %v2055
    %v2616 = vmul.f32 %v1228, %v2056
    %v2617 = vmul.f32 %v1228, %v2057
    %v2618 = vmul.f32 %v1228, %v2058
    %v2619 = vmul.f32 %v1228, %v2059
    %v2620 = vmul.f32 %v1228, %v2060
    %v2621 = vmul.f32 %v1228, %v2061
    %v2622 = vmul.f32 %v1228, %v2062
    %v2623 = vmul.f32 %v1228, %v2063
    %v2624 = vmul.f32 %v1228, %v2064
    %v2625 = vmul.f32 %v1228, %v2065
    %v2626 = vmul.f32 %v1228, %v2066
    %v2627 = vmul.f32 %v1228, %v2067
    %v2628 = vmul.f32 %v1228, %v2068
    %v2629 = vmul.f32 %v1228, %v2069
    %v2630 = vmul.f32 %v1228, %v2070
    %v2631 = vmul.f32 %v1228, %v2071
    %v2632 = vmul.f32 %v1228, %v2072
    %v2633 = vadd.f32 %v2553, %v2593
    %v2634 = vadd.f32 %v2554, %v2594
    %v2635 = vadd.f32 %v2555, %v2595
    %v2636 = vadd.f32 %v2556, %v2596
    %v2637 = vadd.f32 %v2557, %v2597
    %v2638 = vadd.f32 %v2558, %v2598
    %v2639 = vadd.f32 %v2559, %v2599
    %v2640 = vadd.f32 %v2560, %v2600
    %v2641 = vadd.f32 %v2561, %v2601
    %v2642 = vadd.f32 %v2562, %v2602
    %v2643 = vadd.f32 %v2563, %v2603
    %v2644 = vadd.f32 %v2564, %v2604
    %v2645 = vadd.f32 %v2565, %v2605
    %v2646 = vadd.f32 %v2566, %v2606
    %v2647 = vadd.f32 %v2567, %v2607
    %v2648 = vadd.f32 %v2568, %v2608
    %v2649 = vadd.f32 %v2569, %v2609
    %v2650 = vadd.f32 %v2570, %v2610
    %v2651 = vadd.f32 %v2571, %v2611
    %v2652 = vadd.f32 %v2572, %v2612
    %v2653 = vadd.f32 %v2573, %v2613
    %v2654 = vadd.f32 %v2574, %v2614
    %v2655 = vadd.f32 %v2575, %v2615
    %v2656 = vadd.f32 %v2576, %v2616
    %v2657 = vadd.f32 %v2577, %v2617
    %v2658 = vadd.f32 %v2578, %v2618
    %v2659 = vadd.f32 %v2579, %v2619
    %v2660 = vadd.f32 %v2580, %v2620
    %v2661 = vadd.f32 %v2581, %v2621
    %v2662 = vadd.f32 %v2582, %v2622
    %v2663 = vadd.f32 %v2583, %v2623
    %v2664 = vadd.f32 %v2584, %v2624
    %v2665 = vadd.f32 %v2585, %v2625
    %v2666 = vadd.f32 %v2586, %v2626
    %v2667 = vadd.f32 %v2587, %v2627
    %v2668 = vadd.f32 %v2588, %v2628
    %v2669 = vadd.f32 %v2589, %v2629
    %v2670 = vadd.f32 %v2590, %v2630
    %v2671 = vadd.f32 %v2591, %v2631
    %v2672 = vadd.f32 %v2592, %v2632
    %v2673 = vmul.f32 %v1226, 0.0001
    %v2674 = vmul.f32 %v2673, %v2275
    %v2675 = vmul.f32 %v2673, %v2278
    %v2676 = vmul.f32 %v2673, %v2281
    %v2677 = vmul.f32 %v2673, %v2284
    %v2678 = vmul.f32 %v2673, %v2287
    %v2679 = vmul.f32 %v2673, %v2290
    %v2680 = vmul.f32 %v2673, %v2293
    %v2681 = vmul.f32 %v2673, %v2296
    %v2682 = vmul.f32 %v2673, %v2299
    %v2683 = vmul.f32 %v2673, %v2302
    %v2684 = vmul.f32 %v2673, %v2305
    %v2685 = vmul.f32 %v2673, %v2308
    %v2686 = vmul.f32 %v2673, %v2311
    %v2687 = vmul.f32 %v2673, %v2314
    %v2688 = vmul.f32 %v2673, %v2317
    %v2689 = vmul.f32 %v2673, %v2320
    %v2690 = vmul.f32 %v2673, %v2323
    %v2691 = vmul.f32 %v2673, %v2326
    %v2692 = vmul.f32 %v2673, %v2329
    %v2693 = vmul.f32 %v2673, %v2332
    %v2694 = vmul.f32 %v2673, %v2335
    %v2695 = vmul.f32 %v2673, %v2338
    %v2696 = vmul.f32 %v2673, %v2341
    %v2697 = vmul.f32 %v2673, %v2344
    %v2698 = vmul.f32 %v2673, %v2347
    %v2699 = vmul.f32 %v2673, %v2350
    %v2700 = vmul.f32 %v2673, %v2353
    %v2701 = vmul.f32 %v2673, %v2356
    %v2702 = vmul.f32 %v2673, %v2359
    %v2703 = vmul.f32 %v2673, %v2362
    %v2704 = vmul.f32 %v2673, %v2365
    %v2705 = vmul.f32 %v2673, %v2368
    %v2706 = vmul.f32 %v2673, %v2371
    %v2707 = vmul.f32 %v2673, %v2374
    %v2708 = vmul.f32 %v2673, %v2377
    %v2709 = vmul.f32 %v2673, %v2380
    %v2710 = vmul.f32 %v2673, %v2383
    %v2711 = vmul.f32 %v2673, %v2386
    %v2712 = vmul.f32 %v2673, %v2389
    %v2713 = vmul.f32 %v2673, %v2392
    %v2714 = vadd.f32 %v2433, %v2674
    %v2715 = vadd.f32 %v2434, %v2675
    %v2716 = vadd.f32 %v2435, %v2676
    %v2717 = vadd.f32 %v2436, %v2677
    %v2718 = vadd.f32 %v2437, %v2678
    %v2719 = vadd.f32 %v2438, %v2679
    %v2720 = vadd.f32 %v2439, %v2680
    %v2721 = vadd.f32 %v2440, %v2681
    %v2722 = vadd.f32 %v2441, %v2682
    %v2723 = vadd.f32 %v2442, %v2683
    %v2724 = vadd.f32 %v2443, %v2684
    %v2725 = vadd.f32 %v2444, %v2685
    %v2726 = vadd.f32 %v2445, %v2686
    %v2727 = vadd.f32 %v2446, %v2687
    %v2728 = vadd.f32 %v2447, %v2688
    %v2729 = vadd.f32 %v2448, %v2689
    %v2730 = vadd.f32 %v2449, %v2690
    %v2731 = vadd.f32 %v2450, %v2691
    %v2732 = vadd.f32 %v2451, %v2692
    %v2733 = vadd.f32 %v2452, %v2693
    %v2734 = vadd.f32 %v2453, %v2694
    %v2735 = vadd.f32 %v2454, %v2695
    %v2736 = vadd.f32 %v2455, %v2696
    %v2737 = vadd.f32 %v2456, %v2697
    %v2738 = vadd.f32 %v2457, %v2698
    %v2739 = vadd.f32 %v2458, %v2699
    %v2740 = vadd.f32 %v2459, %v2700
    %v2741 = vadd.f32 %v2460, %v2701
    %v2742 = vadd.f32 %v2461, %v2702
    %v2743 = vadd.f32 %v2462, %v2703
    %v2744 = vadd.f32 %v2463, %v2704
    %v2745 = vadd.f32 %v2464, %v2705
    %v2746 = vadd.f32 %v2465, %v2706
    %v2747 = vadd.f32 %v2466, %v2707
    %v2748 = vadd.f32 %v2467, %v2708
    %v2749 = vadd.f32 %v2468, %v2709
    %v2750 = vadd.f32 %v2469, %v2710
    %v2751 = vadd.f32 %v2470, %v2711
    %v2752 = vadd.f32 %v2471, %v2712
    %v2753 = vadd.f32 %v2472, %v2713
    %v2754 = vmax.f32 %v2714, 1e-15
    %v2755 = vmax.f32 %v2715, 1e-15
    %v2756 = vmax.f32 %v2716, 1e-15
    %v2757 = vmax.f32 %v2717, 1e-15
    %v2758 = vmax.f32 %v2718, 1e-15
    %v2759 = vmax.f32 %v2719, 1e-15
    %v2760 = vmax.f32 %v2720, 1e-15
    %v2761 = vmax.f32 %v2721, 1e-15
    %v2762 = vmax.f32 %v2722, 1e-15
    %v2763 = vmax.f32 %v2723, 1e-15
    %v2764 = vmax.f32 %v2724, 1e-15
    %v2765 = vmax.f32 %v2725, 1e-15
    %v2766 = vmax.f32 %v2726, 1e-15
    %v2767 = vmax.f32 %v2727, 1e-15
    %v2768 = vmax.f32 %v2728, 1e-15
    %v2769 = vmax.f32 %v2729, 1e-15
    %v2770 = vmax.f32 %v2730, 1e-15
    %v2771 = vmax.f32 %v2731, 1e-15
    %v2772 = vmax.f32 %v2732, 1e-15
    %v2773 = vmax.f32 %v2733, 1e-15
    %v2774 = vmax.f32 %v2734, 1e-15
    %v2775 = vmax.f32 %v2735, 1e-15
    %v2776 = vmax.f32 %v2736, 1e-15
    %v2777 = vmax.f32 %v2737, 1e-15
    %v2778 = vmax.f32 %v2738, 1e-15
    %v2779 = vmax.f32 %v2739, 1e-15
    %v2780 = vmax.f32 %v2740, 1e-15
    %v2781 = vmax.f32 %v2741, 1e-15
    %v2782 = vmax.f32 %v2742, 1e-15
    %v2783 = vmax.f32 %v2743, 1e-15
    %v2784 = vmax.f32 %v2744, 1e-15
    %v2785 = vmax.f32 %v2745, 1e-15
    %v2786 = vmax.f32 %v2746, 1e-15
    %v2787 = vmax.f32 %v2747, 1e-15
    %v2788 = vmax.f32 %v2748, 1e-15
    %v2789 = vmax.f32 %v2749, 1e-15
    %v2790 = vmax.f32 %v2750, 1e-15
    %v2791 = vmax.f32 %v2751, 1e-15
    %v2792 = vmax.f32 %v2752, 1e-15
    %v2793 = vmax.f32 %v2753, 1e-15
    %v2794 = vrcp.pop %v2754
    %v2795 = vrcp.pop %v2755
    %v2796 = vrcp.pop %v2756
    %v2797 = vrcp.pop %v2757
    %v2798 = vrcp.pop %v2758
    %v2799 = vrcp.pop %v2759
    %v2800 = vrcp.pop %v2760
    %v2801 = vrcp.pop %v2761
    %v2802 = vrcp.pop %v2762
    %v2803 = vrcp.pop %v2763
    %v2804 = vrcp.pop %v2764
    %v2805 = vrcp.pop %v2765
    %v2806 = vrcp.pop %v2766
    %v2807 = vrcp.pop %v2767
    %v2808 = vrcp.pop %v2768
    %v2809 = vrcp.pop %v2769
    %v2810 = vrcp.pop %v2770
    %v2811 = vrcp.pop %v2771
    %v2812 = vrcp.pop %v2772
    %v2813 = vrcp.pop %v2773
    %v2814 = vrcp.pop %v2774
    %v2815 = vrcp.pop %v2775
    %v2816 = vrcp.pop %v2776
    %v2817 = vrcp.pop %v2777
    %v2818 = vrcp.pop %v2778
    %v2819 = vrcp.pop %v2779
    %v2820 = vrcp.pop %v2780
    %v2821 = vrcp.pop %v2781
    %v2822 = vrcp.pop %v2782
    %v2823 = vrcp.pop %v2783
    %v2824 = vrcp.pop %v2784
    %v2825 = vrcp.pop %v2785
    %v2826 = vrcp.pop %v2786
    %v2827 = vrcp.pop %v2787
    %v2828 = vrcp.pop %v2788
    %v2829 = vrcp.pop %v2789
    %v2830 = vrcp.pop %v2790
    %v2831 = vrcp.pop %v2791
    %v2832 = vrcp.pop %v2792
    %v2833 = vrcp.pop %v2793
    %v2834 = vmul.f32 %v2633, %v2794
    %v2835 = vmul.f32 %v2634, %v2795
    %v2836 = vmul.f32 %v2635, %v2796
    %v2837 = vmul.f32 %v2636, %v2797
    %v2838 = vmul.f32 %v2637, %v2798
    %v2839 = vmul.f32 %v2638, %v2799
    %v2840 = vmul.f32 %v2639, %v2800
    %v2841 = vmul.f32 %v2640, %v2801
    %v2842 = vmul.f32 %v2641, %v2802
    %v2843 = vmul.f32 %v2642, %v2803
    %v2844 = vmul.f32 %v2643, %v2804
    %v2845 = vmul.f32 %v2644, %v2805
    %v2846 = vmul.f32 %v2645, %v2806
    %v2847 = vmul.f32 %v2646, %v2807
    %v2848 = vmul.f32 %v2647, %v2808
    %v2849 = vmul.f32 %v2648, %v2809
    %v2850 = vmul.f32 %v2649, %v2810
    %v2851 = vmul.f32 %v2650, %v2811
    %v2852 = vmul.f32 %v2651, %v2812
    %v2853 = vmul.f32 %v2652, %v2813
    %v2854 = vmul.f32 %v2653, %v2814
    %v2855 = vmul.f32 %v2654, %v2815
    %v2856 = vmul.f32 %v2655, %v2816
    %v2857 = vmul.f32 %v2656, %v2817
    %v2858 = vmul.f32 %v2657, %v2818
    %v2859 = vmul.f32 %v2658, %v2819
    %v2860 = vmul.f32 %v2659, %v2820
    %v2861 = vmul.f32 %v2660, %v2821
    %v2862 = vmul.f32 %v2661, %v2822
    %v2863 = vmul.f32 %v2662, %v2823
    %v2864 = vmul.f32 %v2663, %v2824
    %v2865 = vmul.f32 %v2664, %v2825
    %v2866 = vmul.f32 %v2665, %v2826
    %v2867 = vmul.f32 %v2666, %v2827
    %v2868 = vmul.f32 %v2667, %v2828
    %v2869 = vmul.f32 %v2668, %v2829
    %v2870 = vmul.f32 %v2669, %v2830
    %v2871 = vmul.f32 %v2670, %v2831
    %v2872 = vmul.f32 %v2671, %v2832
    %v2873 = vmul.f32 %v2672, %v2833
    %v2874 = vmul.f32 %v2834, %v2834
    %v2875 = vmul.f32 %v2835, %v2835
    %v2876 = vmul.f32 %v2836, %v2836
    %v2877 = vmul.f32 %v2837, %v2837
    %v2878 = vmul.f32 %v2838, %v2838
    %v2879 = vmul.f32 %v2839, %v2839
    %v2880 = vmul.f32 %v2840, %v2840
    %v2881 = vmul.f32 %v2841, %v2841
    %v2882 = vmul.f32 %v2842, %v2842
    %v2883 = vmul.f32 %v2843, %v2843
    %v2884 = vmul.f32 %v2844, %v2844
    %v2885 = vmul.f32 %v2845, %v2845
    %v2886 = vmul.f32 %v2846, %v2846
    %v2887 = vmul.f32 %v2847, %v2847
    %v2888 = vmul.f32 %v2848, %v2848
    %v2889 = vmul.f32 %v2849, %v2849
    %v2890 = vmul.f32 %v2850, %v2850
    %v2891 = vmul.f32 %v2851, %v2851
    %v2892 = vmul.f32 %v2852, %v2852
    %v2893 = vmul.f32 %v2853, %v2853
    %v2894 = vmul.f32 %v2854, %v2854
    %v2895 = vmul.f32 %v2855, %v2855
    %v2896 = vmul.f32 %v2856, %v2856
    %v2897 = vmul.f32 %v2857, %v2857
    %v2898 = vmul.f32 %v2858, %v2858
    %v2899 = vmul.f32 %v2859, %v2859
    %v2900 = vmul.f32 %v2860, %v2860
    %v2901 = vmul.f32 %v2861, %v2861
    %v2902 = vmul.f32 %v2862, %v2862
    %v2903 = vmul.f32 %v2863, %v2863
    %v2904 = vmul.f32 %v2864, %v2864
    %v2905 = vmul.f32 %v2865, %v2865
    %v2906 = vmul.f32 %v2866, %v2866
    %v2907 = vmul.f32 %v2867, %v2867
    %v2908 = vmul.f32 %v2868, %v2868
    %v2909 = vmul.f32 %v2869, %v2869
    %v2910 = vmul.f32 %v2870, %v2870
    %v2911 = vmul.f32 %v2871, %v2871
    %v2912 = vmul.f32 %v2872, %v2872
    %v2913 = vmul.f32 %v2873, %v2873
    %v2914 = vsel %vm506, %v2874, 0.0
    %2915 = vadd.xlane.f32.xlu0 %v2914
    %v2916 = vpop.xlane.xlu0 %2915
    %v2917 = vsel %vm506, %v2875, 0.0
    %2918 = vadd.xlane.f32.xlu0 %v2917
    %v2919 = vpop.xlane.xlu0 %2918
    %v2920 = vsel %vm506, %v2876, 0.0
    %2921 = vadd.xlane.f32.xlu0 %v2920
    %v2922 = vpop.xlane.xlu0 %2921
    %v2923 = vsel %vm506, %v2877, 0.0
    %2924 = vadd.xlane.f32.xlu0 %v2923
    %v2925 = vpop.xlane.xlu0 %2924
    %v2926 = vsel %vm506, %v2878, 0.0
    %2927 = vadd.xlane.f32.xlu0 %v2926
    %v2928 = vpop.xlane.xlu0 %2927
    %v2929 = vsel %vm506, %v2879, 0.0
    %2930 = vadd.xlane.f32.xlu0 %v2929
    %v2931 = vpop.xlane.xlu0 %2930
    %v2932 = vsel %vm506, %v2880, 0.0
    %2933 = vadd.xlane.f32.xlu0 %v2932
    %v2934 = vpop.xlane.xlu0 %2933
    %v2935 = vsel %vm506, %v2881, 0.0
    %2936 = vadd.xlane.f32.xlu0 %v2935
    %v2937 = vpop.xlane.xlu0 %2936
    %v2938 = vsel %vm506, %v2882, 0.0
    %2939 = vadd.xlane.f32.xlu0 %v2938
    %v2940 = vpop.xlane.xlu0 %2939
    %v2941 = vsel %vm506, %v2883, 0.0
    %2942 = vadd.xlane.f32.xlu0 %v2941
    %v2943 = vpop.xlane.xlu0 %2942
    %v2944 = vsel %vm506, %v2884, 0.0
    %2945 = vadd.xlane.f32.xlu0 %v2944
    %v2946 = vpop.xlane.xlu0 %2945
    %v2947 = vsel %vm506, %v2885, 0.0
    %2948 = vadd.xlane.f32.xlu0 %v2947
    %v2949 = vpop.xlane.xlu0 %2948
    %v2950 = vsel %vm506, %v2886, 0.0
    %2951 = vadd.xlane.f32.xlu0 %v2950
    %v2952 = vpop.xlane.xlu0 %2951
    %v2953 = vsel %vm506, %v2887, 0.0
    %2954 = vadd.xlane.f32.xlu0 %v2953
    %v2955 = vpop.xlane.xlu0 %2954
    %v2956 = vsel %vm506, %v2888, 0.0
    %2957 = vadd.xlane.f32.xlu0 %v2956
    %v2958 = vpop.xlane.xlu0 %2957
    %v2959 = vsel %vm506, %v2889, 0.0
    %2960 = vadd.xlane.f32.xlu0 %v2959
    %v2961 = vpop.xlane.xlu0 %2960
    %v2962 = vsel %vm506, %v2890, 0.0
    %2963 = vadd.xlane.f32.xlu0 %v2962
    %v2964 = vpop.xlane.xlu0 %2963
    %v2965 = vsel %vm506, %v2891, 0.0
    %2966 = vadd.xlane.f32.xlu0 %v2965
    %v2967 = vpop.xlane.xlu0 %2966
    %v2968 = vsel %vm506, %v2892, 0.0
    %2969 = vadd.xlane.f32.xlu0 %v2968
    %v2970 = vpop.xlane.xlu0 %2969
    %v2971 = vsel %vm506, %v2893, 0.0
    %2972 = vadd.xlane.f32.xlu0 %v2971
    %v2973 = vpop.xlane.xlu0 %2972
    %v2974 = vsel %vm506, %v2894, 0.0
    %2975 = vadd.xlane.f32.xlu0 %v2974
    %v2976 = vpop.xlane.xlu0 %2975
    %v2977 = vsel %vm506, %v2895, 0.0
    %2978 = vadd.xlane.f32.xlu0 %v2977
    %v2979 = vpop.xlane.xlu0 %2978
    %v2980 = vsel %vm506, %v2896, 0.0
    %2981 = vadd.xlane.f32.xlu0 %v2980
    %v2982 = vpop.xlane.xlu0 %2981
    %v2983 = vsel %vm506, %v2897, 0.0
    %2984 = vadd.xlane.f32.xlu0 %v2983
    %v2985 = vpop.xlane.xlu0 %2984
    %v2986 = vsel %vm506, %v2898, 0.0
    %2987 = vadd.xlane.f32.xlu0 %v2986
    %v2988 = vpop.xlane.xlu0 %2987
    %v2989 = vsel %vm506, %v2899, 0.0
    %2990 = vadd.xlane.f32.xlu0 %v2989
    %v2991 = vpop.xlane.xlu0 %2990
    %v2992 = vsel %vm506, %v2900, 0.0
    %2993 = vadd.xlane.f32.xlu0 %v2992
    %v2994 = vpop.xlane.xlu0 %2993
    %v2995 = vsel %vm506, %v2901, 0.0
    %2996 = vadd.xlane.f32.xlu0 %v2995
    %v2997 = vpop.xlane.xlu0 %2996
    %v2998 = vsel %vm506, %v2902, 0.0
    %2999 = vadd.xlane.f32.xlu0 %v2998
    %v3000 = vpop.xlane.xlu0 %2999
    %v3001 = vsel %vm506, %v2903, 0.0
    %3002 = vadd.xlane.f32.xlu0 %v3001
    %v3003 = vpop.xlane.xlu0 %3002
    %v3004 = vsel %vm506, %v2904, 0.0
    %3005 = vadd.xlane.f32.xlu0 %v3004
    %v3006 = vpop.xlane.xlu0 %3005
    %v3007 = vsel %vm506, %v2905, 0.0
    %3008 = vadd.xlane.f32.xlu0 %v3007
    %v3009 = vpop.xlane.xlu0 %3008
    %v3010 = vsel %vm506, %v2906, 0.0
    %3011 = vadd.xlane.f32.xlu0 %v3010
    %v3012 = vpop.xlane.xlu0 %3011
    %v3013 = vsel %vm506, %v2907, 0.0
    %3014 = vadd.xlane.f32.xlu0 %v3013
    %v3015 = vpop.xlane.xlu0 %3014
    %v3016 = vsel %vm506, %v2908, 0.0
    %3017 = vadd.xlane.f32.xlu0 %v3016
    %v3018 = vpop.xlane.xlu0 %3017
    %v3019 = vsel %vm506, %v2909, 0.0
    %3020 = vadd.xlane.f32.xlu0 %v3019
    %v3021 = vpop.xlane.xlu0 %3020
    %v3022 = vsel %vm506, %v2910, 0.0
    %3023 = vadd.xlane.f32.xlu0 %v3022
    %v3024 = vpop.xlane.xlu0 %3023
    %v3025 = vsel %vm506, %v2911, 0.0
    %3026 = vadd.xlane.f32.xlu0 %v3025
    %v3027 = vpop.xlane.xlu0 %3026
    %v3028 = vsel %vm506, %v2912, 0.0
    %3029 = vadd.xlane.f32.xlu0 %v3028
    %v3030 = vpop.xlane.xlu0 %3029
    %v3031 = vsel %vm506, %v2913, 0.0
    %3032 = vadd.xlane.f32.xlu0 %v3031
    %v3033 = vpop.xlane.xlu0 %3032
    %v3034 = vmul.f32 %v2834, 2.0
    %v3035 = vmul.f32 %v2835, 2.0
    %v3036 = vmul.f32 %v2836, 2.0
    %v3037 = vmul.f32 %v2837, 2.0
    %v3038 = vmul.f32 %v2838, 2.0
    %v3039 = vmul.f32 %v2839, 2.0
    %v3040 = vmul.f32 %v2840, 2.0
    %v3041 = vmul.f32 %v2841, 2.0
    %v3042 = vmul.f32 %v2842, 2.0
    %v3043 = vmul.f32 %v2843, 2.0
    %v3044 = vmul.f32 %v2844, 2.0
    %v3045 = vmul.f32 %v2845, 2.0
    %v3046 = vmul.f32 %v2846, 2.0
    %v3047 = vmul.f32 %v2847, 2.0
    %v3048 = vmul.f32 %v2848, 2.0
    %v3049 = vmul.f32 %v2849, 2.0
    %v3050 = vmul.f32 %v2850, 2.0
    %v3051 = vmul.f32 %v2851, 2.0
    %v3052 = vmul.f32 %v2852, 2.0
    %v3053 = vmul.f32 %v2853, 2.0
    %v3054 = vmul.f32 %v2854, 2.0
    %v3055 = vmul.f32 %v2855, 2.0
    %v3056 = vmul.f32 %v2856, 2.0
    %v3057 = vmul.f32 %v2857, 2.0
    %v3058 = vmul.f32 %v2858, 2.0
    %v3059 = vmul.f32 %v2859, 2.0
    %v3060 = vmul.f32 %v2860, 2.0
    %v3061 = vmul.f32 %v2861, 2.0
    %v3062 = vmul.f32 %v2862, 2.0
    %v3063 = vmul.f32 %v2863, 2.0
    %v3064 = vmul.f32 %v2864, 2.0
    %v3065 = vmul.f32 %v2865, 2.0
    %v3066 = vmul.f32 %v2866, 2.0
    %v3067 = vmul.f32 %v2867, 2.0
    %v3068 = vmul.f32 %v2868, 2.0
    %v3069 = vmul.f32 %v2869, 2.0
    %v3070 = vmul.f32 %v2870, 2.0
    %v3071 = vmul.f32 %v2871, 2.0
    %v3072 = vmul.f32 %v2872, 2.0
    %v3073 = vmul.f32 %v2873, 2.0
    %v3074 = vmul.f32 %v2916, 0.01
    %v3075 = vmul.f32 %v2919, 0.01
    %v3076 = vmul.f32 %v2922, 0.01
    %v3077 = vmul.f32 %v2925, 0.01
    %v3078 = vmul.f32 %v2928, 0.01
    %v3079 = vmul.f32 %v2931, 0.01
    %v3080 = vmul.f32 %v2934, 0.01
    %v3081 = vmul.f32 %v2937, 0.01
    %v3082 = vmul.f32 %v2940, 0.01
    %v3083 = vmul.f32 %v2943, 0.01
    %v3084 = vmul.f32 %v2946, 0.01
    %v3085 = vmul.f32 %v2949, 0.01
    %v3086 = vmul.f32 %v2952, 0.01
    %v3087 = vmul.f32 %v2955, 0.01
    %v3088 = vmul.f32 %v2958, 0.01
    %v3089 = vmul.f32 %v2961, 0.01
    %v3090 = vmul.f32 %v2964, 0.01
    %v3091 = vmul.f32 %v2967, 0.01
    %v3092 = vmul.f32 %v2970, 0.01
    %v3093 = vmul.f32 %v2973, 0.01
    %v3094 = vmul.f32 %v2976, 0.01
    %v3095 = vmul.f32 %v2979, 0.01
    %v3096 = vmul.f32 %v2982, 0.01
    %v3097 = vmul.f32 %v2985, 0.01
    %v3098 = vmul.f32 %v2988, 0.01
    %v3099 = vmul.f32 %v2991, 0.01
    %v3100 = vmul.f32 %v2994, 0.01
    %v3101 = vmul.f32 %v2997, 0.01
    %v3102 = vmul.f32 %v3000, 0.01
    %v3103 = vmul.f32 %v3003, 0.01
    %v3104 = vmul.f32 %v3006, 0.01
    %v3105 = vmul.f32 %v3009, 0.01
    %v3106 = vmul.f32 %v3012, 0.01
    %v3107 = vmul.f32 %v3015, 0.01
    %v3108 = vmul.f32 %v3018, 0.01
    %v3109 = vmul.f32 %v3021, 0.01
    %v3110 = vmul.f32 %v3024, 0.01
    %v3111 = vmul.f32 %v3027, 0.01
    %v3112 = vmul.f32 %v3030, 0.01
    %v3113 = vmul.f32 %v3033, 0.01
    %v3114 = vadd.f32 %v3074, 1.0
    %v3115 = vadd.f32 %v3075, 1.0
    %v3116 = vadd.f32 %v3076, 1.0
    %v3117 = vadd.f32 %v3077, 1.0
    %v3118 = vadd.f32 %v3078, 1.0
    %v3119 = vadd.f32 %v3079, 1.0
    %v3120 = vadd.f32 %v3080, 1.0
    %v3121 = vadd.f32 %v3081, 1.0
    %v3122 = vadd.f32 %v3082, 1.0
    %v3123 = vadd.f32 %v3083, 1.0
    %v3124 = vadd.f32 %v3084, 1.0
    %v3125 = vadd.f32 %v3085, 1.0
    %v3126 = vadd.f32 %v3086, 1.0
    %v3127 = vadd.f32 %v3087, 1.0
    %v3128 = vadd.f32 %v3088, 1.0
    %v3129 = vadd.f32 %v3089, 1.0
    %v3130 = vadd.f32 %v3090, 1.0
    %v3131 = vadd.f32 %v3091, 1.0
    %v3132 = vadd.f32 %v3092, 1.0
    %v3133 = vadd.f32 %v3093, 1.0
    %v3134 = vadd.f32 %v3094, 1.0
    %v3135 = vadd.f32 %v3095, 1.0
    %v3136 = vadd.f32 %v3096, 1.0
    %v3137 = vadd.f32 %v3097, 1.0
    %v3138 = vadd.f32 %v3098, 1.0
    %v3139 = vadd.f32 %v3099, 1.0
    %v3140 = vadd.f32 %v3100, 1.0
    %v3141 = vadd.f32 %v3101, 1.0
    %v3142 = vadd.f32 %v3102, 1.0
    %v3143 = vadd.f32 %v3103, 1.0
    %v3144 = vadd.f32 %v3104, 1.0
    %v3145 = vadd.f32 %v3105, 1.0
    %v3146 = vadd.f32 %v3106, 1.0
    %v3147 = vadd.f32 %v3107, 1.0
    %v3148 = vadd.f32 %v3108, 1.0
    %v3149 = vadd.f32 %v3109, 1.0
    %v3150 = vadd.f32 %v3110, 1.0
    %v3151 = vadd.f32 %v3111, 1.0
    %v3152 = vadd.f32 %v3112, 1.0
    %v3153 = vadd.f32 %v3113, 1.0
    %v3154 = vrcp.pop %v3114
    %v3155 = vrcp.pop %v3115
    %v3156 = vrcp.pop %v3116
    %v3157 = vrcp.pop %v3117
    %v3158 = vrcp.pop %v3118
    %v3159 = vrcp.pop %v3119
    %v3160 = vrcp.pop %v3120
    %v3161 = vrcp.pop %v3121
    %v3162 = vrcp.pop %v3122
    %v3163 = vrcp.pop %v3123
    %v3164 = vrcp.pop %v3124
    %v3165 = vrcp.pop %v3125
    %v3166 = vrcp.pop %v3126
    %v3167 = vrcp.pop %v3127
    %v3168 = vrcp.pop %v3128
    %v3169 = vrcp.pop %v3129
    %v3170 = vrcp.pop %v3130
    %v3171 = vrcp.pop %v3131
    %v3172 = vrcp.pop %v3132
    %v3173 = vrcp.pop %v3133
    %v3174 = vrcp.pop %v3134
    %v3175 = vrcp.pop %v3135
    %v3176 = vrcp.pop %v3136
    %v3177 = vrcp.pop %v3137
    %v3178 = vrcp.pop %v3138
    %v3179 = vrcp.pop %v3139
    %v3180 = vrcp.pop %v3140
    %v3181 = vrcp.pop %v3141
    %v3182 = vrcp.pop %v3142
    %v3183 = vrcp.pop %v3143
    %v3184 = vrcp.pop %v3144
    %v3185 = vrcp.pop %v3145
    %v3186 = vrcp.pop %v3146
    %v3187 = vrcp.pop %v3147
    %v3188 = vrcp.pop %v3148
    %v3189 = vrcp.pop %v3149
    %v3190 = vrcp.pop %v3150
    %v3191 = vrcp.pop %v3151
    %v3192 = vrcp.pop %v3152
    %v3193 = vrcp.pop %v3153
    %v3194 = vmul.f32 %v3034, %v3154
    %v3195 = vmul.f32 %v3035, %v3155
    %v3196 = vmul.f32 %v3036, %v3156
    %v3197 = vmul.f32 %v3037, %v3157
    %v3198 = vmul.f32 %v3038, %v3158
    %v3199 = vmul.f32 %v3039, %v3159
    %v3200 = vmul.f32 %v3040, %v3160
    %v3201 = vmul.f32 %v3041, %v3161
    %v3202 = vmul.f32 %v3042, %v3162
    %v3203 = vmul.f32 %v3043, %v3163
    %v3204 = vmul.f32 %v3044, %v3164
    %v3205 = vmul.f32 %v3045, %v3165
    %v3206 = vmul.f32 %v3046, %v3166
    %v3207 = vmul.f32 %v3047, %v3167
    %v3208 = vmul.f32 %v3048, %v3168
    %v3209 = vmul.f32 %v3049, %v3169
    %v3210 = vmul.f32 %v3050, %v3170
    %v3211 = vmul.f32 %v3051, %v3171
    %v3212 = vmul.f32 %v3052, %v3172
    %v3213 = vmul.f32 %v3053, %v3173
    %v3214 = vmul.f32 %v3054, %v3174
    %v3215 = vmul.f32 %v3055, %v3175
    %v3216 = vmul.f32 %v3056, %v3176
    %v3217 = vmul.f32 %v3057, %v3177
    %v3218 = vmul.f32 %v3058, %v3178
    %v3219 = vmul.f32 %v3059, %v3179
    %v3220 = vmul.f32 %v3060, %v3180
    %v3221 = vmul.f32 %v3061, %v3181
    %v3222 = vmul.f32 %v3062, %v3182
    %v3223 = vmul.f32 %v3063, %v3183
    %v3224 = vmul.f32 %v3064, %v3184
    %v3225 = vmul.f32 %v3065, %v3185
    %v3226 = vmul.f32 %v3066, %v3186
    %v3227 = vmul.f32 %v3067, %v3187
    %v3228 = vmul.f32 %v3068, %v3188
    %v3229 = vmul.f32 %v3069, %v3189
    %v3230 = vmul.f32 %v3070, %v3190
    %v3231 = vmul.f32 %v3071, %v3191
    %v3232 = vmul.f32 %v3072, %v3192
    %v3233 = vmul.f32 %v3073, %v3193
    %v3234 = vmul.f32 %v3194, %v3194
    %v3235 = vmul.f32 %v3195, %v3195
    %v3236 = vmul.f32 %v3196, %v3196
    %v3237 = vmul.f32 %v3197, %v3197
    %v3238 = vmul.f32 %v3198, %v3198
    %v3239 = vmul.f32 %v3199, %v3199
    %v3240 = vmul.f32 %v3200, %v3200
    %v3241 = vmul.f32 %v3201, %v3201
    %v3242 = vmul.f32 %v3202, %v3202
    %v3243 = vmul.f32 %v3203, %v3203
    %v3244 = vmul.f32 %v3204, %v3204
    %v3245 = vmul.f32 %v3205, %v3205
    %v3246 = vmul.f32 %v3206, %v3206
    %v3247 = vmul.f32 %v3207, %v3207
    %v3248 = vmul.f32 %v3208, %v3208
    %v3249 = vmul.f32 %v3209, %v3209
    %v3250 = vmul.f32 %v3210, %v3210
    %v3251 = vmul.f32 %v3211, %v3211
    %v3252 = vmul.f32 %v3212, %v3212
    %v3253 = vmul.f32 %v3213, %v3213
    %v3254 = vmul.f32 %v3214, %v3214
    %v3255 = vmul.f32 %v3215, %v3215
    %v3256 = vmul.f32 %v3216, %v3216
    %v3257 = vmul.f32 %v3217, %v3217
    %v3258 = vmul.f32 %v3218, %v3218
    %v3259 = vmul.f32 %v3219, %v3219
    %v3260 = vmul.f32 %v3220, %v3220
    %v3261 = vmul.f32 %v3221, %v3221
    %v3262 = vmul.f32 %v3222, %v3222
    %v3263 = vmul.f32 %v3223, %v3223
    %v3264 = vmul.f32 %v3224, %v3224
    %v3265 = vmul.f32 %v3225, %v3225
    %v3266 = vmul.f32 %v3226, %v3226
    %v3267 = vmul.f32 %v3227, %v3227
    %v3268 = vmul.f32 %v3228, %v3228
    %v3269 = vmul.f32 %v3229, %v3229
    %v3270 = vmul.f32 %v3230, %v3230
    %v3271 = vmul.f32 %v3231, %v3231
    %v3272 = vmul.f32 %v3232, %v3232
    %v3273 = vmul.f32 %v3233, %v3233
    %v3274 = vsel %vm506, %v3234, 0.0
    %3275 = vadd.xlane.f32.xlu0 %v3274
    %v3276 = vpop.xlane.xlu0 %3275
    %v3277 = vsel %vm506, %v3235, 0.0
    %3278 = vadd.xlane.f32.xlu0 %v3277
    %v3279 = vpop.xlane.xlu0 %3278
    %v3280 = vsel %vm506, %v3236, 0.0
    %3281 = vadd.xlane.f32.xlu0 %v3280
    %v3282 = vpop.xlane.xlu0 %3281
    %v3283 = vsel %vm506, %v3237, 0.0
    %3284 = vadd.xlane.f32.xlu0 %v3283
    %v3285 = vpop.xlane.xlu0 %3284
    %v3286 = vsel %vm506, %v3238, 0.0
    %3287 = vadd.xlane.f32.xlu0 %v3286
    %v3288 = vpop.xlane.xlu0 %3287
    %v3289 = vsel %vm506, %v3239, 0.0
    %3290 = vadd.xlane.f32.xlu0 %v3289
    %v3291 = vpop.xlane.xlu0 %3290
    %v3292 = vsel %vm506, %v3240, 0.0
    %3293 = vadd.xlane.f32.xlu0 %v3292
    %v3294 = vpop.xlane.xlu0 %3293
    %v3295 = vsel %vm506, %v3241, 0.0
    %3296 = vadd.xlane.f32.xlu0 %v3295
    %v3297 = vpop.xlane.xlu0 %3296
    %v3298 = vsel %vm506, %v3242, 0.0
    %3299 = vadd.xlane.f32.xlu0 %v3298
    %v3300 = vpop.xlane.xlu0 %3299
    %v3301 = vsel %vm506, %v3243, 0.0
    %3302 = vadd.xlane.f32.xlu0 %v3301
    %v3303 = vpop.xlane.xlu0 %3302
    %v3304 = vsel %vm506, %v3244, 0.0
    %3305 = vadd.xlane.f32.xlu0 %v3304
    %v3306 = vpop.xlane.xlu0 %3305
    %v3307 = vsel %vm506, %v3245, 0.0
    %3308 = vadd.xlane.f32.xlu0 %v3307
    %v3309 = vpop.xlane.xlu0 %3308
    %v3310 = vsel %vm506, %v3246, 0.0
    %3311 = vadd.xlane.f32.xlu0 %v3310
    %v3312 = vpop.xlane.xlu0 %3311
    %v3313 = vsel %vm506, %v3247, 0.0
    %3314 = vadd.xlane.f32.xlu0 %v3313
    %v3315 = vpop.xlane.xlu0 %3314
    %v3316 = vsel %vm506, %v3248, 0.0
    %3317 = vadd.xlane.f32.xlu0 %v3316
    %v3318 = vpop.xlane.xlu0 %3317
    %v3319 = vsel %vm506, %v3249, 0.0
    %3320 = vadd.xlane.f32.xlu0 %v3319
    %v3321 = vpop.xlane.xlu0 %3320
    %v3322 = vsel %vm506, %v3250, 0.0
    %3323 = vadd.xlane.f32.xlu0 %v3322
    %v3324 = vpop.xlane.xlu0 %3323
    %v3325 = vsel %vm506, %v3251, 0.0
    %3326 = vadd.xlane.f32.xlu0 %v3325
    %v3327 = vpop.xlane.xlu0 %3326
    %v3328 = vsel %vm506, %v3252, 0.0
    %3329 = vadd.xlane.f32.xlu0 %v3328
    %v3330 = vpop.xlane.xlu0 %3329
    %v3331 = vsel %vm506, %v3253, 0.0
    %3332 = vadd.xlane.f32.xlu0 %v3331
    %v3333 = vpop.xlane.xlu0 %3332
    %v3334 = vsel %vm506, %v3254, 0.0
    %3335 = vadd.xlane.f32.xlu0 %v3334
    %v3336 = vpop.xlane.xlu0 %3335
    %v3337 = vsel %vm506, %v3255, 0.0
    %3338 = vadd.xlane.f32.xlu0 %v3337
    %v3339 = vpop.xlane.xlu0 %3338
    %v3340 = vsel %vm506, %v3256, 0.0
    %3341 = vadd.xlane.f32.xlu0 %v3340
    %v3342 = vpop.xlane.xlu0 %3341
    %v3343 = vsel %vm506, %v3257, 0.0
    %3344 = vadd.xlane.f32.xlu0 %v3343
    %v3345 = vpop.xlane.xlu0 %3344
    %v3346 = vsel %vm506, %v3258, 0.0
    %3347 = vadd.xlane.f32.xlu0 %v3346
    %v3348 = vpop.xlane.xlu0 %3347
    %v3349 = vsel %vm506, %v3259, 0.0
    %3350 = vadd.xlane.f32.xlu0 %v3349
    %v3351 = vpop.xlane.xlu0 %3350
    %v3352 = vsel %vm506, %v3260, 0.0
    %3353 = vadd.xlane.f32.xlu0 %v3352
    %v3354 = vpop.xlane.xlu0 %3353
    %v3355 = vsel %vm506, %v3261, 0.0
    %3356 = vadd.xlane.f32.xlu0 %v3355
    %v3357 = vpop.xlane.xlu0 %3356
    %v3358 = vsel %vm506, %v3262, 0.0
    %3359 = vadd.xlane.f32.xlu0 %v3358
    %v3360 = vpop.xlane.xlu0 %3359
    %v3361 = vsel %vm506, %v3263, 0.0
    %3362 = vadd.xlane.f32.xlu0 %v3361
    %v3363 = vpop.xlane.xlu0 %3362
    %v3364 = vsel %vm506, %v3264, 0.0
    %3365 = vadd.xlane.f32.xlu0 %v3364
    %v3366 = vpop.xlane.xlu0 %3365
    %v3367 = vsel %vm506, %v3265, 0.0
    %3368 = vadd.xlane.f32.xlu0 %v3367
    %v3369 = vpop.xlane.xlu0 %3368
    %v3370 = vsel %vm506, %v3266, 0.0
    %3371 = vadd.xlane.f32.xlu0 %v3370
    %v3372 = vpop.xlane.xlu0 %3371
    %v3373 = vsel %vm506, %v3267, 0.0
    %3374 = vadd.xlane.f32.xlu0 %v3373
    %v3375 = vpop.xlane.xlu0 %3374
    %v3376 = vsel %vm506, %v3268, 0.0
    %3377 = vadd.xlane.f32.xlu0 %v3376
    %v3378 = vpop.xlane.xlu0 %3377
    %v3379 = vsel %vm506, %v3269, 0.0
    %3380 = vadd.xlane.f32.xlu0 %v3379
    %v3381 = vpop.xlane.xlu0 %3380
    %v3382 = vsel %vm506, %v3270, 0.0
    %3383 = vadd.xlane.f32.xlu0 %v3382
    %v3384 = vpop.xlane.xlu0 %3383
    %v3385 = vsel %vm506, %v3271, 0.0
    %3386 = vadd.xlane.f32.xlu0 %v3385
    %v3387 = vpop.xlane.xlu0 %3386
    %v3388 = vsel %vm506, %v3272, 0.0
    %3389 = vadd.xlane.f32.xlu0 %v3388
    %v3390 = vpop.xlane.xlu0 %3389
    %v3391 = vsel %vm506, %v3273, 0.0
    %3392 = vadd.xlane.f32.xlu0 %v3391
    %v3393 = vpop.xlane.xlu0 %3392
    %v3394 = vmul.f32 %v3276, 0.01
    %v3395 = vmul.f32 %v3279, 0.01
    %v3396 = vmul.f32 %v3282, 0.01
    %v3397 = vmul.f32 %v3285, 0.01
    %v3398 = vmul.f32 %v3288, 0.01
    %v3399 = vmul.f32 %v3291, 0.01
    %v3400 = vmul.f32 %v3294, 0.01
    %v3401 = vmul.f32 %v3297, 0.01
    %v3402 = vmul.f32 %v3300, 0.01
    %v3403 = vmul.f32 %v3303, 0.01
    %v3404 = vmul.f32 %v3306, 0.01
    %v3405 = vmul.f32 %v3309, 0.01
    %v3406 = vmul.f32 %v3312, 0.01
    %v3407 = vmul.f32 %v3315, 0.01
    %v3408 = vmul.f32 %v3318, 0.01
    %v3409 = vmul.f32 %v3321, 0.01
    %v3410 = vmul.f32 %v3324, 0.01
    %v3411 = vmul.f32 %v3327, 0.01
    %v3412 = vmul.f32 %v3330, 0.01
    %v3413 = vmul.f32 %v3333, 0.01
    %v3414 = vmul.f32 %v3336, 0.01
    %v3415 = vmul.f32 %v3339, 0.01
    %v3416 = vmul.f32 %v3342, 0.01
    %v3417 = vmul.f32 %v3345, 0.01
    %v3418 = vmul.f32 %v3348, 0.01
    %v3419 = vmul.f32 %v3351, 0.01
    %v3420 = vmul.f32 %v3354, 0.01
    %v3421 = vmul.f32 %v3357, 0.01
    %v3422 = vmul.f32 %v3360, 0.01
    %v3423 = vmul.f32 %v3363, 0.01
    %v3424 = vmul.f32 %v3366, 0.01
    %v3425 = vmul.f32 %v3369, 0.01
    %v3426 = vmul.f32 %v3372, 0.01
    %v3427 = vmul.f32 %v3375, 0.01
    %v3428 = vmul.f32 %v3378, 0.01
    %v3429 = vmul.f32 %v3381, 0.01
    %v3430 = vmul.f32 %v3384, 0.01
    %v3431 = vmul.f32 %v3387, 0.01
    %v3432 = vmul.f32 %v3390, 0.01
    %v3433 = vmul.f32 %v3393, 0.01
    %v3434 = vsub.f32 1.0, %v3394
    %v3435 = vsub.f32 1.0, %v3395
    %v3436 = vsub.f32 1.0, %v3396
    %v3437 = vsub.f32 1.0, %v3397
    %v3438 = vsub.f32 1.0, %v3398
    %v3439 = vsub.f32 1.0, %v3399
    %v3440 = vsub.f32 1.0, %v3400
    %v3441 = vsub.f32 1.0, %v3401
    %v3442 = vsub.f32 1.0, %v3402
    %v3443 = vsub.f32 1.0, %v3403
    %v3444 = vsub.f32 1.0, %v3404
    %v3445 = vsub.f32 1.0, %v3405
    %v3446 = vsub.f32 1.0, %v3406
    %v3447 = vsub.f32 1.0, %v3407
    %v3448 = vsub.f32 1.0, %v3408
    %v3449 = vsub.f32 1.0, %v3409
    %v3450 = vsub.f32 1.0, %v3410
    %v3451 = vsub.f32 1.0, %v3411
    %v3452 = vsub.f32 1.0, %v3412
    %v3453 = vsub.f32 1.0, %v3413
    %v3454 = vsub.f32 1.0, %v3414
    %v3455 = vsub.f32 1.0, %v3415
    %v3456 = vsub.f32 1.0, %v3416
    %v3457 = vsub.f32 1.0, %v3417
    %v3458 = vsub.f32 1.0, %v3418
    %v3459 = vsub.f32 1.0, %v3419
    %v3460 = vsub.f32 1.0, %v3420
    %v3461 = vsub.f32 1.0, %v3421
    %v3462 = vsub.f32 1.0, %v3422
    %v3463 = vsub.f32 1.0, %v3423
    %v3464 = vsub.f32 1.0, %v3424
    %v3465 = vsub.f32 1.0, %v3425
    %v3466 = vsub.f32 1.0, %v3426
    %v3467 = vsub.f32 1.0, %v3427
    %v3468 = vsub.f32 1.0, %v3428
    %v3469 = vsub.f32 1.0, %v3429
    %v3470 = vsub.f32 1.0, %v3430
    %v3471 = vsub.f32 1.0, %v3431
    %v3472 = vsub.f32 1.0, %v3432
    %v3473 = vsub.f32 1.0, %v3433
    %v3474 = vmax.f32 %v3434, 1e-15
    %v3475 = vmax.f32 %v3435, 1e-15
    %v3476 = vmax.f32 %v3436, 1e-15
    %v3477 = vmax.f32 %v3437, 1e-15
    %v3478 = vmax.f32 %v3438, 1e-15
    %v3479 = vmax.f32 %v3439, 1e-15
    %v3480 = vmax.f32 %v3440, 1e-15
    %v3481 = vmax.f32 %v3441, 1e-15
    %v3482 = vmax.f32 %v3442, 1e-15
    %v3483 = vmax.f32 %v3443, 1e-15
    %v3484 = vmax.f32 %v3444, 1e-15
    %v3485 = vmax.f32 %v3445, 1e-15
    %v3486 = vmax.f32 %v3446, 1e-15
    %v3487 = vmax.f32 %v3447, 1e-15
    %v3488 = vmax.f32 %v3448, 1e-15
    %v3489 = vmax.f32 %v3449, 1e-15
    %v3490 = vmax.f32 %v3450, 1e-15
    %v3491 = vmax.f32 %v3451, 1e-15
    %v3492 = vmax.f32 %v3452, 1e-15
    %v3493 = vmax.f32 %v3453, 1e-15
    %v3494 = vmax.f32 %v3454, 1e-15
    %v3495 = vmax.f32 %v3455, 1e-15
    %v3496 = vmax.f32 %v3456, 1e-15
    %v3497 = vmax.f32 %v3457, 1e-15
    %v3498 = vmax.f32 %v3458, 1e-15
    %v3499 = vmax.f32 %v3459, 1e-15
    %v3500 = vmax.f32 %v3460, 1e-15
    %v3501 = vmax.f32 %v3461, 1e-15
    %v3502 = vmax.f32 %v3462, 1e-15
    %v3503 = vmax.f32 %v3463, 1e-15
    %v3504 = vmax.f32 %v3464, 1e-15
    %v3505 = vmax.f32 %v3465, 1e-15
    %v3506 = vmax.f32 %v3466, 1e-15
    %v3507 = vmax.f32 %v3467, 1e-15
    %v3508 = vmax.f32 %v3468, 1e-15
    %v3509 = vmax.f32 %v3469, 1e-15
    %v3510 = vmax.f32 %v3470, 1e-15
    %v3511 = vmax.f32 %v3471, 1e-15
    %v3512 = vmax.f32 %v3472, 1e-15
    %v3513 = vmax.f32 %v3473, 1e-15
    %v3514 = vrsqrt.pop %v3474
    %v3515 = vrsqrt.pop %v3475
    %v3516 = vrsqrt.pop %v3476
    %v3517 = vrsqrt.pop %v3477
    %v3518 = vrsqrt.pop %v3478
    %v3519 = vrsqrt.pop %v3479
    %v3520 = vrsqrt.pop %v3480
    %v3521 = vrsqrt.pop %v3481
    %v3522 = vrsqrt.pop %v3482
    %v3523 = vrsqrt.pop %v3483
    %v3524 = vrsqrt.pop %v3484
    %v3525 = vrsqrt.pop %v3485
    %v3526 = vrsqrt.pop %v3486
    %v3527 = vrsqrt.pop %v3487
    %v3528 = vrsqrt.pop %v3488
    %v3529 = vrsqrt.pop %v3489
    %v3530 = vrsqrt.pop %v3490
    %v3531 = vrsqrt.pop %v3491
    %v3532 = vrsqrt.pop %v3492
    %v3533 = vrsqrt.pop %v3493
    %v3534 = vrsqrt.pop %v3494
    %v3535 = vrsqrt.pop %v3495
    %v3536 = vrsqrt.pop %v3496
    %v3537 = vrsqrt.pop %v3497
    %v3538 = vrsqrt.pop %v3498
    %v3539 = vrsqrt.pop %v3499
    %v3540 = vrsqrt.pop %v3500
    %v3541 = vrsqrt.pop %v3501
    %v3542 = vrsqrt.pop %v3502
    %v3543 = vrsqrt.pop %v3503
    %v3544 = vrsqrt.pop %v3504
    %v3545 = vrsqrt.pop %v3505
    %v3546 = vrsqrt.pop %v3506
    %v3547 = vrsqrt.pop %v3507
    %v3548 = vrsqrt.pop %v3508
    %v3549 = vrsqrt.pop %v3509
    %v3550 = vrsqrt.pop %v3510
    %v3551 = vrsqrt.pop %v3511
    %v3552 = vrsqrt.pop %v3512
    %v3553 = vrsqrt.pop %v3513
    %v3554 = vmul.f32 %v3514, %v3194
    %v3555 = vmul.f32 %v3515, %v3195
    %v3556 = vmul.f32 %v3516, %v3196
    %v3557 = vmul.f32 %v3517, %v3197
    %v3558 = vmul.f32 %v3518, %v3198
    %v3559 = vmul.f32 %v3519, %v3199
    %v3560 = vmul.f32 %v3520, %v3200
    %v3561 = vmul.f32 %v3521, %v3201
    %v3562 = vmul.f32 %v3522, %v3202
    %v3563 = vmul.f32 %v3523, %v3203
    %v3564 = vmul.f32 %v3524, %v3204
    %v3565 = vmul.f32 %v3525, %v3205
    %v3566 = vmul.f32 %v3526, %v3206
    %v3567 = vmul.f32 %v3527, %v3207
    %v3568 = vmul.f32 %v3528, %v3208
    %v3569 = vmul.f32 %v3529, %v3209
    %v3570 = vmul.f32 %v3530, %v3210
    %v3571 = vmul.f32 %v3531, %v3211
    %v3572 = vmul.f32 %v3532, %v3212
    %v3573 = vmul.f32 %v3533, %v3213
    %v3574 = vmul.f32 %v3534, %v3214
    %v3575 = vmul.f32 %v3535, %v3215
    %v3576 = vmul.f32 %v3536, %v3216
    %v3577 = vmul.f32 %v3537, %v3217
    %v3578 = vmul.f32 %v3538, %v3218
    %v3579 = vmul.f32 %v3539, %v3219
    %v3580 = vmul.f32 %v3540, %v3220
    %v3581 = vmul.f32 %v3541, %v3221
    %v3582 = vmul.f32 %v3542, %v3222
    %v3583 = vmul.f32 %v3543, %v3223
    %v3584 = vmul.f32 %v3544, %v3224
    %v3585 = vmul.f32 %v3545, %v3225
    %v3586 = vmul.f32 %v3546, %v3226
    %v3587 = vmul.f32 %v3547, %v3227
    %v3588 = vmul.f32 %v3548, %v3228
    %v3589 = vmul.f32 %v3549, %v3229
    %v3590 = vmul.f32 %v3550, %v3230
    %v3591 = vmul.f32 %v3551, %v3231
    %v3592 = vmul.f32 %v3552, %v3232
    %v3593 = vmul.f32 %v3553, %v3233
    %v3594 = vsel %vm506, %v3554, 0.0
    %v3595 = vsel %vm506, %v3555, 0.0
    %v3596 = vadd.f32 %v3594, %v3595
    %v3597 = vsel %vm506, %v3556, 0.0
    %v3598 = vadd.f32 %v3596, %v3597
    %v3599 = vsel %vm506, %v3557, 0.0
    %v3600 = vadd.f32 %v3598, %v3599
    %v3601 = vsel %vm506, %v3558, 0.0
    %v3602 = vadd.f32 %v3600, %v3601
    %v3603 = vsel %vm506, %v3559, 0.0
    %v3604 = vadd.f32 %v3602, %v3603
    %v3605 = vsel %vm506, %v3560, 0.0
    %v3606 = vadd.f32 %v3604, %v3605
    %v3607 = vsel %vm506, %v3561, 0.0
    %v3608 = vadd.f32 %v3606, %v3607
    %v3609 = vsel %vm506, %v3562, 0.0
    %v3610 = vadd.f32 %v3608, %v3609
    %v3611 = vsel %vm506, %v3563, 0.0
    %v3612 = vadd.f32 %v3610, %v3611
    %v3613 = vsel %vm506, %v3564, 0.0
    %v3614 = vadd.f32 %v3612, %v3613
    %v3615 = vsel %vm506, %v3565, 0.0
    %v3616 = vadd.f32 %v3614, %v3615
    %v3617 = vsel %vm506, %v3566, 0.0
    %v3618 = vadd.f32 %v3616, %v3617
    %v3619 = vsel %vm506, %v3567, 0.0
    %v3620 = vadd.f32 %v3618, %v3619
    %v3621 = vsel %vm506, %v3568, 0.0
    %v3622 = vadd.f32 %v3620, %v3621
    %v3623 = vsel %vm506, %v3569, 0.0
    %v3624 = vadd.f32 %v3622, %v3623
    %v3625 = vsel %vm506, %v3570, 0.0
    %v3626 = vadd.f32 %v3624, %v3625
    %v3627 = vsel %vm506, %v3571, 0.0
    %v3628 = vadd.f32 %v3626, %v3627
    %v3629 = vsel %vm506, %v3572, 0.0
    %v3630 = vadd.f32 %v3628, %v3629
    %v3631 = vsel %vm506, %v3573, 0.0
    %v3632 = vadd.f32 %v3630, %v3631
    %v3633 = vsel %vm506, %v3574, 0.0
    %v3634 = vadd.f32 %v3632, %v3633
    %v3635 = vsel %vm506, %v3575, 0.0
    %v3636 = vadd.f32 %v3634, %v3635
    %v3637 = vsel %vm506, %v3576, 0.0
    %v3638 = vadd.f32 %v3636, %v3637
    %v3639 = vsel %vm506, %v3577, 0.0
    %v3640 = vadd.f32 %v3638, %v3639
    %v3641 = vsel %vm506, %v3578, 0.0
    %v3642 = vadd.f32 %v3640, %v3641
    %v3643 = vsel %vm506, %v3579, 0.0
    %v3644 = vadd.f32 %v3642, %v3643
    %v3645 = vsel %vm506, %v3580, 0.0
    %v3646 = vadd.f32 %v3644, %v3645
    %v3647 = vsel %vm506, %v3581, 0.0
    %v3648 = vadd.f32 %v3646, %v3647
    %v3649 = vsel %vm506, %v3582, 0.0
    %v3650 = vadd.f32 %v3648, %v3649
    %v3651 = vsel %vm506, %v3583, 0.0
    %v3652 = vadd.f32 %v3650, %v3651
    %v3653 = vsel %vm506, %v3584, 0.0
    %v3654 = vadd.f32 %v3652, %v3653
    %v3655 = vsel %vm506, %v3585, 0.0
    %v3656 = vadd.f32 %v3654, %v3655
    %v3657 = vsel %vm506, %v3586, 0.0
    %v3658 = vadd.f32 %v3656, %v3657
    %v3659 = vsel %vm506, %v3587, 0.0
    %v3660 = vadd.f32 %v3658, %v3659
    %v3661 = vsel %vm506, %v3588, 0.0
    %v3662 = vadd.f32 %v3660, %v3661
    %v3663 = vsel %vm506, %v3589, 0.0
    %v3664 = vadd.f32 %v3662, %v3663
    %v3665 = vsel %vm506, %v3590, 0.0
    %v3666 = vadd.f32 %v3664, %v3665
    %v3667 = vsel %vm506, %v3591, 0.0
    %v3668 = vadd.f32 %v3666, %v3667
    %v3669 = vsel %vm506, %v3592, 0.0
    %v3670 = vadd.f32 %v3668, %v3669
    %v3671 = vsel %vm506, %v3593, 0.0
    %v3672 = vadd.f32 %v3670, %v3671
    %v3673 = vsel %vm506, %v3514, 0.0
    %v3674 = vsel %vm506, %v3515, 0.0
    %v3675 = vadd.f32 %v3673, %v3674
    %v3676 = vsel %vm506, %v3516, 0.0
    %v3677 = vadd.f32 %v3675, %v3676
    %v3678 = vsel %vm506, %v3517, 0.0
    %v3679 = vadd.f32 %v3677, %v3678
    %v3680 = vsel %vm506, %v3518, 0.0
    %v3681 = vadd.f32 %v3679, %v3680
    %v3682 = vsel %vm506, %v3519, 0.0
    %v3683 = vadd.f32 %v3681, %v3682
    %v3684 = vsel %vm506, %v3520, 0.0
    %v3685 = vadd.f32 %v3683, %v3684
    %v3686 = vsel %vm506, %v3521, 0.0
    %v3687 = vadd.f32 %v3685, %v3686
    %v3688 = vsel %vm506, %v3522, 0.0
    %v3689 = vadd.f32 %v3687, %v3688
    %v3690 = vsel %vm506, %v3523, 0.0
    %v3691 = vadd.f32 %v3689, %v3690
    %v3692 = vsel %vm506, %v3524, 0.0
    %v3693 = vadd.f32 %v3691, %v3692
    %v3694 = vsel %vm506, %v3525, 0.0
    %v3695 = vadd.f32 %v3693, %v3694
    %v3696 = vsel %vm506, %v3526, 0.0
    %v3697 = vadd.f32 %v3695, %v3696
    %v3698 = vsel %vm506, %v3527, 0.0
    %v3699 = vadd.f32 %v3697, %v3698
    %v3700 = vsel %vm506, %v3528, 0.0
    %v3701 = vadd.f32 %v3699, %v3700
    %v3702 = vsel %vm506, %v3529, 0.0
    %v3703 = vadd.f32 %v3701, %v3702
    %v3704 = vsel %vm506, %v3530, 0.0
    %v3705 = vadd.f32 %v3703, %v3704
    %v3706 = vsel %vm506, %v3531, 0.0
    %v3707 = vadd.f32 %v3705, %v3706
    %v3708 = vsel %vm506, %v3532, 0.0
    %v3709 = vadd.f32 %v3707, %v3708
    %v3710 = vsel %vm506, %v3533, 0.0
    %v3711 = vadd.f32 %v3709, %v3710
    %v3712 = vsel %vm506, %v3534, 0.0
    %v3713 = vadd.f32 %v3711, %v3712
    %v3714 = vsel %vm506, %v3535, 0.0
    %v3715 = vadd.f32 %v3713, %v3714
    %v3716 = vsel %vm506, %v3536, 0.0
    %v3717 = vadd.f32 %v3715, %v3716
    %v3718 = vsel %vm506, %v3537, 0.0
    %v3719 = vadd.f32 %v3717, %v3718
    %v3720 = vsel %vm506, %v3538, 0.0
    %v3721 = vadd.f32 %v3719, %v3720
    %v3722 = vsel %vm506, %v3539, 0.0
    %v3723 = vadd.f32 %v3721, %v3722
    %v3724 = vsel %vm506, %v3540, 0.0
    %v3725 = vadd.f32 %v3723, %v3724
    %v3726 = vsel %vm506, %v3541, 0.0
    %v3727 = vadd.f32 %v3725, %v3726
    %v3728 = vsel %vm506, %v3542, 0.0
    %v3729 = vadd.f32 %v3727, %v3728
    %v3730 = vsel %vm506, %v3543, 0.0
    %v3731 = vadd.f32 %v3729, %v3730
    %v3732 = vsel %vm506, %v3544, 0.0
    %v3733 = vadd.f32 %v3731, %v3732
    %v3734 = vsel %vm506, %v3545, 0.0
    %v3735 = vadd.f32 %v3733, %v3734
    %v3736 = vsel %vm506, %v3546, 0.0
    %v3737 = vadd.f32 %v3735, %v3736
    %v3738 = vsel %vm506, %v3547, 0.0
    %v3739 = vadd.f32 %v3737, %v3738
    %v3740 = vsel %vm506, %v3548, 0.0
    %v3741 = vadd.f32 %v3739, %v3740
    %v3742 = vsel %vm506, %v3549, 0.0
    %v3743 = vadd.f32 %v3741, %v3742
    %v3744 = vsel %vm506, %v3550, 0.0
    %v3745 = vadd.f32 %v3743, %v3744
    %v3746 = vsel %vm506, %v3551, 0.0
    %v3747 = vadd.f32 %v3745, %v3746
    %v3748 = vsel %vm506, %v3552, 0.0
    %v3749 = vadd.f32 %v3747, %v3748
    %v3750 = vsel %vm506, %v3553, 0.0
    %v3751 = vadd.f32 %v3749, %v3750
    %vm3752 = vcmp.gt.f32.partialorder %v914, 1.0
    %v3753 = vsel %vm3752, 1, 0
    %v3754 = vcvt.s32.f32 %v3753
    %v3755 = vmul.f32 %v3754, %v3672
    %v3756 = vadd.f32 %v422, %v3755
    %v3757 = vmul.f32 %v3754, %v3751
    %v3758 = vadd.f32 %v495, %v3757
    %v3759 = vrcp.pop %v3758
    %3761 = vset.pattern.permute.xlu0 0
    %3762 = vperm.xlu0 %3761, %v3759
    %v3763 = vpop.permute.xlu0 %3762
    %v3765 = vmul.f32 %v3756, %v3763
    %v3766 = vmul.f32 %v3765, %v3765
    %v3767 = vsel %vm506, %v3766, 0.0
    %3768 = vadd.xlane.f32.xlu0 %v3767
    %v3769 = vpop.xlane.xlu0 %3768
    %v3770 = vmul.f32 %v3769, 0.01
    %v3771 = vsub.f32 1.0, %v3770
    %v3772 = vmax.f32 %v3771, 0.0
    %v3773 = vrsqrt.pop %v3772
    %v3774 = vmul.f32 %v3772, %v3773
    %vm3775 = vcmp.eq.f32.partialorder %v3772, inf
    %v3776 = vsel %vm3775, %v3772, %v3774
    %vm3777 = vcmp.eq.f32.partialorder %v3772, 0.0
    %v3778 = vand.u32 %v3772, 2147483648
    %v3779 = vsel %vm3777, %v3778, %v3776
    %v3780 = vadd.f32 %v3779, 1.0
    %v3781 = vrcp.pop %v3780
    %v3782 = vmul.f32 %v3765, %v3781
    %3783 = vmatprep.subr.mxu0 0.0
    %3784 = vmatpush1.xpose.msra.mxu0 %v3782
    %3785 = vmatprep.subr.mxu0 0.0
    %3786 = vmatpush1.xpose.msra.mxu0 0.0
    %3787 = vmatprep.subr.mxu0 0.0
    %3788 = vmatpush1.xpose.msra.mxu0 0.0
    %3789 = vmatprep.subr.mxu0 0.0
    %3790 = vmatpush1.xpose.msra.mxu0 0.0
    %3791 = vmatprep.subr.mxu0 0.0
    %3792 = vmatpush1.xpose.msra.mxu0 0.0
    %3793 = vmatprep.subr.mxu0 0.0
    %3794 = vmatpush1.xpose.msra.mxu0 0.0
    %3795 = vmatprep.subr.mxu0 0.0
    %3796 = vmatpush1.xpose.msra.mxu0 0.0
    %3797 = vmatprep.subr.mxu0 0.0
    %3798 = vmatpush1.xpose.msra.mxu0 0.0
    %3799 = vmatprep.subr.mxu0 0.0
    %3800 = vmatpush1.xpose.msra.mxu0 0.0
    %3801 = vmatprep.subr.mxu0 0.0
    %3802 = vmatpush1.xpose.msra.mxu0 0.0
    %3803 = vmatprep.subr.mxu0 0.0
    %3804 = vmatpush1.xpose.msra.mxu0 0.0
    %3805 = vmatprep.subr.mxu0 0.0
    %3806 = vmatpush1.xpose.msra.mxu0 0.0
    %3807 = vmatprep.subr.mxu0 0.0
    %3808 = vmatpush1.xpose.msra.mxu0 0.0
    %3809 = vmatprep.subr.mxu0 0.0
    %3810 = vmatpush1.xpose.msra.mxu0 0.0
    %3811 = vmatprep.subr.mxu0 0.0
    %3812 = vmatpush1.xpose.msra.mxu0 0.0
    %3813 = vmatprep.subr.mxu0 0.0
    %3814 = vmatpush1.xpose.msra.mxu0 0.0
    %3815 = vmatprep.subr.mxu0 0.0
    %3816 = vmatpush1.xpose.msra.mxu0 0.0
    %3817 = vmatprep.subr.mxu0 0.0
    %3818 = vmatpush1.xpose.msra.mxu0 0.0
    %3819 = vmatprep.subr.mxu0 0.0
    %3820 = vmatpush1.xpose.msra.mxu0 0.0
    %3821 = vmatprep.subr.mxu0 0.0
    %3822 = vmatpush1.xpose.msra.mxu0 0.0
    %3823 = vmatprep.subr.mxu0 0.0
    %3824 = vmatpush1.xpose.msra.mxu0 0.0
    %3825 = vmatprep.subr.mxu0 0.0
    %3826 = vmatpush1.xpose.msra.mxu0 0.0
    %3827 = vmatprep.subr.mxu0 0.0
    %3828 = vmatpush1.xpose.msra.mxu0 0.0
    %3829 = vmatprep.subr.mxu0 0.0
    %3830 = vmatpush1.xpose.msra.mxu0 0.0
    %3831 = vmatprep.subr.mxu0 0.0
    %3832 = vmatpush1.xpose.msra.mxu0 0.0
    %3833 = vmatprep.subr.mxu0 0.0
    %3834 = vmatpush1.xpose.msra.mxu0 0.0
    %3835 = vmatprep.subr.mxu0 0.0
    %3836 = vmatpush1.xpose.msra.mxu0 0.0
    %3837 = vmatprep.subr.mxu0 0.0
    %3838 = vmatpush1.xpose.msra.mxu0 0.0
    %3839 = vmatprep.subr.mxu0 0.0
    %3840 = vmatpush1.xpose.msra.mxu0 0.0
    %3841 = vmatprep.subr.mxu0 0.0
    %3842 = vmatpush1.xpose.msra.mxu0 0.0
    %3843 = vmatprep.subr.mxu0 0.0
    %3844 = vmatpush1.xpose.msra.mxu0 0.0
    %3845 = vmatprep.subr.mxu0 0.0
    %3846 = vmatpush1.xpose.msra.mxu0 0.0
    %3847 = vmatprep.mubr.f32.mxu0 0.0
    %3848 = vmatmul.mubr.f32.gmra.mrb[0].mxu0 %v301
    %v3849 = vpop.f32.mrb[0].mxu0
    %v3850 = vadd.f32 0.0, %v3849
    %v3851 = vpop.f32.mrb[0].mxu0
    %3852 = vmatprep.mubr.f32.mxu0 0.0
    %3853 = vmatmul.mubr.f32.gmra.mrb[0].mxu0 %v302
    %v3854 = vpop.f32.mrb[0].mxu0
    %v3855 = vadd.f32 0.0, %v3854
    %v3856 = vpop.f32.mrb[0].mxu0
    %3857 = vdwg.mxu0
    %v3858 = vmul.f32 %v3782, %v3782
    %3859 = vmatprep.subr.mxu0 0.0
    %3860 = vmatpush1.xpose.msra.mxu0 %v3858
    %3861 = vmatprep.subr.mxu0 0.0
    %3862 = vmatpush1.xpose.msra.mxu0 0.0
    %3863 = vmatprep.subr.mxu0 0.0
    %3864 = vmatpush1.xpose.msra.mxu0 0.0
    %3865 = vmatprep.subr.mxu0 0.0
    %3866 = vmatpush1.xpose.msra.mxu0 0.0
    %3867 = vmatprep.subr.mxu0 0.0
    %3868 = vmatpush1.xpose.msra.mxu0 0.0
    %3869 = vmatprep.subr.mxu0 0.0
    %3870 = vmatpush1.xpose.msra.mxu0 0.0
    %3871 = vmatprep.subr.mxu0 0.0
    %3872 = vmatpush1.xpose.msra.mxu0 0.0
    %3873 = vmatprep.subr.mxu0 0.0
    %3874 = vmatpush1.xpose.msra.mxu0 0.0
    %3875 = vmatprep.subr.mxu0 0.0
    %3876 = vmatpush1.xpose.msra.mxu0 0.0
    %3877 = vmatprep.subr.mxu0 0.0
    %3878 = vmatpush1.xpose.msra.mxu0 0.0
    %3879 = vmatprep.subr.mxu0 0.0
    %3880 = vmatpush1.xpose.msra.mxu0 0.0
    %3881 = vmatprep.subr.mxu0 0.0
    %3882 = vmatpush1.xpose.msra.mxu0 0.0
    %3883 = vmatprep.subr.mxu0 0.0
    %3884 = vmatpush1.xpose.msra.mxu0 0.0
    %3885 = vmatprep.subr.mxu0 0.0
    %3886 = vmatpush1.xpose.msra.mxu0 0.0
    %3887 = vmatprep.subr.mxu0 0.0
    %3888 = vmatpush1.xpose.msra.mxu0 0.0
    %3889 = vmatprep.subr.mxu0 0.0
    %3890 = vmatpush1.xpose.msra.mxu0 0.0
    %3891 = vmatprep.subr.mxu0 0.0
    %3892 = vmatpush1.xpose.msra.mxu0 0.0
    %3893 = vmatprep.subr.mxu0 0.0
    %3894 = vmatpush1.xpose.msra.mxu0 0.0
    %3895 = vmatprep.subr.mxu0 0.0
    %3896 = vmatpush1.xpose.msra.mxu0 0.0
    %3897 = vmatprep.subr.mxu0 0.0
    %3898 = vmatpush1.xpose.msra.mxu0 0.0
    %3899 = vmatprep.subr.mxu0 0.0
    %3900 = vmatpush1.xpose.msra.mxu0 0.0
    %3901 = vmatprep.subr.mxu0 0.0
    %3902 = vmatpush1.xpose.msra.mxu0 0.0
    %3903 = vmatprep.subr.mxu0 0.0
    %3904 = vmatpush1.xpose.msra.mxu0 0.0
    %3905 = vmatprep.subr.mxu0 0.0
    %3906 = vmatpush1.xpose.msra.mxu0 0.0
    %3907 = vmatprep.subr.mxu0 0.0
    %3908 = vmatpush1.xpose.msra.mxu0 0.0
    %3909 = vmatprep.subr.mxu0 0.0
    %3910 = vmatpush1.xpose.msra.mxu0 0.0
    %3911 = vmatprep.subr.mxu0 0.0
    %3912 = vmatpush1.xpose.msra.mxu0 0.0
    %3913 = vmatprep.subr.mxu0 0.0
    %3914 = vmatpush1.xpose.msra.mxu0 0.0
    %3915 = vmatprep.subr.mxu0 0.0
    %3916 = vmatpush1.xpose.msra.mxu0 0.0
    %3917 = vmatprep.subr.mxu0 0.0
    %3918 = vmatpush1.xpose.msra.mxu0 0.0
    %3919 = vmatprep.subr.mxu0 0.0
    %3920 = vmatpush1.xpose.msra.mxu0 0.0
    %3921 = vmatprep.subr.mxu0 0.0
    %3922 = vmatpush1.xpose.msra.mxu0 0.0
    %3923 = vmatprep.mubr.f32.mxu0 0.0
    %3924 = vmatmul.mubr.f32.gmra.mrb[0].mxu0 1.0
    %v3925 = vpop.f32.mrb[0].mxu0
    %v3926 = vadd.f32 0.0, %v3925
    %v3927 = vpop.f32.mrb[0].mxu0
    %3928 = vdwg.mxu0
    %v3929 = vmul.f32 %v3850, 0.02
    %v3930 = vmul.f32 %v3855, 0.02
    %v3931 = vsub.f32 1.0, %v3929
    %v3932 = vsub.f32 1.0, %v3930
    %v3933 = vmul.f32 %v3926, 0.01
    %v3934 = vlaneseq
    %v3935 = vshrl.u32 %v3934, 7
    %v3936 = vsub.s32 0, %v3935
    %v3937 = vrot.slane %v3933, %v3936
    %v3938 = vadd.f32 %v3931, %v3937
    %v3939 = vadd.f32 %v3932, %v3937
    %v3940 = vsub.f32 1.0, %v312
    %v3941 = vsub.f32 1.0, %v313
    %v3942 = vmul.f32 %v3938, %v3938
    %v3943 = vmul.f32 %v3939, %v3939
    %v3944 = vmul.f32 %v3942, %v306
    %v3945 = vmul.f32 %v3943, %v309
    %v3946 = vmul.f32 %v3940, %v3940
    %v3947 = vmul.f32 %v3941, %v3941
    %v3948 = vlaneseq
    %v3949 = vshrl.u32 %v3948, 7
    %v3950 = vsub.s32 0, %v3949
    %v3951 = vrot.slane %v3926, %v3950
    %v3952 = vmul.f32 %v3946, %v3951
    %v3953 = vmul.f32 %v3947, %v3951
    %v3954 = vadd.f32 %v3944, %v3952
    %v3955 = vadd.f32 %v3945, %v3953
    %v3956 = vmul.f32 %v3938, 2.0
    %v3957 = vmul.f32 %v3939, 2.0
    %v3958 = vmul.f32 %v3956, %v3940
    %v3959 = vmul.f32 %v3957, %v3941
    %v3960 = vmul.f32 %v3958, %v3850
    %v3961 = vmul.f32 %v3959, %v3855
    %v3962 = vsub.f32 %v3954, %v3960
    %v3963 = vsub.f32 %v3955, %v3961
    %v3964 = vmul.f32 %v306, 0.0001
    %v3965 = vmul.f32 %v309, 0.0001
    %v3966 = vmul.f32 %v3964, %v3951
    %v3967 = vmul.f32 %v3965, %v3951
    %v3968 = vadd.f32 %v3931, %v3966
    %v3969 = vadd.f32 %v3932, %v3967
    %v3970 = vmax.f32 %v3962, 0.0
    %v3971 = vmax.f32 %v3963, 0.0
    %v3972 = vrsqrt.pop %v3970
    %v3973 = vmul.f32 %v3970, %v3972
    %vm3974 = vcmp.eq.f32.partialorder %v3970, inf
    %v3975 = vsel %vm3974, %v3970, %v3973
    %vm3976 = vcmp.eq.f32.partialorder %v3970, 0.0
    %v3977 = vand.u32 %v3970, 2147483648
    %v3978 = vsel %vm3976, %v3977, %v3975
    %v3979 = vrsqrt.pop %v3971
    %v3980 = vmul.f32 %v3971, %v3979
    %vm3981 = vcmp.eq.f32.partialorder %v3971, inf
    %v3982 = vsel %vm3981, %v3971, %v3980
    %vm3983 = vcmp.eq.f32.partialorder %v3971, 0.0
    %v3984 = vand.u32 %v3971, 2147483648
    %v3985 = vsel %vm3983, %v3984, %v3982
    %v3986 = vand.u32 2147483647, %v3968
    %v3987 = vand.u32 2147483647, %v3969
    %v3988 = vmax.f32 %v3986, 1e-15
    %v3989 = vmax.f32 %v3987, 1e-15
    %v3990 = vrcp.pop %v3988
    %v3991 = vrcp.pop %v3989
    %v3992 = vmul.f32 %v3978, %v3990
    %v3993 = vmul.f32 %v3985, %v3991
    %v3994 = vmul.f32 %v3992, 0.1
    %v3995 = vmul.f32 %v3993, 0.1
    %v3996 = vmin.f32 %v3994, 0.99999
    %v3997 = vmin.f32 %v3995, 0.99999
    %v3998 = vadd.f32 %v3996, 1.0
    %v3999 = vadd.f32 %v3997, 1.0
    %v4000 = vsub.f32 1.0, %v3996
    %v4001 = vsub.f32 1.0, %v3997
    %v4002 = vrcp.pop %v4000
    %v4003 = vrcp.pop %v4001
    %v4004 = vmul.f32 %v3998, %v4002
    %v4005 = vmul.f32 %v3999, %v4003
    %v4006 = vlog2.pop %v4004
    %v4007 = vmul.f32 %v4006, 0.6931472
    %v4008 = vlog2.pop %v4005
    %v4009 = vmul.f32 %v4008, 0.6931472
    %v4010 = vmul.f32 %v4007, 10.0
    %v4011 = vmul.f32 %v4009, 10.0
    %v4012 = vsub.f32 0.0, %v4010
    %v4013 = vsub.f32 0.0, %v4011
    %vm4014 = vcmask 39936
    %v4015 = vsel %vm4014, %v4012, -inf
    %4016 = vmax.xlane.f32.xlu0 %v4015
    %v4017 = vpop.xlane.xlu0 %4016
    %vm4018 = vcmask 38912
    %v4019 = vsel %vm4018, %v4013, -inf
    %4020 = vmax.xlane.f32.xlu0 %v4019
    %v4021 = vpop.xlane.xlu0 %4020
    %v4022 = vsub.f32 %v4012, %v4017
    %v4023 = vsub.f32 %v4013, %v4021
    %v4024 = vmul.f32 %v4022, 1.442695
    %v4025 = vpow.pop %v4024
    %v4026 = vmul.f32 %v4023, 1.442695
    %v4027 = vpow.pop %v4026
    %v4028 = vsel %vm4014, %v4025, 0.0
    %4029 = vadd.xlane.f32.xlu0 %v4028
    %v4030 = vpop.xlane.xlu0 %4029
    %v4031 = vsel %vm4018, %v4027, 0.0
    %4032 = vadd.xlane.f32.xlu0 %v4031
    %v4033 = vpop.xlane.xlu0 %4032
    %v4034 = vrcp.pop %v4030
    %v4035 = vmul.f32 %v4025, %v4034
    %v4036 = vrcp.pop %v4033
    %v4037 = vmul.f32 %v4027, %v4036
    %4038 = vst.msk [vmem:[%s4] sm:$0xff] %vm4014, %v4035
    %4039 = vst.msk [vmem:[%s4 + $0x8] sm:$0x7f] %vm4018, %v4037
    %v4040 = vsub.f32 0.0, %v713
    %v4041 = vsel %vm714, %v4040, -inf
    %v4042 = vrot.slane %v4041, 4
    %v4043 = vmax.f32 %v4041, %v4042
    %v4044 = vrot.slane %v4043, 2
    %v4045 = vmax.f32 %v4043, %v4044
    %v4046 = vrot.slane %v4045, 1
    %v4047 = vmax.f32 %v4045, %v4046
    %v4048 = vsub.f32 %v4040, %v4047
    %v4049 = vmul.f32 %v4048, 1.442695
    %v4050 = vpow.pop %v4049
    %v4051 = vsel %vm714, %v4050, 0.0
    %v4052 = vrot.slane %v4051, 4
    %v4053 = vadd.f32 %v4051, %v4052
    %v4054 = vrot.slane %v4053, 2
    %v4055 = vadd.f32 %v4053, %v4054
    %v4056 = vrot.slane %v4055, 1
    %v4057 = vadd.f32 %v4055, %v4056
    %v4058 = vlog2.pop %v4057
    %v4059 = vmul.f32 %v4058, 0.6931472
    %v4060 = vadd.f32 %v4047, %v4059
    %v4061 = vsub.f32 %v4040, %v4060
    %v4062 = vsel %vm714, %v4061, -inf
    %v4063 = vrot.slane %v4062, 4
    %v4064 = vmax.f32 %v4062, %v4063
    %v4065 = vrot.slane %v4064, 2
    %v4066 = vmax.f32 %v4064, %v4065
    %v4067 = vrot.slane %v4066, 1
    %v4068 = vmax.f32 %v4066, %v4067
    %v4069 = vsub.f32 %v4061, %v4068
    %v4070 = vmul.f32 %v4069, 1.442695
    %v4071 = vpow.pop %v4070
    %v4072 = vsel %vm714, %v4071, 0.0
    %v4073 = vrot.slane %v4072, 4
    %v4074 = vadd.f32 %v4072, %v4073
    %v4075 = vrot.slane %v4074, 2
    %v4076 = vadd.f32 %v4074, %v4075
    %v4077 = vrot.slane %v4076, 1
    %v4078 = vadd.f32 %v4076, %v4077
    %v4079 = vlog2.pop %v4078
    %v4080 = vmul.f32 %v4079, 0.6931472
    %v4081 = vadd.f32 %v4068, %v4080
    %v4082 = vsub.f32 %v4061, %v4081
    %v4083 = vmul.f32 %v26, %v4082
    %v4084 = vsel %vm714, %v4083, 0.0
    %v4085 = vrot.slane %v4084, 4
    %v4086 = vadd.f32 %v4084, %v4085
    %v4087 = vrot.slane %v4086, 2
    %v4088 = vadd.f32 %v4086, %v4087
    %v4089 = vrot.slane %v4088, 1
    %v4090 = vadd.f32 %v4088, %v4089
    %v4091 = vsel %vm735, %v4090, 0.0
    %4092 = vadd.xlane.f32.xlu0 %v4091
    %v4093 = vpop.xlane.xlu0 %4092
    %v4094 = vsub.f32 0.0, %v4093
    %v4095 = vmul.f32 %v4094, 0.06666667
    %vm4096 = vcmask 0
    %4097 = vst.msk [vmem:[#allocation2] sm:$0x1] %vm4096, %v4095
    // Predicated region
    $region18: #{hpr_wn_forward.1} parent=1 // pred_check
      _
    $region19: #{hpr_wn_forward.1} parent=1 // pred_check_branch
      %4099 = sbr.rel (0) target = $region21
    $region20: #{hpr_wn_forward.1} parent=1 // pred_region
      _
    $region21: #{hpr_wn_forward.1} parent=1 // pred_fallthru
      _
    // Predicated region
    $region22: #{hpr_wn_forward.1} parent=1 // pred_check
      _
    $region23: #{hpr_wn_forward.1} parent=1 // pred_check_branch
      %4101 = sbr.rel (0) target = $region25
    $region24: #{hpr_wn_forward.1} parent=1 // pred_region
      %s4103 = ssub.s32 16, 16
      %4104 = vsyncadd [#allocation3], %s4103
      %s4106 = sshll.u32 [#allocation2], 4
      %s4107 = int_to_ptr.vmem [resolvable:$true] %s4106
      %4109 = dma.vmem_to_hbm [thread:$0]  %s4107, 16, %s5, [#allocation3]
    $region25: #{hpr_wn_forward.1} parent=1 // pred_fallthru
      _
    // Predicated region
    $region26: #{hpr_wn_forward.1} parent=1 // pred_check
      _
    $region27: #{hpr_wn_forward.1} parent=1 // pred_check_branch
      %4111 = sbr.rel (0) target = $region29
    $region28: #{hpr_wn_forward.1} parent=1 // pred_region
      _
    $region29: #{hpr_wn_forward.1} parent=1 // pred_fallthru
      _
    // Predicated region
    $region30: #{hpr_wn_forward.1} parent=1 // pred_check
      _
    $region31: #{hpr_wn_forward.1} parent=1 // pred_check_branch
      %4113 = sbr.rel (0) target = $region33
    $region32: #{hpr_wn_forward.1} parent=1 // pred_region
      %4114 = dma.done [#allocation3], 16
    $region33: #{hpr_wn_forward.1} parent=1 // pred_fallthru
      _
    %4115 = vsyncpa [#allocation3], 1

</llo_original>
